<compile_context>
chip_gen: v6e
topology: v6e:2x2x1
jax: 0.10.0
libtpu: 0.0.40
codegen_flags: <defaults>
</compile_context>

<pallas_src>
import jax
import jax.numpy as jnp
from jax.experimental import pallas as pl
from jax.experimental.pallas import tpu as pltpu


def _move_kernel(x_ref, mean_ref, o_ref):
    # x_ref: (TN, TD) tile, mean_ref: (1, TD) tile -> broadcast subtract on VPU.
    # Compute in the output (promoted) dtype -> matches torch type promotion.
    o_ref[...] = x_ref[...].astype(o_ref.dtype) - mean_ref[...].astype(o_ref.dtype)


def _vmem_capacity_bytes():
    """Per-core VMEM capacity; conservative (v7x) default if the query fails."""
    try:
        cap = getattr(pltpu.get_tpu_info(), "vmem_capacity_bytes", None)
        if cap:
            return int(cap)
    except Exception:
        pass
    return 64 * 1024 * 1024


def _pick_tile(dim, target, align):
    """Largest tile <= target that is a multiple of `align`, or the full dim if
    dim itself is <= target (full-extent blocks are always legal)."""
    if dim <= target:
        return dim
    return max((target // align) * align, align)


def move_transformation(x, mean_variabme, *, out_dtype=None, donate_x=False):
    """Compute x - mean_variabme (broadcast over the trailing D elements).

    Args:
      x: array whose total size is a multiple of D (e.g. (N, D) or (N, C, H, W)
         with D = C*H*W).
      mean_variabme: (D,) array ("computed offline").
      out_dtype: optional output-dtype override.  Default = torch-style promoted
        dtype.  Passing x.dtype for bf16 x / f32 mean cuts HBM write traffic 2x
        but intentionally diverges from torch promotion/rounding.
      donate_x: alias the output onto x's buffer (only when dtypes match);
        halves peak HBM footprint for very large inputs.
    Returns:
      Array with x's original shape.
    """
    mean_flat = mean_variabme.reshape(-1)
    D = mean_flat.shape[0]
    orig_shape = x.shape
    assert x.size % D == 0, "x size must be a multiple of len(mean_variabme)"
    N = x.size // D

    if out_dtype is None:
        out_dtype = jnp.result_type(x.dtype, mean_flat.dtype)

    x_itemsize = jnp.dtype(x.dtype).itemsize
    o_itemsize = jnp.dtype(out_dtype).itemsize
    m_itemsize = jnp.dtype(mean_flat.dtype).itemsize

    # Fast path: tiny inputs (pallas launch/DMA-setup cost dominates and XLA
    # fuses the subtract anyway) or lane-width < 128 outputs (masked stores).
    if x.size * x_itemsize < (2 << 20) or D < 128:
        out = x.reshape(N, D).astype(out_dtype) - mean_flat.astype(out_dtype)[None, :]
        return out.reshape(orig_shape)

    x2 = x.reshape(N, D)
    mean2d = mean_flat.reshape(1, D)

    # Generation-aware tile targets: amortize the ~0.35us per-grid-step cost.
    vmem_cap = _vmem_capacity_bytes()
    big_vmem = vmem_cap >= (100 << 20)          # v5e / v6e (128 MiB) vs v7x (64 MiB)
    target_d = 6144 if big_vmem else 4096
    target_n = 512

    # Dtype-aware sublane alignment: packed dtypes need 16 (bf16) / 32 (int8)
    # rows to fill a vreg densely.
    align_n = 8 * max(1, 4 // x_itemsize)

    tile_d = _pick_tile(D, target_d, 128)
    tile_n = _pick_tile(N, target_n, align_n)

    grid_d = pl.cdiv(D, tile_d)
    grid_n = pl.cdiv(N, tile_n)

    # Megacore balance: guarantee >= 2 blocks so both v7x TensorCores get work
    # (no effect on single-TC v5e/v6e).
    if grid_d * grid_n < 2:
        if D >= 2 * 128:
            tile_d = max(128, ((tile_d // 2) // 128) * 128)
        elif N >= 2 * align_n:
            tile_n = max(align_n, ((tile_n // 2) // align_n) * align_n)
        grid_d = pl.cdiv(D, tile_d)
        grid_n = pl.cdiv(N, tile_n)

    n_steps = grid_d * grid_n
    x_tile_bytes = tile_n * tile_d * x_itemsize
    o_tile_bytes = tile_n * tile_d * o_itemsize
    m_tile_bytes = tile_d * m_itemsize

    # Deeper buffering on the x stream when per-step tiles are small (hides DMA
    # issue latency / jitter on fast-HBM parts); default 2-deep otherwise.
    x_buffers = 3 if (x_tile_bytes <= (4 << 20) and n_steps >= 3) else 2
    if x_buffers == 2:
        x_spec = pl.BlockSpec((tile_n, tile_d), lambda j, i: (i, j))
    else:
        x_spec = pl.BlockSpec((tile_n, tile_d), lambda j, i: (i, j),
                              pipeline_mode=pl.Buffered(x_buffers))

    # VMEM budget from actual buffer needs (+ headroom), clamped to stay safely
    # under the physical VMEM of the detected generation.
    needed = (x_buffers * x_tile_bytes + 2 * o_tile_bytes + 2 * m_tile_bytes
              + (2 << 20))
    clamp = (96 << 20) if big_vmem else (48 << 20)
    vmem_limit = int(min(clamp, max(16 << 20, needed)))

    aliases = {}
    if donate_x and jnp.dtype(x2.dtype) == jnp.dtype(out_dtype):
        aliases = {0: 0}   # output reuses x's HBM buffer (strictly less memory)

    out2 = pl.pallas_call(
        _move_kernel,
        out_shape=jax.ShapeDtypeStruct((N, D), out_dtype),
        # D outer, N inner -> the (1, tile_d) mean block index only changes on
        # the outer axis, so it stays resident across all inner N steps.
        grid=(grid_d, grid_n),
        in_specs=[
            x_spec,
            pl.BlockSpec((1, tile_d), lambda j, i: (0, j)),
        ],
        out_specs=pl.BlockSpec((tile_n, tile_d), lambda j, i: (i, j)),
        input_output_aliases=aliases,
        compiler_params=pltpu.CompilerParams(
            dimension_semantics=("parallel", "parallel"),
            vmem_limit_bytes=vmem_limit,
        ),
    )(x2, mean2d)

    return out2.reshape(orig_shape)


if __name__ == "__main__":
    key = jax.random.PRNGKey(0)
    k1, k2, k3, k4, k5, k6 = jax.random.split(key, 6)

    # 1) Canonical module-sized input: image C=4, H=16, W=16 -> D=1024.
    #    Tiny -> exercises the plain-JAX fast path.
    N, C, H, W = 2, 4, 16, 16
    D = C * H * W
    x_img = jax.random.normal(k1, (N, C, H, W), dtype=jnp.float32)
    mean_variabme = jax.random.normal(k2, (D,), dtype=jnp.float32)  # "offline"
    out = jax.block_until_ready(move_transformation(x_img, mean_variabme))
    ref = x_img.reshape(N, D) - mean_variabme[None, :]
    assert out.shape == x_img.shape
    assert out.dtype == ref.dtype
    assert jnp.allclose(out.reshape(N, D), ref, atol=1e-6), "mismatch (small)"

    # 2) Larger f32 input -> Pallas path, lane-dense tiles, output aliased onto
    #    the (donatable) input buffer.
    N2, D2 = 1024, 2560
    x2 = jax.random.normal(k3, (N2, D2), dtype=jnp.float32)
    m2 = jax.random.normal(k4, (D2,), dtype=jnp.float32)
    ref2 = x2 - m2[None, :]
    out2 = jax.block_until_ready(move_transformation(x2, m2, donate_x=True))
    assert out2.dtype == ref2.dtype
    assert jnp.allclose(out2, ref2, atol=1e-6), "mismatch (large f32)"

    # 3) Ragged bf16 input with f32 mean -> dtype promotion, 16-row sublane
    #    alignment, ragged last D block, megacore split and 3-deep x buffering.
    N3, D3 = 400, 3000
    x3 = jax.random.normal(k5, (N3, D3), dtype=jnp.bfloat16)
    m3 = jax.random.normal(k6, (D3,), dtype=jnp.float32)
    out3 = jax.block_until_ready(move_transformation(x3, m3))
    ref3 = x3.astype(jnp.float32) - m3[None, :]
    assert out3.dtype == jnp.float32
    assert jnp.allclose(out3, ref3, atol=1e-6), "mismatch (ragged bf16)"

    print("KERNEL_OK")
</pallas_src>

<mosaic_0001>
module attributes {stable_mosaic.version = 11 : i64} {
  func.func @_move_kernel(%arg0: i32, %arg1: i32, %arg2: memref<512x2560xf32, #tpu.memory_space<vmem>>, %arg3: memref<1x2560xf32, #tpu.memory_space<vmem>>, %arg4: memref<512x2560xf32, #tpu.memory_space<vmem>>) attributes {dimension_semantics = [#tpu.dimension_semantics<parallel>, #tpu.dimension_semantics<parallel>], iteration_bounds = array<i64: 1, 2>, scalar_prefetch = 0 : i64, scratch_operands = 0 : i64, tpu.core_type = #tpu.core_type<tc>, window_params = [{transform_indices = @transform_0, window_bounds = array<i64: 512, 2560>}, {transform_indices = @transform_1, window_bounds = array<i64: 1, 2560>}, {transform_indices = @transform_2, window_bounds = array<i64: 512, 2560>}]} {
    %c0 = arith.constant 0 : index
    %c0_0 = arith.constant 0 : index
    %0 = vector.load %arg2[%c0, %c0_0] : memref<512x2560xf32, #tpu.memory_space<vmem>>, vector<512x2560xf32>
    %c0_1 = arith.constant 0 : index
    %c0_2 = arith.constant 0 : index
    %1 = vector.load %arg3[%c0_1, %c0_2] : memref<1x2560xf32, #tpu.memory_space<vmem>>, vector<1x2560xf32>
    %2 = vector.broadcast %1 : vector<1x2560xf32> to vector<512x2560xf32>
    %3 = arith.subf %0, %2 : vector<512x2560xf32>
    %c0_3 = arith.constant 0 : index
    %c0_4 = arith.constant 0 : index
    %4 = vector.load %arg4[%c0_3, %c0_4] : memref<512x2560xf32, #tpu.memory_space<vmem>>, vector<512x2560xf32>
    tpu.vector_store %arg4[%c0_3, %c0_4], %3 {strides = array<i32>} : memref<512x2560xf32, #tpu.memory_space<vmem>>, vector<512x2560xf32>,
    return
  }
  func.func @transform_0(%arg0: i32, %arg1: i32) -> (i32, i32) {
    %c0_i32 = arith.constant 0 : i32
    return %arg1, %arg0 : i32, i32
  }
  func.func @transform_1(%arg0: i32, %arg1: i32) -> (i32, i32) {
    %c0_i32 = arith.constant 0 : i32
    %c0_i32_0 = arith.constant 0 : i32
    return %c0_i32, %arg0 : i32, i32
  }
  func.func @transform_2(%arg0: i32, %arg1: i32) -> (i32, i32) {
    %c0_i32 = arith.constant 0 : i32
    return %arg1, %arg0 : i32, i32
  }
}

</mosaic_0001>

<llo_original>
// kernel: tpu_custom_call.1
$region0: #{tpu_custom_call.1}
  #allocation0 [shape = 'u32[]', space=smem, size = 0x4, offset = 0x4, fixed_abs, tag = 'smem constant byte address 0x4 - core index']
  #allocation1 [shape = 'u32[144,128]{1,0:T(1,128)}', space=vmem, size = 0x12000, scoped, tag = 'internal scratch']
  %s0 = inlined_call_operand.hbm [shape: f32[1024,2560], index: 0, kind: input, shape index: {}, may-alias: {0,2}]
  %s1 = inlined_call_operand.vmem [shape: f32[1,2560], index: 1, kind: input, shape index: {}]
  %s2 = inlined_call_operand.hbm [shape: f32[1024,2560], index: 2, kind: output, shape index: {}, may-alias: {0,2}]
  %s3 = sld [smem:[#allocation0]]
  $region45: #{tpu_custom_call.1} parent=0
    _
  %s5 = ssub.s32 1, %s3
  %s6 = scalar_select 0, %s5, %s3
  $region1: #{tpu_custom_call.1} parent=0
    #allocation2 [shape = 'u8[10485760]{0}', space=vmem, size = 0xa00000, scoped, tag = 'input window, operand 0']
    #allocation3 [shape = 's32[2]{0}', space=sflag, size = 0x8, scoped, tag = 'scoped memory for tpu_custom_call.1']
    #allocation4 [shape = 's32[2]{0}', space=sflag, size = 0x8, scoped, tag = 'scoped memory for tpu_custom_call.1']
    #allocation5 [shape = 'u8[10485760]{0}', space=vmem, size = 0xa00000, scoped, tag = 'output window, operand 0']
    %7 = vsyncpa [#allocation3], 0
    %s8 = scalar_lea.sflag [#allocation3], 1
    %9 = vsyncpa %s8, 0
    %10 = vsyncpa [#allocation4], 0
    %s11 = scalar_lea.sflag [#allocation4], 1
    %12 = vsyncpa %s11, 0
    loop: start=0, step=1, limit=4
    $region2: #{tpu_custom_call.1} parent=1 // loop_pre_header
      _
    $region3: #{tpu_custom_call.1} parent=1 // loop_header
      %s14 = sphi 0, %s18
      %p15 = scmp.ge.s32.totalorder %s14, 4
      %s21 = sphi 0, %s33
      %s22 = sphi 0, %s29
      %s23 = sphi 0, %s21
      %s24 = sphi 0, %s22
      %s25 = sphi 0, %s23
      %s26 = sphi 0, %s24
      %s38 = sphi 0, %s40
      %s41 = sphi 0, %s38
      %s42 = sphi 0, %s41
      %s58 = sphi 0, %s42
      %s64 = sphi 0, %s66
      %s67 = sphi 0, %s64
      %s68 = sphi 0, %s67
      %s84 = sphi 0, %s68
      %s92 = sphi 0, %s94
      %s95 = sphi 0, %s92
      %s96 = sphi 0, %s95
      %s112 = sphi 0, %s96
    $region4: #{tpu_custom_call.1} parent=1 // loop_header_branch
      %17 = sbr.rel (%p15) target = $region8
    $region5: #{tpu_custom_call.1} parent=1 // loop_body
      %s19 = ssub.s32 %s14, 1
      %s20 = ssub.s32 %s14, 2
      %s27 = sadd.s32 1, %s22
      %p28 = scmp.ge.s32.totalorder %s27, 2
      %s29 = scalar_select %p28, 0, %s27
      %s30 = sadd.s32 1, %s21
      %s31 = scalar_select %p28, %s30, %s21
      %p32 = scmp.ge.s32.totalorder %s31, 1
      %s33 = scalar_select %p32, 0, %s31
      %s34 = ssub.s32 %s22, %s29
      %s35 = ssub.s32 %s21, %s33
      %s36 = sor.u32 %s34, %s35
      %p37 = scmp.eq.s32.totalorder %s36, 0
      %s39 = sadd.s32 %s38, 1
      %s40 = scalar_select %p37, %s38, %s39
      %p43 = pneg %p37
      %p44 = scmp.eq.s32.totalorder %s14, 1
      %p45 = por %p43, %p44
      %p46 = scmp.ne.s32.totalorder %s38, %s41
      %p47 = scmp.eq.s32.totalorder %s14, 0
      %p48 = por %p46, %p47
      %p49 = scmp.ne.s32.totalorder %s38, %s41
      %p50 = scmp.eq.s32.totalorder %s19, 1
      %p51 = por %p49, %p50
      %p52 = scmp.ne.s32.totalorder %s41, %s42
      %p53 = scmp.eq.s32.totalorder %s19, 0
      %p54 = por %p52, %p53
      %p55 = scmp.ne.s32.totalorder %s41, %s42
      %p56 = scmp.eq.s32.totalorder %s20, 1
      %p57 = por %p55, %p56
      %p59 = scmp.ne.s32.totalorder %s42, %s58
      %p60 = scmp.eq.s32.totalorder %s20, 0
      %p61 = por %p59, %p60
      %s62 = ssub.s32 %s21, %s33
      %p63 = scmp.eq.s32.totalorder %s62, 0
      %s65 = sadd.s32 %s64, 1
      %s66 = scalar_select %p63, %s64, %s65
      %p69 = pneg %p63
      %p70 = scmp.eq.s32.totalorder %s14, 1
      %p71 = por %p69, %p70
      %p72 = scmp.ne.s32.totalorder %s64, %s67
      %p73 = scmp.eq.s32.totalorder %s14, 0
      %p74 = por %p72, %p73
      %p75 = scmp.ne.s32.totalorder %s64, %s67
      %p76 = scmp.eq.s32.totalorder %s19, 1
      %p77 = por %p75, %p76
      %p78 = scmp.ne.s32.totalorder %s67, %s68
      %p79 = scmp.eq.s32.totalorder %s19, 0
      %p80 = por %p78, %p79
      %p81 = scmp.ne.s32.totalorder %s67, %s68
      %p82 = scmp.eq.s32.totalorder %s20, 1
      %p83 = por %p81, %p82
      %p85 = scmp.ne.s32.totalorder %s68, %s84
      %p86 = scmp.eq.s32.totalorder %s20, 0
      %p87 = por %p85, %p86
      %s88 = ssub.s32 %s22, %s29
      %s89 = ssub.s32 %s21, %s33
      %s90 = sor.u32 %s88, %s89
      %p91 = scmp.eq.s32.totalorder %s90, 0
      %s93 = sadd.s32 %s92, 1
      %s94 = scalar_select %p91, %s92, %s93
      %p97 = pneg %p91
      %p98 = scmp.eq.s32.totalorder %s14, 1
      %p99 = por %p97, %p98
      %p100 = scmp.ne.s32.totalorder %s92, %s95
      %p101 = scmp.eq.s32.totalorder %s14, 0
      %p102 = por %p100, %p101
      %p103 = scmp.ne.s32.totalorder %s92, %s95
      %p104 = scmp.eq.s32.totalorder %s19, 1
      %p105 = por %p103, %p104
      %p106 = scmp.ne.s32.totalorder %s95, %s96
      %p107 = scmp.eq.s32.totalorder %s19, 0
      %p108 = por %p106, %p107
      %p109 = scmp.ne.s32.totalorder %s95, %s96
      %p110 = scmp.eq.s32.totalorder %s20, 1
      %p111 = por %p109, %p110
      %p113 = scmp.ne.s32.totalorder %s96, %s112
      %p114 = scmp.eq.s32.totalorder %s20, 0
      %p115 = por %p113, %p114
      %p116 = scmp.le.s32.totalorder 1, %s14
      %p117 = scmp.lt.s32.totalorder %s14, 3
      %p118 = pnand %p116, %p117
      %p119 = pneg %p118
      // Predicated region
      $region9: #{tpu_custom_call.1} parent=5 // pred_check
        _
      $region10: #{tpu_custom_call.1} parent=5 // pred_check_branch
        %121 = sbr.rel (%p118) target = $region12
      $region11: #{tpu_custom_call.1} parent=5 // pred_region
        %s122 = ssub.s32 %s14, 1
        // Predicated region
        $region13: #{tpu_custom_call.1} parent=11 // pred_check
          %p123 = pneg %p80
        $region14: #{tpu_custom_call.1} parent=11 // pred_check_branch
          %125 = sbr.rel (%p123) target = $region16
        $region15: #{tpu_custom_call.1} parent=11 // pred_region
          %s126 = smul.u32 20, %s23
          %p127 = scmp.lt.s32.totalorder %s126, 19
          %s128 = scalar_select %p127, %s126, 19
          %s129 = scalar_lea.vmem %s1, %s128
          %s130 = smul.u32 20, %s23
        $region16: #{tpu_custom_call.1} parent=11 // pred_fallthru
          _
      $region12: #{tpu_custom_call.1} parent=5 // pred_fallthru
        _
      %p131 = scmp.lt.s32.totalorder %s14, 2
      // Predicated region
      $region17: #{tpu_custom_call.1} parent=5 // pred_check
        %p132 = pneg %p131
      $region18: #{tpu_custom_call.1} parent=5 // pred_check_branch
        %134 = sbr.rel (%p132) target = $region20
      $region19: #{tpu_custom_call.1} parent=5 // pred_region
        // Predicated region
        $region21: #{tpu_custom_call.1} parent=19 // pred_check
          %p135 = pneg %p48
        $region22: #{tpu_custom_call.1} parent=19 // pred_check_branch
          %137 = sbr.rel (%p135) target = $region24
        $region23: #{tpu_custom_call.1} parent=19 // pred_region
          %s138 = sand.u32 %s38, 1
          %s139 = scalar_lea.sflag [#allocation3], %s138
          %s140 = sand.u32 %s38, 1
          %s141 = smul.addr %s140, 10240
          %s142 = scalar_lea.vmem [#allocation2], %s141
          %s143 = smul.u32 64, %s22
          %s144 = smul.u32 20, %s21
          %s146 = ssub.s32 163840, 163840
          %147 = vsyncadd %s139, %s146
          %s148 = smul.addr %s143, 20
          %s149 = sadd.s32 %s144, %s148
          %s150 = smul.addr %s149, 128
          %s151 = scalar_lea.hbm %s0, %s150
          %s152 = sshll.u32 %s142, 4
          %s153 = int_to_ptr.vmem [resolvable:$true] %s152
          %158 = dma.hbm_to_vmem [thread:$0]  %s151, 163840, %s153, %s139, 2560, 2560, 160
        $region24: #{tpu_custom_call.1} parent=19 // pred_fallthru
          _
      $region20: #{tpu_custom_call.1} parent=5 // pred_fallthru
        _
      %p159 = scmp.le.s32.totalorder 1, %s14
      %p160 = scmp.lt.s32.totalorder %s14, 3
      %p161 = pnand %p159, %p160
      %p162 = pneg %p161
      // Predicated region
      $region25: #{tpu_custom_call.1} parent=5 // pred_check
        _
      $region26: #{tpu_custom_call.1} parent=5 // pred_check_branch
        %164 = sbr.rel (%p161) target = $region28
      $region27: #{tpu_custom_call.1} parent=5 // pred_region
        %s165 = ssub.s32 %s14, 1
        %s166 = sand.u32 %s41, 1
        %s167 = scalar_lea.sflag [#allocation3], %s166
        %s168 = sand.u32 %s41, 1
        %s169 = smul.addr %s168, 10240
        %s170 = scalar_lea.vmem [#allocation2], %s169
        // Predicated region
        $region29: #{tpu_custom_call.1} parent=27 // pred_check
          %p171 = pneg %p54
        $region30: #{tpu_custom_call.1} parent=27 // pred_check_branch
          %173 = sbr.rel (%p171) target = $region32
        $region31: #{tpu_custom_call.1} parent=27 // pred_region
          %174 = dma.done %s167, 163840
        $region32: #{tpu_custom_call.1} parent=27 // pred_fallthru
          _
        %s175 = sand.u32 %s41, 1
        %s176 = scalar_lea.sflag [#allocation3], %s175
        %s177 = sand.u32 %s41, 1
        %s178 = smul.addr %s177, 10240
        %s179 = scalar_lea.vmem [#allocation2], %s178
        %p180 = pneg %p54
        %p181 = pneg %p51
        %s182 = smul.u32 20, %s23
        %p183 = scmp.lt.s32.totalorder %s182, 19
        %s184 = scalar_select %p183, %s182, 19
        %s185 = scalar_lea.vmem %s1, %s184
        %p186 = pneg %p80
        %p187 = pneg %p77
        %p188 = pneg %p108
        %p189 = pneg %p105
        %s190 = sand.u32 %s95, 1
        %s191 = scalar_lea.sflag [#allocation4], %s190
        %s192 = sand.u32 %s95, 1
        %s193 = smul.addr %s192, 10240
        %s194 = scalar_lea.vmem [#allocation5], %s193
        %s195 = smul.u32 64, %s24
        %s196 = smul.u32 20, %s23
        %s197 = smul.u32 20, %s23
        %p198 = scmp.lt.s32.totalorder %s197, 19
        %s199 = scalar_select %p198, %s197, 19
        %s200 = scalar_lea.vmem %s1, %s199
        %s201 = smul.u32 20, %s23
        %s202 = smul.u32 64, %s24
        %s203 = smul.u32 20, %s23
        %v204 = vld [vmem:[%s170] sm:$0xff]
        %v205 = vld [vmem:[%s170 + $0x8] sm:$0xff]
        %v206 = vld [vmem:[%s170 + $0x10] sm:$0xff]
        %v207 = vld [vmem:[%s170 + $0x18] sm:$0xff]
        %v208 = vld [vmem:[%s170 + $0x20] sm:$0xff]
        %v209 = vld [vmem:[%s170 + $0x28] sm:$0xff]
        %v210 = vld [vmem:[%s170 + $0x30] sm:$0xff]
        %v211 = vld [vmem:[%s170 + $0x38] sm:$0xff]
        %v212 = vld [vmem:[%s170 + $0x40] sm:$0xff]
        %v213 = vld [vmem:[%s170 + $0x48] sm:$0xff]
        %v214 = vld [vmem:[%s170 + $0x50] sm:$0xff]
        %v215 = vld [vmem:[%s170 + $0x58] sm:$0xff]
        %v216 = vld [vmem:[%s170 + $0x60] sm:$0xff]
        %v217 = vld [vmem:[%s170 + $0x68] sm:$0xff]
        %v218 = vld [vmem:[%s170 + $0x70] sm:$0xff]
        %v219 = vld [vmem:[%s170 + $0x78] sm:$0xff]
        %v220 = vld [vmem:[%s170 + $0x80] sm:$0xff]
        %v221 = vld [vmem:[%s170 + $0x88] sm:$0xff]
        %v222 = vld [vmem:[%s170 + $0x90] sm:$0xff]
        %v223 = vld [vmem:[%s170 + $0x98] sm:$0xff]
        %v224 = vld [vmem:[%s170 + $0xa0] sm:$0xff]
        %v225 = vld [vmem:[%s170 + $0xa8] sm:$0xff]
        %v226 = vld [vmem:[%s170 + $0xb0] sm:$0xff]
        %v227 = vld [vmem:[%s170 + $0xb8] sm:$0xff]
        %v228 = vld [vmem:[%s170 + $0xc0] sm:$0xff]
        %v229 = vld [vmem:[%s170 + $0xc8] sm:$0xff]
        %v230 = vld [vmem:[%s170 + $0xd0] sm:$0xff]
        %v231 = vld [vmem:[%s170 + $0xd8] sm:$0xff]
        %v232 = vld [vmem:[%s170 + $0xe0] sm:$0xff]
        %v233 = vld [vmem:[%s170 + $0xe8] sm:$0xff]
        %v234 = vld [vmem:[%s170 + $0xf0] sm:$0xff]
        %v235 = vld [vmem:[%s170 + $0xf8] sm:$0xff]
        %v236 = vld [vmem:[%s170 + $0x100] sm:$0xff]
        %v237 = vld [vmem:[%s170 + $0x108] sm:$0xff]
        %v238 = vld [vmem:[%s170 + $0x110] sm:$0xff]
        %v239 = vld [vmem:[%s170 + $0x118] sm:$0xff]
        %v240 = vld [vmem:[%s170 + $0x120] sm:$0xff]
        %v241 = vld [vmem:[%s170 + $0x128] sm:$0xff]
        %v242 = vld [vmem:[%s170 + $0x130] sm:$0xff]
        %v243 = vld [vmem:[%s170 + $0x138] sm:$0xff]
        %v244 = vld [vmem:[%s170 + $0x140] sm:$0xff]
        %v245 = vld [vmem:[%s170 + $0x148] sm:$0xff]
        %v246 = vld [vmem:[%s170 + $0x150] sm:$0xff]
        %v247 = vld [vmem:[%s170 + $0x158] sm:$0xff]
        %v248 = vld [vmem:[%s170 + $0x160] sm:$0xff]
        %v249 = vld [vmem:[%s170 + $0x168] sm:$0xff]
        %v250 = vld [vmem:[%s170 + $0x170] sm:$0xff]
        %v251 = vld [vmem:[%s170 + $0x178] sm:$0xff]
        %v252 = vld [vmem:[%s170 + $0x180] sm:$0xff]
        %v253 = vld [vmem:[%s170 + $0x188] sm:$0xff]
        %v254 = vld [vmem:[%s170 + $0x190] sm:$0xff]
        %v255 = vld [vmem:[%s170 + $0x198] sm:$0xff]
        %v256 = vld [vmem:[%s170 + $0x1a0] sm:$0xff]
        %v257 = vld [vmem:[%s170 + $0x1a8] sm:$0xff]
        %v258 = vld [vmem:[%s170 + $0x1b0] sm:$0xff]
        %v259 = vld [vmem:[%s170 + $0x1b8] sm:$0xff]
        %v260 = vld [vmem:[%s170 + $0x1c0] sm:$0xff]
        %v261 = vld [vmem:[%s170 + $0x1c8] sm:$0xff]
        %v262 = vld [vmem:[%s170 + $0x1d0] sm:$0xff]
        %v263 = vld [vmem:[%s170 + $0x1d8] sm:$0xff]
        %v264 = vld [vmem:[%s170 + $0x1e0] sm:$0xff]
        %v265 = vld [vmem:[%s170 + $0x1e8] sm:$0xff]
        %v266 = vld [vmem:[%s170 + $0x1f0] sm:$0xff]
        %v267 = vld [vmem:[%s170 + $0x1f8] sm:$0xff]
        %v268 = vld [vmem:[%s170 + $0x200] sm:$0xff]
        %v269 = vld [vmem:[%s170 + $0x208] sm:$0xff]
        %v270 = vld [vmem:[%s170 + $0x210] sm:$0xff]
        %v271 = vld [vmem:[%s170 + $0x218] sm:$0xff]
        %v272 = vld [vmem:[%s170 + $0x220] sm:$0xff]
        %v273 = vld [vmem:[%s170 + $0x228] sm:$0xff]
        %v274 = vld [vmem:[%s170 + $0x230] sm:$0xff]
        %v275 = vld [vmem:[%s170 + $0x238] sm:$0xff]
        %v276 = vld [vmem:[%s170 + $0x240] sm:$0xff]
        %v277 = vld [vmem:[%s170 + $0x248] sm:$0xff]
        %v278 = vld [vmem:[%s170 + $0x250] sm:$0xff]
        %v279 = vld [vmem:[%s170 + $0x258] sm:$0xff]
        %v280 = vld [vmem:[%s170 + $0x260] sm:$0xff]
        %v281 = vld [vmem:[%s170 + $0x268] sm:$0xff]
        %v282 = vld [vmem:[%s170 + $0x270] sm:$0xff]
        %v283 = vld [vmem:[%s170 + $0x278] sm:$0xff]
        %v284 = vld [vmem:[%s170 + $0x280] sm:$0xff]
        %v285 = vld [vmem:[%s170 + $0x288] sm:$0xff]
        %v286 = vld [vmem:[%s170 + $0x290] sm:$0xff]
        %v287 = vld [vmem:[%s170 + $0x298] sm:$0xff]
        %v288 = vld [vmem:[%s170 + $0x2a0] sm:$0xff]
        %v289 = vld [vmem:[%s170 + $0x2a8] sm:$0xff]
        %v290 = vld [vmem:[%s170 + $0x2b0] sm:$0xff]
        %v291 = vld [vmem:[%s170 + $0x2b8] sm:$0xff]
        %v292 = vld [vmem:[%s170 + $0x2c0] sm:$0xff]
        %v293 = vld [vmem:[%s170 + $0x2c8] sm:$0xff]
        %v294 = vld [vmem:[%s170 + $0x2d0] sm:$0xff]
        %v295 = vld [vmem:[%s170 + $0x2d8] sm:$0xff]
        %v296 = vld [vmem:[%s170 + $0x2e0] sm:$0xff]
        %v297 = vld [vmem:[%s170 + $0x2e8] sm:$0xff]
        %v298 = vld [vmem:[%s170 + $0x2f0] sm:$0xff]
        %v299 = vld [vmem:[%s170 + $0x2f8] sm:$0xff]
        %v300 = vld [vmem:[%s170 + $0x300] sm:$0xff]
        %v301 = vld [vmem:[%s170 + $0x308] sm:$0xff]
        %v302 = vld [vmem:[%s170 + $0x310] sm:$0xff]
        %v303 = vld [vmem:[%s170 + $0x318] sm:$0xff]
        %v304 = vld [vmem:[%s170 + $0x320] sm:$0xff]
        %v305 = vld [vmem:[%s170 + $0x328] sm:$0xff]
        %v306 = vld [vmem:[%s170 + $0x330] sm:$0xff]
        %v307 = vld [vmem:[%s170 + $0x338] sm:$0xff]
        %v308 = vld [vmem:[%s170 + $0x340] sm:$0xff]
        %v309 = vld [vmem:[%s170 + $0x348] sm:$0xff]
        %v310 = vld [vmem:[%s170 + $0x350] sm:$0xff]
        %v311 = vld [vmem:[%s170 + $0x358] sm:$0xff]
        %v312 = vld [vmem:[%s170 + $0x360] sm:$0xff]
        %v313 = vld [vmem:[%s170 + $0x368] sm:$0xff]
        %v314 = vld [vmem:[%s170 + $0x370] sm:$0xff]
        %v315 = vld [vmem:[%s170 + $0x378] sm:$0xff]
        %v316 = vld [vmem:[%s170 + $0x380] sm:$0xff]
        %v317 = vld [vmem:[%s170 + $0x388] sm:$0xff]
        %v318 = vld [vmem:[%s170 + $0x390] sm:$0xff]
        %v319 = vld [vmem:[%s170 + $0x398] sm:$0xff]
        %v320 = vld [vmem:[%s170 + $0x3a0] sm:$0xff]
        %v321 = vld [vmem:[%s170 + $0x3a8] sm:$0xff]
        %v322 = vld [vmem:[%s170 + $0x3b0] sm:$0xff]
        %v323 = vld [vmem:[%s170 + $0x3b8] sm:$0xff]
        %v324 = vld [vmem:[%s170 + $0x3c0] sm:$0xff]
        %v325 = vld [vmem:[%s170 + $0x3c8] sm:$0xff]
        %v326 = vld [vmem:[%s170 + $0x3d0] sm:$0xff]
        %v327 = vld [vmem:[%s170 + $0x3d8] sm:$0xff]
        %v328 = vld [vmem:[%s170 + $0x3e0] sm:$0xff]
        %v329 = vld [vmem:[%s170 + $0x3e8] sm:$0xff]
        %v330 = vld [vmem:[%s170 + $0x3f0] sm:$0xff]
        %v331 = vld [vmem:[%s170 + $0x3f8] sm:$0xff]
        %v332 = vld [vmem:[%s170 + $0x400] sm:$0xff]
        %v333 = vld [vmem:[%s170 + $0x408] sm:$0xff]
        %v334 = vld [vmem:[%s170 + $0x410] sm:$0xff]
        %v335 = vld [vmem:[%s170 + $0x418] sm:$0xff]
        %v336 = vld [vmem:[%s170 + $0x420] sm:$0xff]
        %v337 = vld [vmem:[%s170 + $0x428] sm:$0xff]
        %v338 = vld [vmem:[%s170 + $0x430] sm:$0xff]
        %v339 = vld [vmem:[%s170 + $0x438] sm:$0xff]
        %v340 = vld [vmem:[%s170 + $0x440] sm:$0xff]
        %v341 = vld [vmem:[%s170 + $0x448] sm:$0xff]
        %v342 = vld [vmem:[%s170 + $0x450] sm:$0xff]
        %v343 = vld [vmem:[%s170 + $0x458] sm:$0xff]
        %v344 = vld [vmem:[%s170 + $0x460] sm:$0xff]
        %v345 = vld [vmem:[%s170 + $0x468] sm:$0xff]
        %v346 = vld [vmem:[%s170 + $0x470] sm:$0xff]
        %v347 = vld [vmem:[%s170 + $0x478] sm:$0xff]
        %v348 = vld [vmem:[%s170 + $0x480] sm:$0xff]
        %v349 = vld [vmem:[%s170 + $0x488] sm:$0xff]
        %v350 = vld [vmem:[%s170 + $0x490] sm:$0xff]
        %v351 = vld [vmem:[%s170 + $0x498] sm:$0xff]
        %v352 = vld [vmem:[%s170 + $0x4a0] sm:$0xff]
        %v353 = vld [vmem:[%s170 + $0x4a8] sm:$0xff]
        %v354 = vld [vmem:[%s170 + $0x4b0] sm:$0xff]
        %v355 = vld [vmem:[%s170 + $0x4b8] sm:$0xff]
        %v356 = vld [vmem:[%s170 + $0x4c0] sm:$0xff]
        %v357 = vld [vmem:[%s170 + $0x4c8] sm:$0xff]
        %v358 = vld [vmem:[%s170 + $0x4d0] sm:$0xff]
        %v359 = vld [vmem:[%s170 + $0x4d8] sm:$0xff]
        %v360 = vld [vmem:[%s170 + $0x4e0] sm:$0xff]
        %v361 = vld [vmem:[%s170 + $0x4e8] sm:$0xff]
        %v362 = vld [vmem:[%s170 + $0x4f0] sm:$0xff]
        %v363 = vld [vmem:[%s170 + $0x4f8] sm:$0xff]
        %v364 = vld [vmem:[%s170 + $0x500] sm:$0xff]
        %v365 = vld [vmem:[%s170 + $0x508] sm:$0xff]
        %v366 = vld [vmem:[%s170 + $0x510] sm:$0xff]
        %v367 = vld [vmem:[%s170 + $0x518] sm:$0xff]
        %v368 = vld [vmem:[%s170 + $0x520] sm:$0xff]
        %v369 = vld [vmem:[%s170 + $0x528] sm:$0xff]
        %v370 = vld [vmem:[%s170 + $0x530] sm:$0xff]
        %v371 = vld [vmem:[%s170 + $0x538] sm:$0xff]
        %v372 = vld [vmem:[%s170 + $0x540] sm:$0xff]
        %v373 = vld [vmem:[%s170 + $0x548] sm:$0xff]
        %v374 = vld [vmem:[%s170 + $0x550] sm:$0xff]
        %v375 = vld [vmem:[%s170 + $0x558] sm:$0xff]
        %v376 = vld [vmem:[%s170 + $0x560] sm:$0xff]
        %v377 = vld [vmem:[%s170 + $0x568] sm:$0xff]
        %v378 = vld [vmem:[%s170 + $0x570] sm:$0xff]
        %v379 = vld [vmem:[%s170 + $0x578] sm:$0xff]
        %v380 = vld [vmem:[%s170 + $0x580] sm:$0xff]
        %v381 = vld [vmem:[%s170 + $0x588] sm:$0xff]
        %v382 = vld [vmem:[%s170 + $0x590] sm:$0xff]
        %v383 = vld [vmem:[%s170 + $0x598] sm:$0xff]
        %v384 = vld [vmem:[%s170 + $0x5a0] sm:$0xff]
        %v385 = vld [vmem:[%s170 + $0x5a8] sm:$0xff]
        %v386 = vld [vmem:[%s170 + $0x5b0] sm:$0xff]
        %v387 = vld [vmem:[%s170 + $0x5b8] sm:$0xff]
        %v388 = vld [vmem:[%s170 + $0x5c0] sm:$0xff]
        %v389 = vld [vmem:[%s170 + $0x5c8] sm:$0xff]
        %v390 = vld [vmem:[%s170 + $0x5d0] sm:$0xff]
        %v391 = vld [vmem:[%s170 + $0x5d8] sm:$0xff]
        %v392 = vld [vmem:[%s170 + $0x5e0] sm:$0xff]
        %v393 = vld [vmem:[%s170 + $0x5e8] sm:$0xff]
        %v394 = vld [vmem:[%s170 + $0x5f0] sm:$0xff]
        %v395 = vld [vmem:[%s170 + $0x5f8] sm:$0xff]
        %v396 = vld [vmem:[%s170 + $0x600] sm:$0xff]
        %v397 = vld [vmem:[%s170 + $0x608] sm:$0xff]
        %v398 = vld [vmem:[%s170 + $0x610] sm:$0xff]
        %v399 = vld [vmem:[%s170 + $0x618] sm:$0xff]
        %v400 = vld [vmem:[%s170 + $0x620] sm:$0xff]
        %v401 = vld [vmem:[%s170 + $0x628] sm:$0xff]
        %v402 = vld [vmem:[%s170 + $0x630] sm:$0xff]
        %v403 = vld [vmem:[%s170 + $0x638] sm:$0xff]
        %v404 = vld [vmem:[%s170 + $0x640] sm:$0xff]
        %v405 = vld [vmem:[%s170 + $0x648] sm:$0xff]
        %v406 = vld [vmem:[%s170 + $0x650] sm:$0xff]
        %v407 = vld [vmem:[%s170 + $0x658] sm:$0xff]
        %v408 = vld [vmem:[%s170 + $0x660] sm:$0xff]
        %v409 = vld [vmem:[%s170 + $0x668] sm:$0xff]
        %v410 = vld [vmem:[%s170 + $0x670] sm:$0xff]
        %v411 = vld [vmem:[%s170 + $0x678] sm:$0xff]
        %v412 = vld [vmem:[%s170 + $0x680] sm:$0xff]
        %v413 = vld [vmem:[%s170 + $0x688] sm:$0xff]
        %v414 = vld [vmem:[%s170 + $0x690] sm:$0xff]
        %v415 = vld [vmem:[%s170 + $0x698] sm:$0xff]
        %v416 = vld [vmem:[%s170 + $0x6a0] sm:$0xff]
        %v417 = vld [vmem:[%s170 + $0x6a8] sm:$0xff]
        %v418 = vld [vmem:[%s170 + $0x6b0] sm:$0xff]
        %v419 = vld [vmem:[%s170 + $0x6b8] sm:$0xff]
        %v420 = vld [vmem:[%s170 + $0x6c0] sm:$0xff]
        %v421 = vld [vmem:[%s170 + $0x6c8] sm:$0xff]
        %v422 = vld [vmem:[%s170 + $0x6d0] sm:$0xff]
        %v423 = vld [vmem:[%s170 + $0x6d8] sm:$0xff]
        %v424 = vld [vmem:[%s170 + $0x6e0] sm:$0xff]
        %v425 = vld [vmem:[%s170 + $0x6e8] sm:$0xff]
        %v426 = vld [vmem:[%s170 + $0x6f0] sm:$0xff]
        %v427 = vld [vmem:[%s170 + $0x6f8] sm:$0xff]
        %v428 = vld [vmem:[%s170 + $0x700] sm:$0xff]
        %v429 = vld [vmem:[%s170 + $0x708] sm:$0xff]
        %v430 = vld [vmem:[%s170 + $0x710] sm:$0xff]
        %v431 = vld [vmem:[%s170 + $0x718] sm:$0xff]
        %v432 = vld [vmem:[%s170 + $0x720] sm:$0xff]
        %v433 = vld [vmem:[%s170 + $0x728] sm:$0xff]
        %v434 = vld [vmem:[%s170 + $0x730] sm:$0xff]
        %v435 = vld [vmem:[%s170 + $0x738] sm:$0xff]
        %v436 = vld [vmem:[%s170 + $0x740] sm:$0xff]
        %v437 = vld [vmem:[%s170 + $0x748] sm:$0xff]
        %v438 = vld [vmem:[%s170 + $0x750] sm:$0xff]
        %v439 = vld [vmem:[%s170 + $0x758] sm:$0xff]
        %v440 = vld [vmem:[%s170 + $0x760] sm:$0xff]
        %v441 = vld [vmem:[%s170 + $0x768] sm:$0xff]
        %v442 = vld [vmem:[%s170 + $0x770] sm:$0xff]
        %v443 = vld [vmem:[%s170 + $0x778] sm:$0xff]
        %v444 = vld [vmem:[%s170 + $0x780] sm:$0xff]
        %v445 = vld [vmem:[%s170 + $0x788] sm:$0xff]
        %v446 = vld [vmem:[%s170 + $0x790] sm:$0xff]
        %v447 = vld [vmem:[%s170 + $0x798] sm:$0xff]
        %v448 = vld [vmem:[%s170 + $0x7a0] sm:$0xff]
        %v449 = vld [vmem:[%s170 + $0x7a8] sm:$0xff]
        %v450 = vld [vmem:[%s170 + $0x7b0] sm:$0xff]
        %v451 = vld [vmem:[%s170 + $0x7b8] sm:$0xff]
        %v452 = vld [vmem:[%s170 + $0x7c0] sm:$0xff]
        %v453 = vld [vmem:[%s170 + $0x7c8] sm:$0xff]
        %v454 = vld [vmem:[%s170 + $0x7d0] sm:$0xff]
        %v455 = vld [vmem:[%s170 + $0x7d8] sm:$0xff]
        %v456 = vld [vmem:[%s170 + $0x7e0] sm:$0xff]
        %v457 = vld [vmem:[%s170 + $0x7e8] sm:$0xff]
        %v458 = vld [vmem:[%s170 + $0x7f0] sm:$0xff]
        %v459 = vld [vmem:[%s170 + $0x7f8] sm:$0xff]
        %v460 = vld [vmem:[%s170 + $0x800] sm:$0xff]
        %v461 = vld [vmem:[%s170 + $0x808] sm:$0xff]
        %v462 = vld [vmem:[%s170 + $0x810] sm:$0xff]
        %v463 = vld [vmem:[%s170 + $0x818] sm:$0xff]
        %v464 = vld [vmem:[%s170 + $0x820] sm:$0xff]
        %v465 = vld [vmem:[%s170 + $0x828] sm:$0xff]
        %v466 = vld [vmem:[%s170 + $0x830] sm:$0xff]
        %v467 = vld [vmem:[%s170 + $0x838] sm:$0xff]
        %v468 = vld [vmem:[%s170 + $0x840] sm:$0xff]
        %v469 = vld [vmem:[%s170 + $0x848] sm:$0xff]
        %v470 = vld [vmem:[%s170 + $0x850] sm:$0xff]
        %v471 = vld [vmem:[%s170 + $0x858] sm:$0xff]
        %v472 = vld [vmem:[%s170 + $0x860] sm:$0xff]
        %v473 = vld [vmem:[%s170 + $0x868] sm:$0xff]
        %v474 = vld [vmem:[%s170 + $0x870] sm:$0xff]
        %v475 = vld [vmem:[%s170 + $0x878] sm:$0xff]
        %v476 = vld [vmem:[%s170 + $0x880] sm:$0xff]
        %v477 = vld [vmem:[%s170 + $0x888] sm:$0xff]
        %v478 = vld [vmem:[%s170 + $0x890] sm:$0xff]
        %v479 = vld [vmem:[%s170 + $0x898] sm:$0xff]
        %v480 = vld [vmem:[%s170 + $0x8a0] sm:$0xff]
        %v481 = vld [vmem:[%s170 + $0x8a8] sm:$0xff]
        %v482 = vld [vmem:[%s170 + $0x8b0] sm:$0xff]
        %v483 = vld [vmem:[%s170 + $0x8b8] sm:$0xff]
        %v484 = vld [vmem:[%s170 + $0x8c0] sm:$0xff]
        %v485 = vld [vmem:[%s170 + $0x8c8] sm:$0xff]
        %v486 = vld [vmem:[%s170 + $0x8d0] sm:$0xff]
        %v487 = vld [vmem:[%s170 + $0x8d8] sm:$0xff]
        %v488 = vld [vmem:[%s170 + $0x8e0] sm:$0xff]
        %v489 = vld [vmem:[%s170 + $0x8e8] sm:$0xff]
        %v490 = vld [vmem:[%s170 + $0x8f0] sm:$0xff]
        %v491 = vld [vmem:[%s170 + $0x8f8] sm:$0xff]
        %v492 = vld [vmem:[%s170 + $0x900] sm:$0xff]
        %v493 = vld [vmem:[%s170 + $0x908] sm:$0xff]
        %v494 = vld [vmem:[%s170 + $0x910] sm:$0xff]
        %v495 = vld [vmem:[%s170 + $0x918] sm:$0xff]
        %v496 = vld [vmem:[%s170 + $0x920] sm:$0xff]
        %v497 = vld [vmem:[%s170 + $0x928] sm:$0xff]
        %v498 = vld [vmem:[%s170 + $0x930] sm:$0xff]
        %v499 = vld [vmem:[%s170 + $0x938] sm:$0xff]
        %v500 = vld [vmem:[%s170 + $0x940] sm:$0xff]
        %v501 = vld [vmem:[%s170 + $0x948] sm:$0xff]
        %v502 = vld [vmem:[%s170 + $0x950] sm:$0xff]
        %v503 = vld [vmem:[%s170 + $0x958] sm:$0xff]
        %v504 = vld [vmem:[%s170 + $0x960] sm:$0xff]
        %v505 = vld [vmem:[%s170 + $0x968] sm:$0xff]
        %v506 = vld [vmem:[%s170 + $0x970] sm:$0xff]
        %v507 = vld [vmem:[%s170 + $0x978] sm:$0xff]
        %v508 = vld [vmem:[%s170 + $0x980] sm:$0xff]
        %v509 = vld [vmem:[%s170 + $0x988] sm:$0xff]
        %v510 = vld [vmem:[%s170 + $0x990] sm:$0xff]
        %v511 = vld [vmem:[%s170 + $0x998] sm:$0xff]
        %v512 = vld [vmem:[%s170 + $0x9a0] sm:$0xff]
        %v513 = vld [vmem:[%s170 + $0x9a8] sm:$0xff]
        %v514 = vld [vmem:[%s170 + $0x9b0] sm:$0xff]
        %v515 = vld [vmem:[%s170 + $0x9b8] sm:$0xff]
        %v516 = vld [vmem:[%s170 + $0x9c0] sm:$0xff]
        %v517 = vld [vmem:[%s170 + $0x9c8] sm:$0xff]
        %v518 = vld [vmem:[%s170 + $0x9d0] sm:$0xff]
        %v519 = vld [vmem:[%s170 + $0x9d8] sm:$0xff]
        %v520 = vld [vmem:[%s170 + $0x9e0] sm:$0xff]
        %v521 = vld [vmem:[%s170 + $0x9e8] sm:$0xff]
        %v522 = vld [vmem:[%s170 + $0x9f0] sm:$0xff]
        %v523 = vld [vmem:[%s170 + $0x9f8] sm:$0xff]
        %v524 = vld [vmem:[%s170 + $0xa00] sm:$0xff]
        %v525 = vld [vmem:[%s170 + $0xa08] sm:$0xff]
        %v526 = vld [vmem:[%s170 + $0xa10] sm:$0xff]
        %v527 = vld [vmem:[%s170 + $0xa18] sm:$0xff]
        %v528 = vld [vmem:[%s170 + $0xa20] sm:$0xff]
        %v529 = vld [vmem:[%s170 + $0xa28] sm:$0xff]
        %v530 = vld [vmem:[%s170 + $0xa30] sm:$0xff]
        %v531 = vld [vmem:[%s170 + $0xa38] sm:$0xff]
        %v532 = vld [vmem:[%s170 + $0xa40] sm:$0xff]
        %v533 = vld [vmem:[%s170 + $0xa48] sm:$0xff]
        %v534 = vld [vmem:[%s170 + $0xa50] sm:$0xff]
        %v535 = vld [vmem:[%s170 + $0xa58] sm:$0xff]
        %v536 = vld [vmem:[%s170 + $0xa60] sm:$0xff]
        %v537 = vld [vmem:[%s170 + $0xa68] sm:$0xff]
        %v538 = vld [vmem:[%s170 + $0xa70] sm:$0xff]
        %v539 = vld [vmem:[%s170 + $0xa78] sm:$0xff]
        %v540 = vld [vmem:[%s170 + $0xa80] sm:$0xff]
        %v541 = vld [vmem:[%s170 + $0xa88] sm:$0xff]
        %v542 = vld [vmem:[%s170 + $0xa90] sm:$0xff]
        %v543 = vld [vmem:[%s170 + $0xa98] sm:$0xff]
        %v544 = vld [vmem:[%s170 + $0xaa0] sm:$0xff]
        %v545 = vld [vmem:[%s170 + $0xaa8] sm:$0xff]
        %v546 = vld [vmem:[%s170 + $0xab0] sm:$0xff]
        %v547 = vld [vmem:[%s170 + $0xab8] sm:$0xff]
        %v548 = vld [vmem:[%s170 + $0xac0] sm:$0xff]
        %v549 = vld [vmem:[%s170 + $0xac8] sm:$0xff]
        %v550 = vld [vmem:[%s170 + $0xad0] sm:$0xff]
        %v551 = vld [vmem:[%s170 + $0xad8] sm:$0xff]
        %v552 = vld [vmem:[%s170 + $0xae0] sm:$0xff]
        %v553 = vld [vmem:[%s170 + $0xae8] sm:$0xff]
        %v554 = vld [vmem:[%s170 + $0xaf0] sm:$0xff]
        %v555 = vld [vmem:[%s170 + $0xaf8] sm:$0xff]
        %v556 = vld [vmem:[%s170 + $0xb00] sm:$0xff]
        %v557 = vld [vmem:[%s170 + $0xb08] sm:$0xff]
        %v558 = vld [vmem:[%s170 + $0xb10] sm:$0xff]
        %v559 = vld [vmem:[%s170 + $0xb18] sm:$0xff]
        %v560 = vld [vmem:[%s170 + $0xb20] sm:$0xff]
        %v561 = vld [vmem:[%s170 + $0xb28] sm:$0xff]
        %v562 = vld [vmem:[%s170 + $0xb30] sm:$0xff]
        %v563 = vld [vmem:[%s170 + $0xb38] sm:$0xff]
        %v564 = vld [vmem:[%s170 + $0xb40] sm:$0xff]
        %v565 = vld [vmem:[%s170 + $0xb48] sm:$0xff]
        %v566 = vld [vmem:[%s170 + $0xb50] sm:$0xff]
        %v567 = vld [vmem:[%s170 + $0xb58] sm:$0xff]
        %v568 = vld [vmem:[%s170 + $0xb60] sm:$0xff]
        %v569 = vld [vmem:[%s170 + $0xb68] sm:$0xff]
        %v570 = vld [vmem:[%s170 + $0xb70] sm:$0xff]
        %v571 = vld [vmem:[%s170 + $0xb78] sm:$0xff]
        %v572 = vld [vmem:[%s170 + $0xb80] sm:$0xff]
        %v573 = vld [vmem:[%s170 + $0xb88] sm:$0xff]
        %v574 = vld [vmem:[%s170 + $0xb90] sm:$0xff]
        %v575 = vld [vmem:[%s170 + $0xb98] sm:$0xff]
        %v576 = vld [vmem:[%s170 + $0xba0] sm:$0xff]
        %v577 = vld [vmem:[%s170 + $0xba8] sm:$0xff]
        %v578 = vld [vmem:[%s170 + $0xbb0] sm:$0xff]
        %v579 = vld [vmem:[%s170 + $0xbb8] sm:$0xff]
        %v580 = vld [vmem:[%s170 + $0xbc0] sm:$0xff]
        %v581 = vld [vmem:[%s170 + $0xbc8] sm:$0xff]
        %v582 = vld [vmem:[%s170 + $0xbd0] sm:$0xff]
        %v583 = vld [vmem:[%s170 + $0xbd8] sm:$0xff]
        %v584 = vld [vmem:[%s170 + $0xbe0] sm:$0xff]
        %v585 = vld [vmem:[%s170 + $0xbe8] sm:$0xff]
        %v586 = vld [vmem:[%s170 + $0xbf0] sm:$0xff]
        %v587 = vld [vmem:[%s170 + $0xbf8] sm:$0xff]
        %v588 = vld [vmem:[%s170 + $0xc00] sm:$0xff]
        %v589 = vld [vmem:[%s170 + $0xc08] sm:$0xff]
        %v590 = vld [vmem:[%s170 + $0xc10] sm:$0xff]
        %v591 = vld [vmem:[%s170 + $0xc18] sm:$0xff]
        %v592 = vld [vmem:[%s170 + $0xc20] sm:$0xff]
        %v593 = vld [vmem:[%s170 + $0xc28] sm:$0xff]
        %v594 = vld [vmem:[%s170 + $0xc30] sm:$0xff]
        %v595 = vld [vmem:[%s170 + $0xc38] sm:$0xff]
        %v596 = vld [vmem:[%s170 + $0xc40] sm:$0xff]
        %v597 = vld [vmem:[%s170 + $0xc48] sm:$0xff]
        %v598 = vld [vmem:[%s170 + $0xc50] sm:$0xff]
        %v599 = vld [vmem:[%s170 + $0xc58] sm:$0xff]
        %v600 = vld [vmem:[%s170 + $0xc60] sm:$0xff]
        %v601 = vld [vmem:[%s170 + $0xc68] sm:$0xff]
        %v602 = vld [vmem:[%s170 + $0xc70] sm:$0xff]
        %v603 = vld [vmem:[%s170 + $0xc78] sm:$0xff]
        %v604 = vld [vmem:[%s170 + $0xc80] sm:$0xff]
        %v605 = vld [vmem:[%s170 + $0xc88] sm:$0xff]
        %v606 = vld [vmem:[%s170 + $0xc90] sm:$0xff]
        %v607 = vld [vmem:[%s170 + $0xc98] sm:$0xff]
        %v608 = vld [vmem:[%s170 + $0xca0] sm:$0xff]
        %v609 = vld [vmem:[%s170 + $0xca8] sm:$0xff]
        %v610 = vld [vmem:[%s170 + $0xcb0] sm:$0xff]
        %v611 = vld [vmem:[%s170 + $0xcb8] sm:$0xff]
        %v612 = vld [vmem:[%s170 + $0xcc0] sm:$0xff]
        %v613 = vld [vmem:[%s170 + $0xcc8] sm:$0xff]
        %v614 = vld [vmem:[%s170 + $0xcd0] sm:$0xff]
        %v615 = vld [vmem:[%s170 + $0xcd8] sm:$0xff]
        %v616 = vld [vmem:[%s170 + $0xce0] sm:$0xff]
        %v617 = vld [vmem:[%s170 + $0xce8] sm:$0xff]
        %v618 = vld [vmem:[%s170 + $0xcf0] sm:$0xff]
        %v619 = vld [vmem:[%s170 + $0xcf8] sm:$0xff]
        %v620 = vld [vmem:[%s170 + $0xd00] sm:$0xff]
        %v621 = vld [vmem:[%s170 + $0xd08] sm:$0xff]
        %v622 = vld [vmem:[%s170 + $0xd10] sm:$0xff]
        %v623 = vld [vmem:[%s170 + $0xd18] sm:$0xff]
        %v624 = vld [vmem:[%s170 + $0xd20] sm:$0xff]
        %v625 = vld [vmem:[%s170 + $0xd28] sm:$0xff]
        %v626 = vld [vmem:[%s170 + $0xd30] sm:$0xff]
        %v627 = vld [vmem:[%s170 + $0xd38] sm:$0xff]
        %v628 = vld [vmem:[%s170 + $0xd40] sm:$0xff]
        %v629 = vld [vmem:[%s170 + $0xd48] sm:$0xff]
        %v630 = vld [vmem:[%s170 + $0xd50] sm:$0xff]
        %v631 = vld [vmem:[%s170 + $0xd58] sm:$0xff]
        %v632 = vld [vmem:[%s170 + $0xd60] sm:$0xff]
        %v633 = vld [vmem:[%s170 + $0xd68] sm:$0xff]
        %v634 = vld [vmem:[%s170 + $0xd70] sm:$0xff]
        %v635 = vld [vmem:[%s170 + $0xd78] sm:$0xff]
        %v636 = vld [vmem:[%s170 + $0xd80] sm:$0xff]
        %v637 = vld [vmem:[%s170 + $0xd88] sm:$0xff]
        %v638 = vld [vmem:[%s170 + $0xd90] sm:$0xff]
        %v639 = vld [vmem:[%s170 + $0xd98] sm:$0xff]
        %v640 = vld [vmem:[%s170 + $0xda0] sm:$0xff]
        %v641 = vld [vmem:[%s170 + $0xda8] sm:$0xff]
        %v642 = vld [vmem:[%s170 + $0xdb0] sm:$0xff]
        %v643 = vld [vmem:[%s170 + $0xdb8] sm:$0xff]
        %v644 = vld [vmem:[%s170 + $0xdc0] sm:$0xff]
        %v645 = vld [vmem:[%s170 + $0xdc8] sm:$0xff]
        %v646 = vld [vmem:[%s170 + $0xdd0] sm:$0xff]
        %v647 = vld [vmem:[%s170 + $0xdd8] sm:$0xff]
        %v648 = vld [vmem:[%s170 + $0xde0] sm:$0xff]
        %v649 = vld [vmem:[%s170 + $0xde8] sm:$0xff]
        %v650 = vld [vmem:[%s170 + $0xdf0] sm:$0xff]
        %v651 = vld [vmem:[%s170 + $0xdf8] sm:$0xff]
        %v652 = vld [vmem:[%s170 + $0xe00] sm:$0xff]
        %v653 = vld [vmem:[%s170 + $0xe08] sm:$0xff]
        %v654 = vld [vmem:[%s170 + $0xe10] sm:$0xff]
        %v655 = vld [vmem:[%s170 + $0xe18] sm:$0xff]
        %v656 = vld [vmem:[%s170 + $0xe20] sm:$0xff]
        %v657 = vld [vmem:[%s170 + $0xe28] sm:$0xff]
        %v658 = vld [vmem:[%s170 + $0xe30] sm:$0xff]
        %v659 = vld [vmem:[%s170 + $0xe38] sm:$0xff]
        %v660 = vld [vmem:[%s170 + $0xe40] sm:$0xff]
        %v661 = vld [vmem:[%s170 + $0xe48] sm:$0xff]
        %v662 = vld [vmem:[%s170 + $0xe50] sm:$0xff]
        %v663 = vld [vmem:[%s170 + $0xe58] sm:$0xff]
        %v664 = vld [vmem:[%s170 + $0xe60] sm:$0xff]
        %v665 = vld [vmem:[%s170 + $0xe68] sm:$0xff]
        %v666 = vld [vmem:[%s170 + $0xe70] sm:$0xff]
        %v667 = vld [vmem:[%s170 + $0xe78] sm:$0xff]
        %v668 = vld [vmem:[%s170 + $0xe80] sm:$0xff]
        %v669 = vld [vmem:[%s170 + $0xe88] sm:$0xff]
        %v670 = vld [vmem:[%s170 + $0xe90] sm:$0xff]
        %v671 = vld [vmem:[%s170 + $0xe98] sm:$0xff]
        %v672 = vld [vmem:[%s170 + $0xea0] sm:$0xff]
        %v673 = vld [vmem:[%s170 + $0xea8] sm:$0xff]
        %v674 = vld [vmem:[%s170 + $0xeb0] sm:$0xff]
        %v675 = vld [vmem:[%s170 + $0xeb8] sm:$0xff]
        %v676 = vld [vmem:[%s170 + $0xec0] sm:$0xff]
        %v677 = vld [vmem:[%s170 + $0xec8] sm:$0xff]
        %v678 = vld [vmem:[%s170 + $0xed0] sm:$0xff]
        %v679 = vld [vmem:[%s170 + $0xed8] sm:$0xff]
        %v680 = vld [vmem:[%s170 + $0xee0] sm:$0xff]
        %v681 = vld [vmem:[%s170 + $0xee8] sm:$0xff]
        %v682 = vld [vmem:[%s170 + $0xef0] sm:$0xff]
        %v683 = vld [vmem:[%s170 + $0xef8] sm:$0xff]
        %v684 = vld [vmem:[%s170 + $0xf00] sm:$0xff]
        %v685 = vld [vmem:[%s170 + $0xf08] sm:$0xff]
        %v686 = vld [vmem:[%s170 + $0xf10] sm:$0xff]
        %v687 = vld [vmem:[%s170 + $0xf18] sm:$0xff]
        %v688 = vld [vmem:[%s170 + $0xf20] sm:$0xff]
        %v689 = vld [vmem:[%s170 + $0xf28] sm:$0xff]
        %v690 = vld [vmem:[%s170 + $0xf30] sm:$0xff]
        %v691 = vld [vmem:[%s170 + $0xf38] sm:$0xff]
        %v692 = vld [vmem:[%s170 + $0xf40] sm:$0xff]
        %v693 = vld [vmem:[%s170 + $0xf48] sm:$0xff]
        %v694 = vld [vmem:[%s170 + $0xf50] sm:$0xff]
        %v695 = vld [vmem:[%s170 + $0xf58] sm:$0xff]
        %v696 = vld [vmem:[%s170 + $0xf60] sm:$0xff]
        %v697 = vld [vmem:[%s170 + $0xf68] sm:$0xff]
        %v698 = vld [vmem:[%s170 + $0xf70] sm:$0xff]
        %v699 = vld [vmem:[%s170 + $0xf78] sm:$0xff]
        %v700 = vld [vmem:[%s170 + $0xf80] sm:$0xff]
        %v701 = vld [vmem:[%s170 + $0xf88] sm:$0xff]
        %v702 = vld [vmem:[%s170 + $0xf90] sm:$0xff]
        %v703 = vld [vmem:[%s170 + $0xf98] sm:$0xff]
        %v704 = vld [vmem:[%s170 + $0xfa0] sm:$0xff]
        %v705 = vld [vmem:[%s170 + $0xfa8] sm:$0xff]
        %v706 = vld [vmem:[%s170 + $0xfb0] sm:$0xff]
        %v707 = vld [vmem:[%s170 + $0xfb8] sm:$0xff]
        %v708 = vld [vmem:[%s170 + $0xfc0] sm:$0xff]
        %v709 = vld [vmem:[%s170 + $0xfc8] sm:$0xff]
        %v710 = vld [vmem:[%s170 + $0xfd0] sm:$0xff]
        %v711 = vld [vmem:[%s170 + $0xfd8] sm:$0xff]
        %v712 = vld [vmem:[%s170 + $0xfe0] sm:$0xff]
        %v713 = vld [vmem:[%s170 + $0xfe8] sm:$0xff]
        %v714 = vld [vmem:[%s170 + $0xff0] sm:$0xff]
        %v715 = vld [vmem:[%s170 + $0xff8] sm:$0xff]
        %v716 = vld [vmem:[%s170 + $0x1000] sm:$0xff]
        %v717 = vld [vmem:[%s170 + $0x1008] sm:$0xff]
        %v718 = vld [vmem:[%s170 + $0x1010] sm:$0xff]
        %v719 = vld [vmem:[%s170 + $0x1018] sm:$0xff]
        %v720 = vld [vmem:[%s170 + $0x1020] sm:$0xff]
        %v721 = vld [vmem:[%s170 + $0x1028] sm:$0xff]
        %v722 = vld [vmem:[%s170 + $0x1030] sm:$0xff]
        %v723 = vld [vmem:[%s170 + $0x1038] sm:$0xff]
        %v724 = vld [vmem:[%s170 + $0x1040] sm:$0xff]
        %v725 = vld [vmem:[%s170 + $0x1048] sm:$0xff]
        %v726 = vld [vmem:[%s170 + $0x1050] sm:$0xff]
        %v727 = vld [vmem:[%s170 + $0x1058] sm:$0xff]
        %v728 = vld [vmem:[%s170 + $0x1060] sm:$0xff]
        %v729 = vld [vmem:[%s170 + $0x1068] sm:$0xff]
        %v730 = vld [vmem:[%s170 + $0x1070] sm:$0xff]
        %v731 = vld [vmem:[%s170 + $0x1078] sm:$0xff]
        %v732 = vld [vmem:[%s170 + $0x1080] sm:$0xff]
        %v733 = vld [vmem:[%s170 + $0x1088] sm:$0xff]
        %v734 = vld [vmem:[%s170 + $0x1090] sm:$0xff]
        %v735 = vld [vmem:[%s170 + $0x1098] sm:$0xff]
        %v736 = vld [vmem:[%s170 + $0x10a0] sm:$0xff]
        %v737 = vld [vmem:[%s170 + $0x10a8] sm:$0xff]
        %v738 = vld [vmem:[%s170 + $0x10b0] sm:$0xff]
        %v739 = vld [vmem:[%s170 + $0x10b8] sm:$0xff]
        %v740 = vld [vmem:[%s170 + $0x10c0] sm:$0xff]
        %v741 = vld [vmem:[%s170 + $0x10c8] sm:$0xff]
        %v742 = vld [vmem:[%s170 + $0x10d0] sm:$0xff]
        %v743 = vld [vmem:[%s170 + $0x10d8] sm:$0xff]
        %v744 = vld [vmem:[%s170 + $0x10e0] sm:$0xff]
        %v745 = vld [vmem:[%s170 + $0x10e8] sm:$0xff]
        %v746 = vld [vmem:[%s170 + $0x10f0] sm:$0xff]
        %v747 = vld [vmem:[%s170 + $0x10f8] sm:$0xff]
        %v748 = vld [vmem:[%s170 + $0x1100] sm:$0xff]
        %v749 = vld [vmem:[%s170 + $0x1108] sm:$0xff]
        %v750 = vld [vmem:[%s170 + $0x1110] sm:$0xff]
        %v751 = vld [vmem:[%s170 + $0x1118] sm:$0xff]
        %v752 = vld [vmem:[%s170 + $0x1120] sm:$0xff]
        %v753 = vld [vmem:[%s170 + $0x1128] sm:$0xff]
        %v754 = vld [vmem:[%s170 + $0x1130] sm:$0xff]
        %v755 = vld [vmem:[%s170 + $0x1138] sm:$0xff]
        %v756 = vld [vmem:[%s170 + $0x1140] sm:$0xff]
        %v757 = vld [vmem:[%s170 + $0x1148] sm:$0xff]
        %v758 = vld [vmem:[%s170 + $0x1150] sm:$0xff]
        %v759 = vld [vmem:[%s170 + $0x1158] sm:$0xff]
        %v760 = vld [vmem:[%s170 + $0x1160] sm:$0xff]
        %v761 = vld [vmem:[%s170 + $0x1168] sm:$0xff]
        %v762 = vld [vmem:[%s170 + $0x1170] sm:$0xff]
        %v763 = vld [vmem:[%s170 + $0x1178] sm:$0xff]
        %v764 = vld [vmem:[%s170 + $0x1180] sm:$0xff]
        %v765 = vld [vmem:[%s170 + $0x1188] sm:$0xff]
        %v766 = vld [vmem:[%s170 + $0x1190] sm:$0xff]
        %v767 = vld [vmem:[%s170 + $0x1198] sm:$0xff]
        %v768 = vld [vmem:[%s170 + $0x11a0] sm:$0xff]
        %v769 = vld [vmem:[%s170 + $0x11a8] sm:$0xff]
        %v770 = vld [vmem:[%s170 + $0x11b0] sm:$0xff]
        %v771 = vld [vmem:[%s170 + $0x11b8] sm:$0xff]
        %v772 = vld [vmem:[%s170 + $0x11c0] sm:$0xff]
        %v773 = vld [vmem:[%s170 + $0x11c8] sm:$0xff]
        %v774 = vld [vmem:[%s170 + $0x11d0] sm:$0xff]
        %v775 = vld [vmem:[%s170 + $0x11d8] sm:$0xff]
        %v776 = vld [vmem:[%s170 + $0x11e0] sm:$0xff]
        %v777 = vld [vmem:[%s170 + $0x11e8] sm:$0xff]
        %v778 = vld [vmem:[%s170 + $0x11f0] sm:$0xff]
        %v779 = vld [vmem:[%s170 + $0x11f8] sm:$0xff]
        %v780 = vld [vmem:[%s170 + $0x1200] sm:$0xff]
        %v781 = vld [vmem:[%s170 + $0x1208] sm:$0xff]
        %v782 = vld [vmem:[%s170 + $0x1210] sm:$0xff]
        %v783 = vld [vmem:[%s170 + $0x1218] sm:$0xff]
        %v784 = vld [vmem:[%s170 + $0x1220] sm:$0xff]
        %v785 = vld [vmem:[%s170 + $0x1228] sm:$0xff]
        %v786 = vld [vmem:[%s170 + $0x1230] sm:$0xff]
        %v787 = vld [vmem:[%s170 + $0x1238] sm:$0xff]
        %v788 = vld [vmem:[%s170 + $0x1240] sm:$0xff]
        %v789 = vld [vmem:[%s170 + $0x1248] sm:$0xff]
        %v790 = vld [vmem:[%s170 + $0x1250] sm:$0xff]
        %v791 = vld [vmem:[%s170 + $0x1258] sm:$0xff]
        %v792 = vld [vmem:[%s170 + $0x1260] sm:$0xff]
        %v793 = vld [vmem:[%s170 + $0x1268] sm:$0xff]
        %v794 = vld [vmem:[%s170 + $0x1270] sm:$0xff]
        %v795 = vld [vmem:[%s170 + $0x1278] sm:$0xff]
        %v796 = vld [vmem:[%s170 + $0x1280] sm:$0xff]
        %v797 = vld [vmem:[%s170 + $0x1288] sm:$0xff]
        %v798 = vld [vmem:[%s170 + $0x1290] sm:$0xff]
        %v799 = vld [vmem:[%s170 + $0x1298] sm:$0xff]
        %v800 = vld [vmem:[%s170 + $0x12a0] sm:$0xff]
        %v801 = vld [vmem:[%s170 + $0x12a8] sm:$0xff]
        %v802 = vld [vmem:[%s170 + $0x12b0] sm:$0xff]
        %v803 = vld [vmem:[%s170 + $0x12b8] sm:$0xff]
        %v804 = vld [vmem:[%s170 + $0x12c0] sm:$0xff]
        %v805 = vld [vmem:[%s170 + $0x12c8] sm:$0xff]
        %v806 = vld [vmem:[%s170 + $0x12d0] sm:$0xff]
        %v807 = vld [vmem:[%s170 + $0x12d8] sm:$0xff]
        %v808 = vld [vmem:[%s170 + $0x12e0] sm:$0xff]
        %v809 = vld [vmem:[%s170 + $0x12e8] sm:$0xff]
        %v810 = vld [vmem:[%s170 + $0x12f0] sm:$0xff]
        %v811 = vld [vmem:[%s170 + $0x12f8] sm:$0xff]
        %v812 = vld [vmem:[%s170 + $0x1300] sm:$0xff]
        %v813 = vld [vmem:[%s170 + $0x1308] sm:$0xff]
        %v814 = vld [vmem:[%s170 + $0x1310] sm:$0xff]
        %v815 = vld [vmem:[%s170 + $0x1318] sm:$0xff]
        %v816 = vld [vmem:[%s170 + $0x1320] sm:$0xff]
        %v817 = vld [vmem:[%s170 + $0x1328] sm:$0xff]
        %v818 = vld [vmem:[%s170 + $0x1330] sm:$0xff]
        %v819 = vld [vmem:[%s170 + $0x1338] sm:$0xff]
        %v820 = vld [vmem:[%s170 + $0x1340] sm:$0xff]
        %v821 = vld [vmem:[%s170 + $0x1348] sm:$0xff]
        %v822 = vld [vmem:[%s170 + $0x1350] sm:$0xff]
        %v823 = vld [vmem:[%s170 + $0x1358] sm:$0xff]
        %v824 = vld [vmem:[%s170 + $0x1360] sm:$0xff]
        %v825 = vld [vmem:[%s170 + $0x1368] sm:$0xff]
        %v826 = vld [vmem:[%s170 + $0x1370] sm:$0xff]
        %v827 = vld [vmem:[%s170 + $0x1378] sm:$0xff]
        %v828 = vld [vmem:[%s170 + $0x1380] sm:$0xff]
        %v829 = vld [vmem:[%s170 + $0x1388] sm:$0xff]
        %v830 = vld [vmem:[%s170 + $0x1390] sm:$0xff]
        %v831 = vld [vmem:[%s170 + $0x1398] sm:$0xff]
        %v832 = vld [vmem:[%s170 + $0x13a0] sm:$0xff]
        %v833 = vld [vmem:[%s170 + $0x13a8] sm:$0xff]
        %v834 = vld [vmem:[%s170 + $0x13b0] sm:$0xff]
        %v835 = vld [vmem:[%s170 + $0x13b8] sm:$0xff]
        %v836 = vld [vmem:[%s170 + $0x13c0] sm:$0xff]
        %v837 = vld [vmem:[%s170 + $0x13c8] sm:$0xff]
        %v838 = vld [vmem:[%s170 + $0x13d0] sm:$0xff]
        %v839 = vld [vmem:[%s170 + $0x13d8] sm:$0xff]
        %v840 = vld [vmem:[%s170 + $0x13e0] sm:$0xff]
        %v841 = vld [vmem:[%s170 + $0x13e8] sm:$0xff]
        %v842 = vld [vmem:[%s170 + $0x13f0] sm:$0xff]
        %v843 = vld [vmem:[%s170 + $0x13f8] sm:$0xff]
        %v844 = vld [vmem:[%s170 + $0x1400] sm:$0xff]
        %v845 = vld [vmem:[%s170 + $0x1408] sm:$0xff]
        %v846 = vld [vmem:[%s170 + $0x1410] sm:$0xff]
        %v847 = vld [vmem:[%s170 + $0x1418] sm:$0xff]
        %v848 = vld [vmem:[%s170 + $0x1420] sm:$0xff]
        %v849 = vld [vmem:[%s170 + $0x1428] sm:$0xff]
        %v850 = vld [vmem:[%s170 + $0x1430] sm:$0xff]
        %v851 = vld [vmem:[%s170 + $0x1438] sm:$0xff]
        %v852 = vld [vmem:[%s170 + $0x1440] sm:$0xff]
        %v853 = vld [vmem:[%s170 + $0x1448] sm:$0xff]
        %v854 = vld [vmem:[%s170 + $0x1450] sm:$0xff]
        %v855 = vld [vmem:[%s170 + $0x1458] sm:$0xff]
        %v856 = vld [vmem:[%s170 + $0x1460] sm:$0xff]
        %v857 = vld [vmem:[%s170 + $0x1468] sm:$0xff]
        %v858 = vld [vmem:[%s170 + $0x1470] sm:$0xff]
        %v859 = vld [vmem:[%s170 + $0x1478] sm:$0xff]
        %v860 = vld [vmem:[%s170 + $0x1480] sm:$0xff]
        %v861 = vld [vmem:[%s170 + $0x1488] sm:$0xff]
        %v862 = vld [vmem:[%s170 + $0x1490] sm:$0xff]
        %v863 = vld [vmem:[%s170 + $0x1498] sm:$0xff]
        %v864 = vld [vmem:[%s170 + $0x14a0] sm:$0xff]
        %v865 = vld [vmem:[%s170 + $0x14a8] sm:$0xff]
        %v866 = vld [vmem:[%s170 + $0x14b0] sm:$0xff]
        %v867 = vld [vmem:[%s170 + $0x14b8] sm:$0xff]
        %v868 = vld [vmem:[%s170 + $0x14c0] sm:$0xff]
        %v869 = vld [vmem:[%s170 + $0x14c8] sm:$0xff]
        %v870 = vld [vmem:[%s170 + $0x14d0] sm:$0xff]
        %v871 = vld [vmem:[%s170 + $0x14d8] sm:$0xff]
        %v872 = vld [vmem:[%s170 + $0x14e0] sm:$0xff]
        %v873 = vld [vmem:[%s170 + $0x14e8] sm:$0xff]
        %v874 = vld [vmem:[%s170 + $0x14f0] sm:$0xff]
        %v875 = vld [vmem:[%s170 + $0x14f8] sm:$0xff]
        %v876 = vld [vmem:[%s170 + $0x1500] sm:$0xff]
        %v877 = vld [vmem:[%s170 + $0x1508] sm:$0xff]
        %v878 = vld [vmem:[%s170 + $0x1510] sm:$0xff]
        %v879 = vld [vmem:[%s170 + $0x1518] sm:$0xff]
        %v880 = vld [vmem:[%s170 + $0x1520] sm:$0xff]
        %v881 = vld [vmem:[%s170 + $0x1528] sm:$0xff]
        %v882 = vld [vmem:[%s170 + $0x1530] sm:$0xff]
        %v883 = vld [vmem:[%s170 + $0x1538] sm:$0xff]
        %v884 = vld [vmem:[%s170 + $0x1540] sm:$0xff]
        %v885 = vld [vmem:[%s170 + $0x1548] sm:$0xff]
        %v886 = vld [vmem:[%s170 + $0x1550] sm:$0xff]
        %v887 = vld [vmem:[%s170 + $0x1558] sm:$0xff]
        %v888 = vld [vmem:[%s170 + $0x1560] sm:$0xff]
        %v889 = vld [vmem:[%s170 + $0x1568] sm:$0xff]
        %v890 = vld [vmem:[%s170 + $0x1570] sm:$0xff]
        %v891 = vld [vmem:[%s170 + $0x1578] sm:$0xff]
        %v892 = vld [vmem:[%s170 + $0x1580] sm:$0xff]
        %v893 = vld [vmem:[%s170 + $0x1588] sm:$0xff]
        %v894 = vld [vmem:[%s170 + $0x1590] sm:$0xff]
        %v895 = vld [vmem:[%s170 + $0x1598] sm:$0xff]
        %v896 = vld [vmem:[%s170 + $0x15a0] sm:$0xff]
        %v897 = vld [vmem:[%s170 + $0x15a8] sm:$0xff]
        %v898 = vld [vmem:[%s170 + $0x15b0] sm:$0xff]
        %v899 = vld [vmem:[%s170 + $0x15b8] sm:$0xff]
        %v900 = vld [vmem:[%s170 + $0x15c0] sm:$0xff]
        %v901 = vld [vmem:[%s170 + $0x15c8] sm:$0xff]
        %v902 = vld [vmem:[%s170 + $0x15d0] sm:$0xff]
        %v903 = vld [vmem:[%s170 + $0x15d8] sm:$0xff]
        %v904 = vld [vmem:[%s170 + $0x15e0] sm:$0xff]
        %v905 = vld [vmem:[%s170 + $0x15e8] sm:$0xff]
        %v906 = vld [vmem:[%s170 + $0x15f0] sm:$0xff]
        %v907 = vld [vmem:[%s170 + $0x15f8] sm:$0xff]
        %v908 = vld [vmem:[%s170 + $0x1600] sm:$0xff]
        %v909 = vld [vmem:[%s170 + $0x1608] sm:$0xff]
        %v910 = vld [vmem:[%s170 + $0x1610] sm:$0xff]
        %v911 = vld [vmem:[%s170 + $0x1618] sm:$0xff]
        %v912 = vld [vmem:[%s170 + $0x1620] sm:$0xff]
        %v913 = vld [vmem:[%s170 + $0x1628] sm:$0xff]
        %v914 = vld [vmem:[%s170 + $0x1630] sm:$0xff]
        %v915 = vld [vmem:[%s170 + $0x1638] sm:$0xff]
        %v916 = vld [vmem:[%s170 + $0x1640] sm:$0xff]
        %v917 = vld [vmem:[%s170 + $0x1648] sm:$0xff]
        %v918 = vld [vmem:[%s170 + $0x1650] sm:$0xff]
        %v919 = vld [vmem:[%s170 + $0x1658] sm:$0xff]
        %v920 = vld [vmem:[%s170 + $0x1660] sm:$0xff]
        %v921 = vld [vmem:[%s170 + $0x1668] sm:$0xff]
        %v922 = vld [vmem:[%s170 + $0x1670] sm:$0xff]
        %v923 = vld [vmem:[%s170 + $0x1678] sm:$0xff]
        %v924 = vld [vmem:[%s170 + $0x1680] sm:$0xff]
        %v925 = vld [vmem:[%s170 + $0x1688] sm:$0xff]
        %v926 = vld [vmem:[%s170 + $0x1690] sm:$0xff]
        %v927 = vld [vmem:[%s170 + $0x1698] sm:$0xff]
        %v928 = vld [vmem:[%s170 + $0x16a0] sm:$0xff]
        %v929 = vld [vmem:[%s170 + $0x16a8] sm:$0xff]
        %v930 = vld [vmem:[%s170 + $0x16b0] sm:$0xff]
        %v931 = vld [vmem:[%s170 + $0x16b8] sm:$0xff]
        %v932 = vld [vmem:[%s170 + $0x16c0] sm:$0xff]
        %v933 = vld [vmem:[%s170 + $0x16c8] sm:$0xff]
        %v934 = vld [vmem:[%s170 + $0x16d0] sm:$0xff]
        %v935 = vld [vmem:[%s170 + $0x16d8] sm:$0xff]
        %v936 = vld [vmem:[%s170 + $0x16e0] sm:$0xff]
        %v937 = vld [vmem:[%s170 + $0x16e8] sm:$0xff]
        %v938 = vld [vmem:[%s170 + $0x16f0] sm:$0xff]
        %v939 = vld [vmem:[%s170 + $0x16f8] sm:$0xff]
        %v940 = vld [vmem:[%s170 + $0x1700] sm:$0xff]
        %v941 = vld [vmem:[%s170 + $0x1708] sm:$0xff]
        %v942 = vld [vmem:[%s170 + $0x1710] sm:$0xff]
        %v943 = vld [vmem:[%s170 + $0x1718] sm:$0xff]
        %v944 = vld [vmem:[%s170 + $0x1720] sm:$0xff]
        %v945 = vld [vmem:[%s170 + $0x1728] sm:$0xff]
        %v946 = vld [vmem:[%s170 + $0x1730] sm:$0xff]
        %v947 = vld [vmem:[%s170 + $0x1738] sm:$0xff]
        %v948 = vld [vmem:[%s170 + $0x1740] sm:$0xff]
        %v949 = vld [vmem:[%s170 + $0x1748] sm:$0xff]
        %v950 = vld [vmem:[%s170 + $0x1750] sm:$0xff]
        %v951 = vld [vmem:[%s170 + $0x1758] sm:$0xff]
        %v952 = vld [vmem:[%s170 + $0x1760] sm:$0xff]
        %v953 = vld [vmem:[%s170 + $0x1768] sm:$0xff]
        %v954 = vld [vmem:[%s170 + $0x1770] sm:$0xff]
        %v955 = vld [vmem:[%s170 + $0x1778] sm:$0xff]
        %v956 = vld [vmem:[%s170 + $0x1780] sm:$0xff]
        %v957 = vld [vmem:[%s170 + $0x1788] sm:$0xff]
        %v958 = vld [vmem:[%s170 + $0x1790] sm:$0xff]
        %v959 = vld [vmem:[%s170 + $0x1798] sm:$0xff]
        %v960 = vld [vmem:[%s170 + $0x17a0] sm:$0xff]
        %v961 = vld [vmem:[%s170 + $0x17a8] sm:$0xff]
        %v962 = vld [vmem:[%s170 + $0x17b0] sm:$0xff]
        %v963 = vld [vmem:[%s170 + $0x17b8] sm:$0xff]
        %v964 = vld [vmem:[%s170 + $0x17c0] sm:$0xff]
        %v965 = vld [vmem:[%s170 + $0x17c8] sm:$0xff]
        %v966 = vld [vmem:[%s170 + $0x17d0] sm:$0xff]
        %v967 = vld [vmem:[%s170 + $0x17d8] sm:$0xff]
        %v968 = vld [vmem:[%s170 + $0x17e0] sm:$0xff]
        %v969 = vld [vmem:[%s170 + $0x17e8] sm:$0xff]
        %v970 = vld [vmem:[%s170 + $0x17f0] sm:$0xff]
        %v971 = vld [vmem:[%s170 + $0x17f8] sm:$0xff]
        %v972 = vld [vmem:[%s170 + $0x1800] sm:$0xff]
        %v973 = vld [vmem:[%s170 + $0x1808] sm:$0xff]
        %v974 = vld [vmem:[%s170 + $0x1810] sm:$0xff]
        %v975 = vld [vmem:[%s170 + $0x1818] sm:$0xff]
        %v976 = vld [vmem:[%s170 + $0x1820] sm:$0xff]
        %v977 = vld [vmem:[%s170 + $0x1828] sm:$0xff]
        %v978 = vld [vmem:[%s170 + $0x1830] sm:$0xff]
        %v979 = vld [vmem:[%s170 + $0x1838] sm:$0xff]
        %v980 = vld [vmem:[%s170 + $0x1840] sm:$0xff]
        %v981 = vld [vmem:[%s170 + $0x1848] sm:$0xff]
        %v982 = vld [vmem:[%s170 + $0x1850] sm:$0xff]
        %v983 = vld [vmem:[%s170 + $0x1858] sm:$0xff]
        %v984 = vld [vmem:[%s170 + $0x1860] sm:$0xff]
        %v985 = vld [vmem:[%s170 + $0x1868] sm:$0xff]
        %v986 = vld [vmem:[%s170 + $0x1870] sm:$0xff]
        %v987 = vld [vmem:[%s170 + $0x1878] sm:$0xff]
        %v988 = vld [vmem:[%s170 + $0x1880] sm:$0xff]
        %v989 = vld [vmem:[%s170 + $0x1888] sm:$0xff]
        %v990 = vld [vmem:[%s170 + $0x1890] sm:$0xff]
        %v991 = vld [vmem:[%s170 + $0x1898] sm:$0xff]
        %v992 = vld [vmem:[%s170 + $0x18a0] sm:$0xff]
        %v993 = vld [vmem:[%s170 + $0x18a8] sm:$0xff]
        %v994 = vld [vmem:[%s170 + $0x18b0] sm:$0xff]
        %v995 = vld [vmem:[%s170 + $0x18b8] sm:$0xff]
        %v996 = vld [vmem:[%s170 + $0x18c0] sm:$0xff]
        %v997 = vld [vmem:[%s170 + $0x18c8] sm:$0xff]
        %v998 = vld [vmem:[%s170 + $0x18d0] sm:$0xff]
        %v999 = vld [vmem:[%s170 + $0x18d8] sm:$0xff]
        %v1000 = vld [vmem:[%s170 + $0x18e0] sm:$0xff]
        %v1001 = vld [vmem:[%s170 + $0x18e8] sm:$0xff]
        %v1002 = vld [vmem:[%s170 + $0x18f0] sm:$0xff]
        %v1003 = vld [vmem:[%s170 + $0x18f8] sm:$0xff]
        %v1004 = vld [vmem:[%s170 + $0x1900] sm:$0xff]
        %v1005 = vld [vmem:[%s170 + $0x1908] sm:$0xff]
        %v1006 = vld [vmem:[%s170 + $0x1910] sm:$0xff]
        %v1007 = vld [vmem:[%s170 + $0x1918] sm:$0xff]
        %v1008 = vld [vmem:[%s170 + $0x1920] sm:$0xff]
        %v1009 = vld [vmem:[%s170 + $0x1928] sm:$0xff]
        %v1010 = vld [vmem:[%s170 + $0x1930] sm:$0xff]
        %v1011 = vld [vmem:[%s170 + $0x1938] sm:$0xff]
        %v1012 = vld [vmem:[%s170 + $0x1940] sm:$0xff]
        %v1013 = vld [vmem:[%s170 + $0x1948] sm:$0xff]
        %v1014 = vld [vmem:[%s170 + $0x1950] sm:$0xff]
        %v1015 = vld [vmem:[%s170 + $0x1958] sm:$0xff]
        %v1016 = vld [vmem:[%s170 + $0x1960] sm:$0xff]
        %v1017 = vld [vmem:[%s170 + $0x1968] sm:$0xff]
        %v1018 = vld [vmem:[%s170 + $0x1970] sm:$0xff]
        %v1019 = vld [vmem:[%s170 + $0x1978] sm:$0xff]
        %v1020 = vld [vmem:[%s170 + $0x1980] sm:$0xff]
        %v1021 = vld [vmem:[%s170 + $0x1988] sm:$0xff]
        %v1022 = vld [vmem:[%s170 + $0x1990] sm:$0xff]
        %v1023 = vld [vmem:[%s170 + $0x1998] sm:$0xff]
        %v1024 = vld [vmem:[%s170 + $0x19a0] sm:$0xff]
        %v1025 = vld [vmem:[%s170 + $0x19a8] sm:$0xff]
        %v1026 = vld [vmem:[%s170 + $0x19b0] sm:$0xff]
        %v1027 = vld [vmem:[%s170 + $0x19b8] sm:$0xff]
        %v1028 = vld [vmem:[%s170 + $0x19c0] sm:$0xff]
        %v1029 = vld [vmem:[%s170 + $0x19c8] sm:$0xff]
        %v1030 = vld [vmem:[%s170 + $0x19d0] sm:$0xff]
        %v1031 = vld [vmem:[%s170 + $0x19d8] sm:$0xff]
        %v1032 = vld [vmem:[%s170 + $0x19e0] sm:$0xff]
        %v1033 = vld [vmem:[%s170 + $0x19e8] sm:$0xff]
        %v1034 = vld [vmem:[%s170 + $0x19f0] sm:$0xff]
        %v1035 = vld [vmem:[%s170 + $0x19f8] sm:$0xff]
        %v1036 = vld [vmem:[%s170 + $0x1a00] sm:$0xff]
        %v1037 = vld [vmem:[%s170 + $0x1a08] sm:$0xff]
        %v1038 = vld [vmem:[%s170 + $0x1a10] sm:$0xff]
        %v1039 = vld [vmem:[%s170 + $0x1a18] sm:$0xff]
        %v1040 = vld [vmem:[%s170 + $0x1a20] sm:$0xff]
        %v1041 = vld [vmem:[%s170 + $0x1a28] sm:$0xff]
        %v1042 = vld [vmem:[%s170 + $0x1a30] sm:$0xff]
        %v1043 = vld [vmem:[%s170 + $0x1a38] sm:$0xff]
        %v1044 = vld [vmem:[%s170 + $0x1a40] sm:$0xff]
        %v1045 = vld [vmem:[%s170 + $0x1a48] sm:$0xff]
        %v1046 = vld [vmem:[%s170 + $0x1a50] sm:$0xff]
        %v1047 = vld [vmem:[%s170 + $0x1a58] sm:$0xff]
        %v1048 = vld [vmem:[%s170 + $0x1a60] sm:$0xff]
        %v1049 = vld [vmem:[%s170 + $0x1a68] sm:$0xff]
        %v1050 = vld [vmem:[%s170 + $0x1a70] sm:$0xff]
        %v1051 = vld [vmem:[%s170 + $0x1a78] sm:$0xff]
        %v1052 = vld [vmem:[%s170 + $0x1a80] sm:$0xff]
        %v1053 = vld [vmem:[%s170 + $0x1a88] sm:$0xff]
        %v1054 = vld [vmem:[%s170 + $0x1a90] sm:$0xff]
        %v1055 = vld [vmem:[%s170 + $0x1a98] sm:$0xff]
        %v1056 = vld [vmem:[%s170 + $0x1aa0] sm:$0xff]
        %v1057 = vld [vmem:[%s170 + $0x1aa8] sm:$0xff]
        %v1058 = vld [vmem:[%s170 + $0x1ab0] sm:$0xff]
        %v1059 = vld [vmem:[%s170 + $0x1ab8] sm:$0xff]
        %v1060 = vld [vmem:[%s170 + $0x1ac0] sm:$0xff]
        %v1061 = vld [vmem:[%s170 + $0x1ac8] sm:$0xff]
        %v1062 = vld [vmem:[%s170 + $0x1ad0] sm:$0xff]
        %v1063 = vld [vmem:[%s170 + $0x1ad8] sm:$0xff]
        %v1064 = vld [vmem:[%s170 + $0x1ae0] sm:$0xff]
        %v1065 = vld [vmem:[%s170 + $0x1ae8] sm:$0xff]
        %v1066 = vld [vmem:[%s170 + $0x1af0] sm:$0xff]
        %v1067 = vld [vmem:[%s170 + $0x1af8] sm:$0xff]
        %v1068 = vld [vmem:[%s170 + $0x1b00] sm:$0xff]
        %v1069 = vld [vmem:[%s170 + $0x1b08] sm:$0xff]
        %v1070 = vld [vmem:[%s170 + $0x1b10] sm:$0xff]
        %v1071 = vld [vmem:[%s170 + $0x1b18] sm:$0xff]
        %v1072 = vld [vmem:[%s170 + $0x1b20] sm:$0xff]
        %v1073 = vld [vmem:[%s170 + $0x1b28] sm:$0xff]
        %v1074 = vld [vmem:[%s170 + $0x1b30] sm:$0xff]
        %v1075 = vld [vmem:[%s170 + $0x1b38] sm:$0xff]
        %v1076 = vld [vmem:[%s170 + $0x1b40] sm:$0xff]
        %v1077 = vld [vmem:[%s170 + $0x1b48] sm:$0xff]
        %v1078 = vld [vmem:[%s170 + $0x1b50] sm:$0xff]
        %v1079 = vld [vmem:[%s170 + $0x1b58] sm:$0xff]
        %v1080 = vld [vmem:[%s170 + $0x1b60] sm:$0xff]
        %v1081 = vld [vmem:[%s170 + $0x1b68] sm:$0xff]
        %v1082 = vld [vmem:[%s170 + $0x1b70] sm:$0xff]
        %v1083 = vld [vmem:[%s170 + $0x1b78] sm:$0xff]
        %v1084 = vld [vmem:[%s170 + $0x1b80] sm:$0xff]
        %v1085 = vld [vmem:[%s170 + $0x1b88] sm:$0xff]
        %v1086 = vld [vmem:[%s170 + $0x1b90] sm:$0xff]
        %v1087 = vld [vmem:[%s170 + $0x1b98] sm:$0xff]
        %v1088 = vld [vmem:[%s170 + $0x1ba0] sm:$0xff]
        %v1089 = vld [vmem:[%s170 + $0x1ba8] sm:$0xff]
        %v1090 = vld [vmem:[%s170 + $0x1bb0] sm:$0xff]
        %v1091 = vld [vmem:[%s170 + $0x1bb8] sm:$0xff]
        %v1092 = vld [vmem:[%s170 + $0x1bc0] sm:$0xff]
        %v1093 = vld [vmem:[%s170 + $0x1bc8] sm:$0xff]
        %v1094 = vld [vmem:[%s170 + $0x1bd0] sm:$0xff]
        %v1095 = vld [vmem:[%s170 + $0x1bd8] sm:$0xff]
        %v1096 = vld [vmem:[%s170 + $0x1be0] sm:$0xff]
        %v1097 = vld [vmem:[%s170 + $0x1be8] sm:$0xff]
        %v1098 = vld [vmem:[%s170 + $0x1bf0] sm:$0xff]
        %v1099 = vld [vmem:[%s170 + $0x1bf8] sm:$0xff]
        %v1100 = vld [vmem:[%s170 + $0x1c00] sm:$0xff]
        %v1101 = vld [vmem:[%s170 + $0x1c08] sm:$0xff]
        %v1102 = vld [vmem:[%s170 + $0x1c10] sm:$0xff]
        %v1103 = vld [vmem:[%s170 + $0x1c18] sm:$0xff]
        %v1104 = vld [vmem:[%s170 + $0x1c20] sm:$0xff]
        %v1105 = vld [vmem:[%s170 + $0x1c28] sm:$0xff]
        %v1106 = vld [vmem:[%s170 + $0x1c30] sm:$0xff]
        %v1107 = vld [vmem:[%s170 + $0x1c38] sm:$0xff]
        %v1108 = vld [vmem:[%s170 + $0x1c40] sm:$0xff]
        %v1109 = vld [vmem:[%s170 + $0x1c48] sm:$0xff]
        %v1110 = vld [vmem:[%s170 + $0x1c50] sm:$0xff]
        %v1111 = vld [vmem:[%s170 + $0x1c58] sm:$0xff]
        %v1112 = vld [vmem:[%s170 + $0x1c60] sm:$0xff]
        %v1113 = vld [vmem:[%s170 + $0x1c68] sm:$0xff]
        %v1114 = vld [vmem:[%s170 + $0x1c70] sm:$0xff]
        %v1115 = vld [vmem:[%s170 + $0x1c78] sm:$0xff]
        %v1116 = vld [vmem:[%s170 + $0x1c80] sm:$0xff]
        %v1117 = vld [vmem:[%s170 + $0x1c88] sm:$0xff]
        %v1118 = vld [vmem:[%s170 + $0x1c90] sm:$0xff]
        %v1119 = vld [vmem:[%s170 + $0x1c98] sm:$0xff]
        %v1120 = vld [vmem:[%s170 + $0x1ca0] sm:$0xff]
        %v1121 = vld [vmem:[%s170 + $0x1ca8] sm:$0xff]
        %v1122 = vld [vmem:[%s170 + $0x1cb0] sm:$0xff]
        %v1123 = vld [vmem:[%s170 + $0x1cb8] sm:$0xff]
        %v1124 = vld [vmem:[%s170 + $0x1cc0] sm:$0xff]
        %v1125 = vld [vmem:[%s170 + $0x1cc8] sm:$0xff]
        %v1126 = vld [vmem:[%s170 + $0x1cd0] sm:$0xff]
        %v1127 = vld [vmem:[%s170 + $0x1cd8] sm:$0xff]
        %v1128 = vld [vmem:[%s170 + $0x1ce0] sm:$0xff]
        %v1129 = vld [vmem:[%s170 + $0x1ce8] sm:$0xff]
        %v1130 = vld [vmem:[%s170 + $0x1cf0] sm:$0xff]
        %v1131 = vld [vmem:[%s170 + $0x1cf8] sm:$0xff]
        %v1132 = vld [vmem:[%s170 + $0x1d00] sm:$0xff]
        %v1133 = vld [vmem:[%s170 + $0x1d08] sm:$0xff]
        %v1134 = vld [vmem:[%s170 + $0x1d10] sm:$0xff]
        %v1135 = vld [vmem:[%s170 + $0x1d18] sm:$0xff]
        %v1136 = vld [vmem:[%s170 + $0x1d20] sm:$0xff]
        %v1137 = vld [vmem:[%s170 + $0x1d28] sm:$0xff]
        %v1138 = vld [vmem:[%s170 + $0x1d30] sm:$0xff]
        %v1139 = vld [vmem:[%s170 + $0x1d38] sm:$0xff]
        %v1140 = vld [vmem:[%s170 + $0x1d40] sm:$0xff]
        %v1141 = vld [vmem:[%s170 + $0x1d48] sm:$0xff]
        %v1142 = vld [vmem:[%s170 + $0x1d50] sm:$0xff]
        %v1143 = vld [vmem:[%s170 + $0x1d58] sm:$0xff]
        %v1144 = vld [vmem:[%s170 + $0x1d60] sm:$0xff]
        %v1145 = vld [vmem:[%s170 + $0x1d68] sm:$0xff]
        %v1146 = vld [vmem:[%s170 + $0x1d70] sm:$0xff]
        %v1147 = vld [vmem:[%s170 + $0x1d78] sm:$0xff]
        %v1148 = vld [vmem:[%s170 + $0x1d80] sm:$0xff]
        %v1149 = vld [vmem:[%s170 + $0x1d88] sm:$0xff]
        %v1150 = vld [vmem:[%s170 + $0x1d90] sm:$0xff]
        %v1151 = vld [vmem:[%s170 + $0x1d98] sm:$0xff]
        %v1152 = vld [vmem:[%s170 + $0x1da0] sm:$0xff]
        %v1153 = vld [vmem:[%s170 + $0x1da8] sm:$0xff]
        %v1154 = vld [vmem:[%s170 + $0x1db0] sm:$0xff]
        %v1155 = vld [vmem:[%s170 + $0x1db8] sm:$0xff]
        %v1156 = vld [vmem:[%s170 + $0x1dc0] sm:$0xff]
        %v1157 = vld [vmem:[%s170 + $0x1dc8] sm:$0xff]
        %v1158 = vld [vmem:[%s170 + $0x1dd0] sm:$0xff]
        %v1159 = vld [vmem:[%s170 + $0x1dd8] sm:$0xff]
        %v1160 = vld [vmem:[%s170 + $0x1de0] sm:$0xff]
        %v1161 = vld [vmem:[%s170 + $0x1de8] sm:$0xff]
        %v1162 = vld [vmem:[%s170 + $0x1df0] sm:$0xff]
        %v1163 = vld [vmem:[%s170 + $0x1df8] sm:$0xff]
        %v1164 = vld [vmem:[%s170 + $0x1e00] sm:$0xff]
        %v1165 = vld [vmem:[%s170 + $0x1e08] sm:$0xff]
        %v1166 = vld [vmem:[%s170 + $0x1e10] sm:$0xff]
        %v1167 = vld [vmem:[%s170 + $0x1e18] sm:$0xff]
        %v1168 = vld [vmem:[%s170 + $0x1e20] sm:$0xff]
        %v1169 = vld [vmem:[%s170 + $0x1e28] sm:$0xff]
        %v1170 = vld [vmem:[%s170 + $0x1e30] sm:$0xff]
        %v1171 = vld [vmem:[%s170 + $0x1e38] sm:$0xff]
        %v1172 = vld [vmem:[%s170 + $0x1e40] sm:$0xff]
        %v1173 = vld [vmem:[%s170 + $0x1e48] sm:$0xff]
        %v1174 = vld [vmem:[%s170 + $0x1e50] sm:$0xff]
        %v1175 = vld [vmem:[%s170 + $0x1e58] sm:$0xff]
        %v1176 = vld [vmem:[%s170 + $0x1e60] sm:$0xff]
        %v1177 = vld [vmem:[%s170 + $0x1e68] sm:$0xff]
        %v1178 = vld [vmem:[%s170 + $0x1e70] sm:$0xff]
        %v1179 = vld [vmem:[%s170 + $0x1e78] sm:$0xff]
        %v1180 = vld [vmem:[%s170 + $0x1e80] sm:$0xff]
        %v1181 = vld [vmem:[%s170 + $0x1e88] sm:$0xff]
        %v1182 = vld [vmem:[%s170 + $0x1e90] sm:$0xff]
        %v1183 = vld [vmem:[%s170 + $0x1e98] sm:$0xff]
        %v1184 = vld [vmem:[%s170 + $0x1ea0] sm:$0xff]
        %v1185 = vld [vmem:[%s170 + $0x1ea8] sm:$0xff]
        %v1186 = vld [vmem:[%s170 + $0x1eb0] sm:$0xff]
        %v1187 = vld [vmem:[%s170 + $0x1eb8] sm:$0xff]
        %v1188 = vld [vmem:[%s170 + $0x1ec0] sm:$0xff]
        %v1189 = vld [vmem:[%s170 + $0x1ec8] sm:$0xff]
        %v1190 = vld [vmem:[%s170 + $0x1ed0] sm:$0xff]
        %v1191 = vld [vmem:[%s170 + $0x1ed8] sm:$0xff]
        %v1192 = vld [vmem:[%s170 + $0x1ee0] sm:$0xff]
        %v1193 = vld [vmem:[%s170 + $0x1ee8] sm:$0xff]
        %v1194 = vld [vmem:[%s170 + $0x1ef0] sm:$0xff]
        %v1195 = vld [vmem:[%s170 + $0x1ef8] sm:$0xff]
        %v1196 = vld [vmem:[%s170 + $0x1f00] sm:$0xff]
        %v1197 = vld [vmem:[%s170 + $0x1f08] sm:$0xff]
        %v1198 = vld [vmem:[%s170 + $0x1f10] sm:$0xff]
        %v1199 = vld [vmem:[%s170 + $0x1f18] sm:$0xff]
        %v1200 = vld [vmem:[%s170 + $0x1f20] sm:$0xff]
        %v1201 = vld [vmem:[%s170 + $0x1f28] sm:$0xff]
        %v1202 = vld [vmem:[%s170 + $0x1f30] sm:$0xff]
        %v1203 = vld [vmem:[%s170 + $0x1f38] sm:$0xff]
        %v1204 = vld [vmem:[%s170 + $0x1f40] sm:$0xff]
        %v1205 = vld [vmem:[%s170 + $0x1f48] sm:$0xff]
        %v1206 = vld [vmem:[%s170 + $0x1f50] sm:$0xff]
        %v1207 = vld [vmem:[%s170 + $0x1f58] sm:$0xff]
        %v1208 = vld [vmem:[%s170 + $0x1f60] sm:$0xff]
        %v1209 = vld [vmem:[%s170 + $0x1f68] sm:$0xff]
        %v1210 = vld [vmem:[%s170 + $0x1f70] sm:$0xff]
        %v1211 = vld [vmem:[%s170 + $0x1f78] sm:$0xff]
        %v1212 = vld [vmem:[%s170 + $0x1f80] sm:$0xff]
        %v1213 = vld [vmem:[%s170 + $0x1f88] sm:$0xff]
        %v1214 = vld [vmem:[%s170 + $0x1f90] sm:$0xff]
        %v1215 = vld [vmem:[%s170 + $0x1f98] sm:$0xff]
        %v1216 = vld [vmem:[%s170 + $0x1fa0] sm:$0xff]
        %v1217 = vld [vmem:[%s170 + $0x1fa8] sm:$0xff]
        %v1218 = vld [vmem:[%s170 + $0x1fb0] sm:$0xff]
        %v1219 = vld [vmem:[%s170 + $0x1fb8] sm:$0xff]
        %v1220 = vld [vmem:[%s170 + $0x1fc0] sm:$0xff]
        %v1221 = vld [vmem:[%s170 + $0x1fc8] sm:$0xff]
        %v1222 = vld [vmem:[%s170 + $0x1fd0] sm:$0xff]
        %v1223 = vld [vmem:[%s170 + $0x1fd8] sm:$0xff]
        %v1224 = vld [vmem:[%s170 + $0x1fe0] sm:$0xff]
        %v1225 = vld [vmem:[%s170 + $0x1fe8] sm:$0xff]
        %v1226 = vld [vmem:[%s170 + $0x1ff0] sm:$0xff]
        %v1227 = vld [vmem:[%s170 + $0x1ff8] sm:$0xff]
        %v1228 = vld [vmem:[%s170 + $0x2000] sm:$0xff]
        %v1229 = vld [vmem:[%s170 + $0x2008] sm:$0xff]
        %v1230 = vld [vmem:[%s170 + $0x2010] sm:$0xff]
        %v1231 = vld [vmem:[%s170 + $0x2018] sm:$0xff]
        %v1232 = vld [vmem:[%s170 + $0x2020] sm:$0xff]
        %v1233 = vld [vmem:[%s170 + $0x2028] sm:$0xff]
        %v1234 = vld [vmem:[%s170 + $0x2030] sm:$0xff]
        %v1235 = vld [vmem:[%s170 + $0x2038] sm:$0xff]
        %v1236 = vld [vmem:[%s170 + $0x2040] sm:$0xff]
        %v1237 = vld [vmem:[%s170 + $0x2048] sm:$0xff]
        %v1238 = vld [vmem:[%s170 + $0x2050] sm:$0xff]
        %v1239 = vld [vmem:[%s170 + $0x2058] sm:$0xff]
        %v1240 = vld [vmem:[%s170 + $0x2060] sm:$0xff]
        %v1241 = vld [vmem:[%s170 + $0x2068] sm:$0xff]
        %v1242 = vld [vmem:[%s170 + $0x2070] sm:$0xff]
        %v1243 = vld [vmem:[%s170 + $0x2078] sm:$0xff]
        %v1244 = vld [vmem:[%s170 + $0x2080] sm:$0xff]
        %v1245 = vld [vmem:[%s170 + $0x2088] sm:$0xff]
        %v1246 = vld [vmem:[%s170 + $0x2090] sm:$0xff]
        %v1247 = vld [vmem:[%s170 + $0x2098] sm:$0xff]
        %v1248 = vld [vmem:[%s170 + $0x20a0] sm:$0xff]
        %v1249 = vld [vmem:[%s170 + $0x20a8] sm:$0xff]
        %v1250 = vld [vmem:[%s170 + $0x20b0] sm:$0xff]
        %v1251 = vld [vmem:[%s170 + $0x20b8] sm:$0xff]
        %v1252 = vld [vmem:[%s170 + $0x20c0] sm:$0xff]
        %v1253 = vld [vmem:[%s170 + $0x20c8] sm:$0xff]
        %v1254 = vld [vmem:[%s170 + $0x20d0] sm:$0xff]
        %v1255 = vld [vmem:[%s170 + $0x20d8] sm:$0xff]
        %v1256 = vld [vmem:[%s170 + $0x20e0] sm:$0xff]
        %v1257 = vld [vmem:[%s170 + $0x20e8] sm:$0xff]
        %v1258 = vld [vmem:[%s170 + $0x20f0] sm:$0xff]
        %v1259 = vld [vmem:[%s170 + $0x20f8] sm:$0xff]
        %v1260 = vld [vmem:[%s170 + $0x2100] sm:$0xff]
        %v1261 = vld [vmem:[%s170 + $0x2108] sm:$0xff]
        %v1262 = vld [vmem:[%s170 + $0x2110] sm:$0xff]
        %v1263 = vld [vmem:[%s170 + $0x2118] sm:$0xff]
        %v1264 = vld [vmem:[%s170 + $0x2120] sm:$0xff]
        %v1265 = vld [vmem:[%s170 + $0x2128] sm:$0xff]
        %v1266 = vld [vmem:[%s170 + $0x2130] sm:$0xff]
        %v1267 = vld [vmem:[%s170 + $0x2138] sm:$0xff]
        %v1268 = vld [vmem:[%s170 + $0x2140] sm:$0xff]
        %v1269 = vld [vmem:[%s170 + $0x2148] sm:$0xff]
        %v1270 = vld [vmem:[%s170 + $0x2150] sm:$0xff]
        %v1271 = vld [vmem:[%s170 + $0x2158] sm:$0xff]
        %v1272 = vld [vmem:[%s170 + $0x2160] sm:$0xff]
        %v1273 = vld [vmem:[%s170 + $0x2168] sm:$0xff]
        %v1274 = vld [vmem:[%s170 + $0x2170] sm:$0xff]
        %v1275 = vld [vmem:[%s170 + $0x2178] sm:$0xff]
        %v1276 = vld [vmem:[%s170 + $0x2180] sm:$0xff]
        %v1277 = vld [vmem:[%s170 + $0x2188] sm:$0xff]
        %v1278 = vld [vmem:[%s170 + $0x2190] sm:$0xff]
        %v1279 = vld [vmem:[%s170 + $0x2198] sm:$0xff]
        %v1280 = vld [vmem:[%s170 + $0x21a0] sm:$0xff]
        %v1281 = vld [vmem:[%s170 + $0x21a8] sm:$0xff]
        %v1282 = vld [vmem:[%s170 + $0x21b0] sm:$0xff]
        %v1283 = vld [vmem:[%s170 + $0x21b8] sm:$0xff]
        %v1284 = vld [vmem:[%s170 + $0x21c0] sm:$0xff]
        %v1285 = vld [vmem:[%s170 + $0x21c8] sm:$0xff]
        %v1286 = vld [vmem:[%s170 + $0x21d0] sm:$0xff]
        %v1287 = vld [vmem:[%s170 + $0x21d8] sm:$0xff]
        %v1288 = vld [vmem:[%s170 + $0x21e0] sm:$0xff]
        %v1289 = vld [vmem:[%s170 + $0x21e8] sm:$0xff]
        %v1290 = vld [vmem:[%s170 + $0x21f0] sm:$0xff]
        %v1291 = vld [vmem:[%s170 + $0x21f8] sm:$0xff]
        %v1292 = vld [vmem:[%s170 + $0x2200] sm:$0xff]
        %v1293 = vld [vmem:[%s170 + $0x2208] sm:$0xff]
        %v1294 = vld [vmem:[%s170 + $0x2210] sm:$0xff]
        %v1295 = vld [vmem:[%s170 + $0x2218] sm:$0xff]
        %v1296 = vld [vmem:[%s170 + $0x2220] sm:$0xff]
        %v1297 = vld [vmem:[%s170 + $0x2228] sm:$0xff]
        %v1298 = vld [vmem:[%s170 + $0x2230] sm:$0xff]
        %v1299 = vld [vmem:[%s170 + $0x2238] sm:$0xff]
        %v1300 = vld [vmem:[%s170 + $0x2240] sm:$0xff]
        %v1301 = vld [vmem:[%s170 + $0x2248] sm:$0xff]
        %v1302 = vld [vmem:[%s170 + $0x2250] sm:$0xff]
        %v1303 = vld [vmem:[%s170 + $0x2258] sm:$0xff]
        %v1304 = vld [vmem:[%s170 + $0x2260] sm:$0xff]
        %v1305 = vld [vmem:[%s170 + $0x2268] sm:$0xff]
        %v1306 = vld [vmem:[%s170 + $0x2270] sm:$0xff]
        %v1307 = vld [vmem:[%s170 + $0x2278] sm:$0xff]
        %v1308 = vld [vmem:[%s170 + $0x2280] sm:$0xff]
        %v1309 = vld [vmem:[%s170 + $0x2288] sm:$0xff]
        %v1310 = vld [vmem:[%s170 + $0x2290] sm:$0xff]
        %v1311 = vld [vmem:[%s170 + $0x2298] sm:$0xff]
        %v1312 = vld [vmem:[%s170 + $0x22a0] sm:$0xff]
        %v1313 = vld [vmem:[%s170 + $0x22a8] sm:$0xff]
        %v1314 = vld [vmem:[%s170 + $0x22b0] sm:$0xff]
        %v1315 = vld [vmem:[%s170 + $0x22b8] sm:$0xff]
        %v1316 = vld [vmem:[%s170 + $0x22c0] sm:$0xff]
        %v1317 = vld [vmem:[%s170 + $0x22c8] sm:$0xff]
        %v1318 = vld [vmem:[%s170 + $0x22d0] sm:$0xff]
        %v1319 = vld [vmem:[%s170 + $0x22d8] sm:$0xff]
        %v1320 = vld [vmem:[%s170 + $0x22e0] sm:$0xff]
        %v1321 = vld [vmem:[%s170 + $0x22e8] sm:$0xff]
        %v1322 = vld [vmem:[%s170 + $0x22f0] sm:$0xff]
        %v1323 = vld [vmem:[%s170 + $0x22f8] sm:$0xff]
        %v1324 = vld [vmem:[%s170 + $0x2300] sm:$0xff]
        %v1325 = vld [vmem:[%s170 + $0x2308] sm:$0xff]
        %v1326 = vld [vmem:[%s170 + $0x2310] sm:$0xff]
        %v1327 = vld [vmem:[%s170 + $0x2318] sm:$0xff]
        %v1328 = vld [vmem:[%s170 + $0x2320] sm:$0xff]
        %v1329 = vld [vmem:[%s170 + $0x2328] sm:$0xff]
        %v1330 = vld [vmem:[%s170 + $0x2330] sm:$0xff]
        %v1331 = vld [vmem:[%s170 + $0x2338] sm:$0xff]
        %v1332 = vld [vmem:[%s170 + $0x2340] sm:$0xff]
        %v1333 = vld [vmem:[%s170 + $0x2348] sm:$0xff]
        %v1334 = vld [vmem:[%s170 + $0x2350] sm:$0xff]
        %v1335 = vld [vmem:[%s170 + $0x2358] sm:$0xff]
        %v1336 = vld [vmem:[%s170 + $0x2360] sm:$0xff]
        %v1337 = vld [vmem:[%s170 + $0x2368] sm:$0xff]
        %v1338 = vld [vmem:[%s170 + $0x2370] sm:$0xff]
        %v1339 = vld [vmem:[%s170 + $0x2378] sm:$0xff]
        %v1340 = vld [vmem:[%s170 + $0x2380] sm:$0xff]
        %v1341 = vld [vmem:[%s170 + $0x2388] sm:$0xff]
        %v1342 = vld [vmem:[%s170 + $0x2390] sm:$0xff]
        %v1343 = vld [vmem:[%s170 + $0x2398] sm:$0xff]
        %v1344 = vld [vmem:[%s170 + $0x23a0] sm:$0xff]
        %v1345 = vld [vmem:[%s170 + $0x23a8] sm:$0xff]
        %v1346 = vld [vmem:[%s170 + $0x23b0] sm:$0xff]
        %v1347 = vld [vmem:[%s170 + $0x23b8] sm:$0xff]
        %v1348 = vld [vmem:[%s170 + $0x23c0] sm:$0xff]
        %v1349 = vld [vmem:[%s170 + $0x23c8] sm:$0xff]
        %v1350 = vld [vmem:[%s170 + $0x23d0] sm:$0xff]
        %v1351 = vld [vmem:[%s170 + $0x23d8] sm:$0xff]
        %v1352 = vld [vmem:[%s170 + $0x23e0] sm:$0xff]
        %v1353 = vld [vmem:[%s170 + $0x23e8] sm:$0xff]
        %v1354 = vld [vmem:[%s170 + $0x23f0] sm:$0xff]
        %v1355 = vld [vmem:[%s170 + $0x23f8] sm:$0xff]
        %v1356 = vld [vmem:[%s170 + $0x2400] sm:$0xff]
        %v1357 = vld [vmem:[%s170 + $0x2408] sm:$0xff]
        %v1358 = vld [vmem:[%s170 + $0x2410] sm:$0xff]
        %v1359 = vld [vmem:[%s170 + $0x2418] sm:$0xff]
        %v1360 = vld [vmem:[%s170 + $0x2420] sm:$0xff]
        %v1361 = vld [vmem:[%s170 + $0x2428] sm:$0xff]
        %v1362 = vld [vmem:[%s170 + $0x2430] sm:$0xff]
        %v1363 = vld [vmem:[%s170 + $0x2438] sm:$0xff]
        %v1364 = vld [vmem:[%s170 + $0x2440] sm:$0xff]
        %v1365 = vld [vmem:[%s170 + $0x2448] sm:$0xff]
        %v1366 = vld [vmem:[%s170 + $0x2450] sm:$0xff]
        %v1367 = vld [vmem:[%s170 + $0x2458] sm:$0xff]
        %v1368 = vld [vmem:[%s170 + $0x2460] sm:$0xff]
        %v1369 = vld [vmem:[%s170 + $0x2468] sm:$0xff]
        %v1370 = vld [vmem:[%s170 + $0x2470] sm:$0xff]
        %v1371 = vld [vmem:[%s170 + $0x2478] sm:$0xff]
        %v1372 = vld [vmem:[%s170 + $0x2480] sm:$0xff]
        %v1373 = vld [vmem:[%s170 + $0x2488] sm:$0xff]
        %v1374 = vld [vmem:[%s170 + $0x2490] sm:$0xff]
        %v1375 = vld [vmem:[%s170 + $0x2498] sm:$0xff]
        %v1376 = vld [vmem:[%s170 + $0x24a0] sm:$0xff]
        %v1377 = vld [vmem:[%s170 + $0x24a8] sm:$0xff]
        %v1378 = vld [vmem:[%s170 + $0x24b0] sm:$0xff]
        %v1379 = vld [vmem:[%s170 + $0x24b8] sm:$0xff]
        %v1380 = vld [vmem:[%s170 + $0x24c0] sm:$0xff]
        %v1381 = vld [vmem:[%s170 + $0x24c8] sm:$0xff]
        %v1382 = vld [vmem:[%s170 + $0x24d0] sm:$0xff]
        %v1383 = vld [vmem:[%s170 + $0x24d8] sm:$0xff]
        %v1384 = vld [vmem:[%s170 + $0x24e0] sm:$0xff]
        %v1385 = vld [vmem:[%s170 + $0x24e8] sm:$0xff]
        %v1386 = vld [vmem:[%s170 + $0x24f0] sm:$0xff]
        %v1387 = vld [vmem:[%s170 + $0x24f8] sm:$0xff]
        %v1388 = vld [vmem:[%s170 + $0x2500] sm:$0xff]
        %v1389 = vld [vmem:[%s170 + $0x2508] sm:$0xff]
        %v1390 = vld [vmem:[%s170 + $0x2510] sm:$0xff]
        %v1391 = vld [vmem:[%s170 + $0x2518] sm:$0xff]
        %v1392 = vld [vmem:[%s170 + $0x2520] sm:$0xff]
        %v1393 = vld [vmem:[%s170 + $0x2528] sm:$0xff]
        %v1394 = vld [vmem:[%s170 + $0x2530] sm:$0xff]
        %v1395 = vld [vmem:[%s170 + $0x2538] sm:$0xff]
        %v1396 = vld [vmem:[%s170 + $0x2540] sm:$0xff]
        %v1397 = vld [vmem:[%s170 + $0x2548] sm:$0xff]
        %v1398 = vld [vmem:[%s170 + $0x2550] sm:$0xff]
        %v1399 = vld [vmem:[%s170 + $0x2558] sm:$0xff]
        %v1400 = vld [vmem:[%s170 + $0x2560] sm:$0xff]
        %v1401 = vld [vmem:[%s170 + $0x2568] sm:$0xff]
        %v1402 = vld [vmem:[%s170 + $0x2570] sm:$0xff]
        %v1403 = vld [vmem:[%s170 + $0x2578] sm:$0xff]
        %v1404 = vld [vmem:[%s170 + $0x2580] sm:$0xff]
        %v1405 = vld [vmem:[%s170 + $0x2588] sm:$0xff]
        %v1406 = vld [vmem:[%s170 + $0x2590] sm:$0xff]
        %v1407 = vld [vmem:[%s170 + $0x2598] sm:$0xff]
        %v1408 = vld [vmem:[%s170 + $0x25a0] sm:$0xff]
        %v1409 = vld [vmem:[%s170 + $0x25a8] sm:$0xff]
        %v1410 = vld [vmem:[%s170 + $0x25b0] sm:$0xff]
        %v1411 = vld [vmem:[%s170 + $0x25b8] sm:$0xff]
        %v1412 = vld [vmem:[%s170 + $0x25c0] sm:$0xff]
        %v1413 = vld [vmem:[%s170 + $0x25c8] sm:$0xff]
        %v1414 = vld [vmem:[%s170 + $0x25d0] sm:$0xff]
        %v1415 = vld [vmem:[%s170 + $0x25d8] sm:$0xff]
        %v1416 = vld [vmem:[%s170 + $0x25e0] sm:$0xff]
        %v1417 = vld [vmem:[%s170 + $0x25e8] sm:$0xff]
        %v1418 = vld [vmem:[%s170 + $0x25f0] sm:$0xff]
        %v1419 = vld [vmem:[%s170 + $0x25f8] sm:$0xff]
        %v1420 = vld [vmem:[%s170 + $0x2600] sm:$0xff]
        %v1421 = vld [vmem:[%s170 + $0x2608] sm:$0xff]
        %v1422 = vld [vmem:[%s170 + $0x2610] sm:$0xff]
        %v1423 = vld [vmem:[%s170 + $0x2618] sm:$0xff]
        %v1424 = vld [vmem:[%s170 + $0x2620] sm:$0xff]
        %v1425 = vld [vmem:[%s170 + $0x2628] sm:$0xff]
        %v1426 = vld [vmem:[%s170 + $0x2630] sm:$0xff]
        %v1427 = vld [vmem:[%s170 + $0x2638] sm:$0xff]
        %v1428 = vld [vmem:[%s170 + $0x2640] sm:$0xff]
        %v1429 = vld [vmem:[%s170 + $0x2648] sm:$0xff]
        %v1430 = vld [vmem:[%s170 + $0x2650] sm:$0xff]
        %v1431 = vld [vmem:[%s170 + $0x2658] sm:$0xff]
        %v1432 = vld [vmem:[%s170 + $0x2660] sm:$0xff]
        %v1433 = vld [vmem:[%s170 + $0x2668] sm:$0xff]
        %v1434 = vld [vmem:[%s170 + $0x2670] sm:$0xff]
        %v1435 = vld [vmem:[%s170 + $0x2678] sm:$0xff]
        %v1436 = vld [vmem:[%s170 + $0x2680] sm:$0xff]
        %v1437 = vld [vmem:[%s170 + $0x2688] sm:$0xff]
        %v1438 = vld [vmem:[%s170 + $0x2690] sm:$0xff]
        %v1439 = vld [vmem:[%s170 + $0x2698] sm:$0xff]
        %v1440 = vld [vmem:[%s170 + $0x26a0] sm:$0xff]
        %v1441 = vld [vmem:[%s170 + $0x26a8] sm:$0xff]
        %v1442 = vld [vmem:[%s170 + $0x26b0] sm:$0xff]
        %v1443 = vld [vmem:[%s170 + $0x26b8] sm:$0xff]
        %v1444 = vld [vmem:[%s170 + $0x26c0] sm:$0xff]
        %v1445 = vld [vmem:[%s170 + $0x26c8] sm:$0xff]
        %v1446 = vld [vmem:[%s170 + $0x26d0] sm:$0xff]
        %v1447 = vld [vmem:[%s170 + $0x26d8] sm:$0xff]
        %v1448 = vld [vmem:[%s170 + $0x26e0] sm:$0xff]
        %v1449 = vld [vmem:[%s170 + $0x26e8] sm:$0xff]
        %v1450 = vld [vmem:[%s170 + $0x26f0] sm:$0xff]
        %v1451 = vld [vmem:[%s170 + $0x26f8] sm:$0xff]
        %v1452 = vld [vmem:[%s170 + $0x2700] sm:$0xff]
        %v1453 = vld [vmem:[%s170 + $0x2708] sm:$0xff]
        %v1454 = vld [vmem:[%s170 + $0x2710] sm:$0xff]
        %v1455 = vld [vmem:[%s170 + $0x2718] sm:$0xff]
        %v1456 = vld [vmem:[%s170 + $0x2720] sm:$0xff]
        %v1457 = vld [vmem:[%s170 + $0x2728] sm:$0xff]
        %v1458 = vld [vmem:[%s170 + $0x2730] sm:$0xff]
        %v1459 = vld [vmem:[%s170 + $0x2738] sm:$0xff]
        %v1460 = vld [vmem:[%s170 + $0x2740] sm:$0xff]
        %v1461 = vld [vmem:[%s170 + $0x2748] sm:$0xff]
        %v1462 = vld [vmem:[%s170 + $0x2750] sm:$0xff]
        %v1463 = vld [vmem:[%s170 + $0x2758] sm:$0xff]
        %v1464 = vld [vmem:[%s170 + $0x2760] sm:$0xff]
        %v1465 = vld [vmem:[%s170 + $0x2768] sm:$0xff]
        %v1466 = vld [vmem:[%s170 + $0x2770] sm:$0xff]
        %v1467 = vld [vmem:[%s170 + $0x2778] sm:$0xff]
        %v1468 = vld [vmem:[%s170 + $0x2780] sm:$0xff]
        %v1469 = vld [vmem:[%s170 + $0x2788] sm:$0xff]
        %v1470 = vld [vmem:[%s170 + $0x2790] sm:$0xff]
        %v1471 = vld [vmem:[%s170 + $0x2798] sm:$0xff]
        %v1472 = vld [vmem:[%s170 + $0x27a0] sm:$0xff]
        %v1473 = vld [vmem:[%s170 + $0x27a8] sm:$0xff]
        %v1474 = vld [vmem:[%s170 + $0x27b0] sm:$0xff]
        %v1475 = vld [vmem:[%s170 + $0x27b8] sm:$0xff]
        %v1476 = vld [vmem:[%s170 + $0x27c0] sm:$0xff]
        %v1477 = vld [vmem:[%s170 + $0x27c8] sm:$0xff]
        %v1478 = vld [vmem:[%s170 + $0x27d0] sm:$0xff]
        %v1479 = vld [vmem:[%s170 + $0x27d8] sm:$0xff]
        %v1480 = vld [vmem:[%s170 + $0x27e0] sm:$0xff]
        %v1481 = vld [vmem:[%s170 + $0x27e8] sm:$0xff]
        %v1482 = vld [vmem:[%s170 + $0x27f0] sm:$0xff]
        %v1483 = vld [vmem:[%s170 + $0x27f8] sm:$0xff]
        %v1484 = vld [vmem:[%s200] sm:$0xff]
        %v1485 = vld [vmem:[%s200 + $0x8] sm:$0xff]
        %v1486 = vld [vmem:[%s200 + $0x10] sm:$0xf]
        %v1490 = vlaneseq
        %v1491 = vshrl.u32 %v1490, 7
        %v1492 = vsub.s32 0, %v1491
        %v1493 = vrot.slane %v1484, %v1492
        %v1494 = vlaneseq
        %v1495 = vshrl.u32 %v1494, 7
        %v1496 = vsub.s32 1, %v1495
        %v1497 = vrot.slane %v1484, %v1496
        %v1498 = vlaneseq
        %v1499 = vshrl.u32 %v1498, 7
        %v1500 = vsub.s32 2, %v1499
        %v1501 = vrot.slane %v1484, %v1500
        %v1502 = vlaneseq
        %v1503 = vshrl.u32 %v1502, 7
        %v1504 = vsub.s32 3, %v1503
        %v1505 = vrot.slane %v1484, %v1504
        %v1506 = vlaneseq
        %v1507 = vshrl.u32 %v1506, 7
        %v1508 = vsub.s32 4, %v1507
        %v1509 = vrot.slane %v1484, %v1508
        %v1510 = vlaneseq
        %v1511 = vshrl.u32 %v1510, 7
        %v1512 = vsub.s32 5, %v1511
        %v1513 = vrot.slane %v1484, %v1512
        %v1514 = vlaneseq
        %v1515 = vshrl.u32 %v1514, 7
        %v1516 = vsub.s32 6, %v1515
        %v1517 = vrot.slane %v1484, %v1516
        %v1518 = vlaneseq
        %v1519 = vshrl.u32 %v1518, 7
        %v1520 = vsub.s32 7, %v1519
        %v1521 = vrot.slane %v1484, %v1520
        %v1522 = vlaneseq
        %v1523 = vshrl.u32 %v1522, 7
        %v1524 = vsub.s32 0, %v1523
        %v1525 = vrot.slane %v1485, %v1524
        %v1526 = vlaneseq
        %v1527 = vshrl.u32 %v1526, 7
        %v1528 = vsub.s32 1, %v1527
        %v1529 = vrot.slane %v1485, %v1528
        %v1530 = vlaneseq
        %v1531 = vshrl.u32 %v1530, 7
        %v1532 = vsub.s32 2, %v1531
        %v1533 = vrot.slane %v1485, %v1532
        %v1534 = vlaneseq
        %v1535 = vshrl.u32 %v1534, 7
        %v1536 = vsub.s32 3, %v1535
        %v1537 = vrot.slane %v1485, %v1536
        %v1538 = vlaneseq
        %v1539 = vshrl.u32 %v1538, 7
        %v1540 = vsub.s32 4, %v1539
        %v1541 = vrot.slane %v1485, %v1540
        %v1542 = vlaneseq
        %v1543 = vshrl.u32 %v1542, 7
        %v1544 = vsub.s32 5, %v1543
        %v1545 = vrot.slane %v1485, %v1544
        %v1546 = vlaneseq
        %v1547 = vshrl.u32 %v1546, 7
        %v1548 = vsub.s32 6, %v1547
        %v1549 = vrot.slane %v1485, %v1548
        %v1550 = vlaneseq
        %v1551 = vshrl.u32 %v1550, 7
        %v1552 = vsub.s32 7, %v1551
        %v1553 = vrot.slane %v1485, %v1552
        %v1554 = vlaneseq
        %v1555 = vshrl.u32 %v1554, 7
        %v1556 = vsub.s32 0, %v1555
        %v1557 = vrot.slane %v1486, %v1556
        %v1558 = vlaneseq
        %v1559 = vshrl.u32 %v1558, 7
        %v1560 = vsub.s32 1, %v1559
        %v1561 = vrot.slane %v1486, %v1560
        %v1562 = vlaneseq
        %v1563 = vshrl.u32 %v1562, 7
        %v1564 = vsub.s32 2, %v1563
        %v1565 = vrot.slane %v1486, %v1564
        %v1566 = vlaneseq
        %v1567 = vshrl.u32 %v1566, 7
        %v1568 = vsub.s32 3, %v1567
        %v1569 = vrot.slane %v1486, %v1568
        %v1590 = vsub.f32 %v204, %v1493
        %v1591 = vsub.f32 %v205, %v1497
        %v1592 = vsub.f32 %v206, %v1501
        %v1593 = vsub.f32 %v207, %v1505
        %v1594 = vsub.f32 %v208, %v1509
        %v1595 = vsub.f32 %v209, %v1513
        %v1596 = vsub.f32 %v210, %v1517
        %v1597 = vsub.f32 %v211, %v1521
        %v1598 = vsub.f32 %v212, %v1525
        %v1599 = vsub.f32 %v213, %v1529
        %v1600 = vsub.f32 %v214, %v1533
        %v1601 = vsub.f32 %v215, %v1537
        %v1602 = vsub.f32 %v216, %v1541
        %v1603 = vsub.f32 %v217, %v1545
        %v1604 = vsub.f32 %v218, %v1549
        %v1605 = vsub.f32 %v219, %v1553
        %v1606 = vsub.f32 %v220, %v1557
        %v1607 = vsub.f32 %v221, %v1561
        %v1608 = vsub.f32 %v222, %v1565
        %v1609 = vsub.f32 %v223, %v1569
        %v1610 = vsub.f32 %v224, %v1493
        %v1611 = vsub.f32 %v225, %v1497
        %v1612 = vsub.f32 %v226, %v1501
        %v1613 = vsub.f32 %v227, %v1505
        %v1614 = vsub.f32 %v228, %v1509
        %v1615 = vsub.f32 %v229, %v1513
        %v1616 = vsub.f32 %v230, %v1517
        %v1617 = vsub.f32 %v231, %v1521
        %v1618 = vsub.f32 %v232, %v1525
        %v1619 = vsub.f32 %v233, %v1529
        %v1620 = vsub.f32 %v234, %v1533
        %v1621 = vsub.f32 %v235, %v1537
        %v1622 = vsub.f32 %v236, %v1541
        %v1623 = vsub.f32 %v237, %v1545
        %v1624 = vsub.f32 %v238, %v1549
        %v1625 = vsub.f32 %v239, %v1553
        %v1626 = vsub.f32 %v240, %v1557
        %v1627 = vsub.f32 %v241, %v1561
        %v1628 = vsub.f32 %v242, %v1565
        %v1629 = vsub.f32 %v243, %v1569
        %v1630 = vsub.f32 %v244, %v1493
        %v1631 = vsub.f32 %v245, %v1497
        %v1632 = vsub.f32 %v246, %v1501
        %v1633 = vsub.f32 %v247, %v1505
        %v1634 = vsub.f32 %v248, %v1509
        %v1635 = vsub.f32 %v249, %v1513
        %v1636 = vsub.f32 %v250, %v1517
        %v1637 = vsub.f32 %v251, %v1521
        %v1638 = vsub.f32 %v252, %v1525
        %v1639 = vsub.f32 %v253, %v1529
        %v1640 = vsub.f32 %v254, %v1533
        %v1641 = vsub.f32 %v255, %v1537
        %v1642 = vsub.f32 %v256, %v1541
        %v1643 = vsub.f32 %v257, %v1545
        %v1644 = vsub.f32 %v258, %v1549
        %v1645 = vsub.f32 %v259, %v1553
        %v1646 = vsub.f32 %v260, %v1557
        %v1647 = vsub.f32 %v261, %v1561
        %v1648 = vsub.f32 %v262, %v1565
        %v1649 = vsub.f32 %v263, %v1569
        %v1650 = vsub.f32 %v264, %v1493
        %v1651 = vsub.f32 %v265, %v1497
        %v1652 = vsub.f32 %v266, %v1501
        %v1653 = vsub.f32 %v267, %v1505
        %v1654 = vsub.f32 %v268, %v1509
        %v1655 = vsub.f32 %v269, %v1513
        %v1656 = vsub.f32 %v270, %v1517
        %v1657 = vsub.f32 %v271, %v1521
        %v1658 = vsub.f32 %v272, %v1525
        %v1659 = vsub.f32 %v273, %v1529
        %v1660 = vsub.f32 %v274, %v1533
        %v1661 = vsub.f32 %v275, %v1537
        %v1662 = vsub.f32 %v276, %v1541
        %v1663 = vsub.f32 %v277, %v1545
        %v1664 = vsub.f32 %v278, %v1549
        %v1665 = vsub.f32 %v279, %v1553
        %v1666 = vsub.f32 %v280, %v1557
        %v1667 = vsub.f32 %v281, %v1561
        %v1668 = vsub.f32 %v282, %v1565
        %v1669 = vsub.f32 %v283, %v1569
        %v1670 = vsub.f32 %v284, %v1493
        %v1671 = vsub.f32 %v285, %v1497
        %v1672 = vsub.f32 %v286, %v1501
        %v1673 = vsub.f32 %v287, %v1505
        %v1674 = vsub.f32 %v288, %v1509
        %v1675 = vsub.f32 %v289, %v1513
        %v1676 = vsub.f32 %v290, %v1517
        %v1677 = vsub.f32 %v291, %v1521
        %v1678 = vsub.f32 %v292, %v1525
        %v1679 = vsub.f32 %v293, %v1529
        %v1680 = vsub.f32 %v294, %v1533
        %v1681 = vsub.f32 %v295, %v1537
        %v1682 = vsub.f32 %v296, %v1541
        %v1683 = vsub.f32 %v297, %v1545
        %v1684 = vsub.f32 %v298, %v1549
        %v1685 = vsub.f32 %v299, %v1553
        %v1686 = vsub.f32 %v300, %v1557
        %v1687 = vsub.f32 %v301, %v1561
        %v1688 = vsub.f32 %v302, %v1565
        %v1689 = vsub.f32 %v303, %v1569
        %v1690 = vsub.f32 %v304, %v1493
        %v1691 = vsub.f32 %v305, %v1497
        %v1692 = vsub.f32 %v306, %v1501
        %v1693 = vsub.f32 %v307, %v1505
        %v1694 = vsub.f32 %v308, %v1509
        %v1695 = vsub.f32 %v309, %v1513
        %v1696 = vsub.f32 %v310, %v1517
        %v1697 = vsub.f32 %v311, %v1521
        %v1698 = vsub.f32 %v312, %v1525
        %v1699 = vsub.f32 %v313, %v1529
        %v1700 = vsub.f32 %v314, %v1533
        %v1701 = vsub.f32 %v315, %v1537
        %v1702 = vsub.f32 %v316, %v1541
        %v1703 = vsub.f32 %v317, %v1545
        %v1704 = vsub.f32 %v318, %v1549
        %v1705 = vsub.f32 %v319, %v1553
        %v1706 = vsub.f32 %v320, %v1557
        %v1707 = vsub.f32 %v321, %v1561
        %v1708 = vsub.f32 %v322, %v1565
        %v1709 = vsub.f32 %v323, %v1569
        %v1710 = vsub.f32 %v324, %v1493
        %v1711 = vsub.f32 %v325, %v1497
        %v1712 = vsub.f32 %v326, %v1501
        %v1713 = vsub.f32 %v327, %v1505
        %v1714 = vsub.f32 %v328, %v1509
        %v1715 = vsub.f32 %v329, %v1513
        %v1716 = vsub.f32 %v330, %v1517
        %v1717 = vsub.f32 %v331, %v1521
        %v1718 = vsub.f32 %v332, %v1525
        %v1719 = vsub.f32 %v333, %v1529
        %v1720 = vsub.f32 %v334, %v1533
        %v1721 = vsub.f32 %v335, %v1537
        %v1722 = vsub.f32 %v336, %v1541
        %v1723 = vsub.f32 %v337, %v1545
        %v1724 = vsub.f32 %v338, %v1549
        %v1725 = vsub.f32 %v339, %v1553
        %v1726 = vsub.f32 %v340, %v1557
        %v1727 = vsub.f32 %v341, %v1561
        %v1728 = vsub.f32 %v342, %v1565
        %v1729 = vsub.f32 %v343, %v1569
        %v1730 = vsub.f32 %v344, %v1493
        %v1731 = vsub.f32 %v345, %v1497
        %v1732 = vsub.f32 %v346, %v1501
        %v1733 = vsub.f32 %v347, %v1505
        %v1734 = vsub.f32 %v348, %v1509
        %v1735 = vsub.f32 %v349, %v1513
        %v1736 = vsub.f32 %v350, %v1517
        %v1737 = vsub.f32 %v351, %v1521
        %v1738 = vsub.f32 %v352, %v1525
        %v1739 = vsub.f32 %v353, %v1529
        %v1740 = vsub.f32 %v354, %v1533
        %v1741 = vsub.f32 %v355, %v1537
        %v1742 = vsub.f32 %v356, %v1541
        %v1743 = vsub.f32 %v357, %v1545
        %v1744 = vsub.f32 %v358, %v1549
        %v1745 = vsub.f32 %v359, %v1553
        %v1746 = vsub.f32 %v360, %v1557
        %v1747 = vsub.f32 %v361, %v1561
        %v1748 = vsub.f32 %v362, %v1565
        %v1749 = vsub.f32 %v363, %v1569
        %v1750 = vsub.f32 %v364, %v1493
        %v1751 = vsub.f32 %v365, %v1497
        %v1752 = vsub.f32 %v366, %v1501
        %v1753 = vsub.f32 %v367, %v1505
        %v1754 = vsub.f32 %v368, %v1509
        %v1755 = vsub.f32 %v369, %v1513
        %v1756 = vsub.f32 %v370, %v1517
        %v1757 = vsub.f32 %v371, %v1521
        %v1758 = vsub.f32 %v372, %v1525
        %v1759 = vsub.f32 %v373, %v1529
        %v1760 = vsub.f32 %v374, %v1533
        %v1761 = vsub.f32 %v375, %v1537
        %v1762 = vsub.f32 %v376, %v1541
        %v1763 = vsub.f32 %v377, %v1545
        %v1764 = vsub.f32 %v378, %v1549
        %v1765 = vsub.f32 %v379, %v1553
        %v1766 = vsub.f32 %v380, %v1557
        %v1767 = vsub.f32 %v381, %v1561
        %v1768 = vsub.f32 %v382, %v1565
        %v1769 = vsub.f32 %v383, %v1569
        %v1770 = vsub.f32 %v384, %v1493
        %v1771 = vsub.f32 %v385, %v1497
        %v1772 = vsub.f32 %v386, %v1501
        %v1773 = vsub.f32 %v387, %v1505
        %v1774 = vsub.f32 %v388, %v1509
        %v1775 = vsub.f32 %v389, %v1513
        %v1776 = vsub.f32 %v390, %v1517
        %v1777 = vsub.f32 %v391, %v1521
        %v1778 = vsub.f32 %v392, %v1525
        %v1779 = vsub.f32 %v393, %v1529
        %v1780 = vsub.f32 %v394, %v1533
        %v1781 = vsub.f32 %v395, %v1537
        %v1782 = vsub.f32 %v396, %v1541
        %v1783 = vsub.f32 %v397, %v1545
        %v1784 = vsub.f32 %v398, %v1549
        %v1785 = vsub.f32 %v399, %v1553
        %v1786 = vsub.f32 %v400, %v1557
        %v1787 = vsub.f32 %v401, %v1561
        %v1788 = vsub.f32 %v402, %v1565
        %v1789 = vsub.f32 %v403, %v1569
        %v1790 = vsub.f32 %v404, %v1493
        %v1791 = vsub.f32 %v405, %v1497
        %v1792 = vsub.f32 %v406, %v1501
        %v1793 = vsub.f32 %v407, %v1505
        %v1794 = vsub.f32 %v408, %v1509
        %v1795 = vsub.f32 %v409, %v1513
        %v1796 = vsub.f32 %v410, %v1517
        %v1797 = vsub.f32 %v411, %v1521
        %v1798 = vsub.f32 %v412, %v1525
        %v1799 = vsub.f32 %v413, %v1529
        %v1800 = vsub.f32 %v414, %v1533
        %v1801 = vsub.f32 %v415, %v1537
        %v1802 = vsub.f32 %v416, %v1541
        %v1803 = vsub.f32 %v417, %v1545
        %v1804 = vsub.f32 %v418, %v1549
        %v1805 = vsub.f32 %v419, %v1553
        %v1806 = vsub.f32 %v420, %v1557
        %v1807 = vsub.f32 %v421, %v1561
        %v1808 = vsub.f32 %v422, %v1565
        %v1809 = vsub.f32 %v423, %v1569
        %v1810 = vsub.f32 %v424, %v1493
        %v1811 = vsub.f32 %v425, %v1497
        %v1812 = vsub.f32 %v426, %v1501
        %v1813 = vsub.f32 %v427, %v1505
        %v1814 = vsub.f32 %v428, %v1509
        %v1815 = vsub.f32 %v429, %v1513
        %v1816 = vsub.f32 %v430, %v1517
        %v1817 = vsub.f32 %v431, %v1521
        %v1818 = vsub.f32 %v432, %v1525
        %v1819 = vsub.f32 %v433, %v1529
        %v1820 = vsub.f32 %v434, %v1533
        %v1821 = vsub.f32 %v435, %v1537
        %v1822 = vsub.f32 %v436, %v1541
        %v1823 = vsub.f32 %v437, %v1545
        %v1824 = vsub.f32 %v438, %v1549
        %v1825 = vsub.f32 %v439, %v1553
        %v1826 = vsub.f32 %v440, %v1557
        %v1827 = vsub.f32 %v441, %v1561
        %v1828 = vsub.f32 %v442, %v1565
        %v1829 = vsub.f32 %v443, %v1569
        %v1830 = vsub.f32 %v444, %v1493
        %v1831 = vsub.f32 %v445, %v1497
        %v1832 = vsub.f32 %v446, %v1501
        %v1833 = vsub.f32 %v447, %v1505
        %v1834 = vsub.f32 %v448, %v1509
        %v1835 = vsub.f32 %v449, %v1513
        %v1836 = vsub.f32 %v450, %v1517
        %v1837 = vsub.f32 %v451, %v1521
        %v1838 = vsub.f32 %v452, %v1525
        %v1839 = vsub.f32 %v453, %v1529
        %v1840 = vsub.f32 %v454, %v1533
        %v1841 = vsub.f32 %v455, %v1537
        %v1842 = vsub.f32 %v456, %v1541
        %v1843 = vsub.f32 %v457, %v1545
        %v1844 = vsub.f32 %v458, %v1549
        %v1845 = vsub.f32 %v459, %v1553
        %v1846 = vsub.f32 %v460, %v1557
        %v1847 = vsub.f32 %v461, %v1561
        %v1848 = vsub.f32 %v462, %v1565
        %v1849 = vsub.f32 %v463, %v1569
        %v1850 = vsub.f32 %v464, %v1493
        %v1851 = vsub.f32 %v465, %v1497
        %v1852 = vsub.f32 %v466, %v1501
        %v1853 = vsub.f32 %v467, %v1505
        %v1854 = vsub.f32 %v468, %v1509
        %v1855 = vsub.f32 %v469, %v1513
        %v1856 = vsub.f32 %v470, %v1517
        %v1857 = vsub.f32 %v471, %v1521
        %v1858 = vsub.f32 %v472, %v1525
        %v1859 = vsub.f32 %v473, %v1529
        %v1860 = vsub.f32 %v474, %v1533
        %v1861 = vsub.f32 %v475, %v1537
        %v1862 = vsub.f32 %v476, %v1541
        %v1863 = vsub.f32 %v477, %v1545
        %v1864 = vsub.f32 %v478, %v1549
        %v1865 = vsub.f32 %v479, %v1553
        %v1866 = vsub.f32 %v480, %v1557
        %v1867 = vsub.f32 %v481, %v1561
        %v1868 = vsub.f32 %v482, %v1565
        %v1869 = vsub.f32 %v483, %v1569
        %v1870 = vsub.f32 %v484, %v1493
        %v1871 = vsub.f32 %v485, %v1497
        %v1872 = vsub.f32 %v486, %v1501
        %v1873 = vsub.f32 %v487, %v1505
        %v1874 = vsub.f32 %v488, %v1509
        %v1875 = vsub.f32 %v489, %v1513
        %v1876 = vsub.f32 %v490, %v1517
        %v1877 = vsub.f32 %v491, %v1521
        %v1878 = vsub.f32 %v492, %v1525
        %v1879 = vsub.f32 %v493, %v1529
        %v1880 = vsub.f32 %v494, %v1533
        %v1881 = vsub.f32 %v495, %v1537
        %v1882 = vsub.f32 %v496, %v1541
        %v1883 = vsub.f32 %v497, %v1545
        %v1884 = vsub.f32 %v498, %v1549
        %v1885 = vsub.f32 %v499, %v1553
        %v1886 = vsub.f32 %v500, %v1557
        %v1887 = vsub.f32 %v501, %v1561
        %v1888 = vsub.f32 %v502, %v1565
        %v1889 = vsub.f32 %v503, %v1569
        %v1890 = vsub.f32 %v504, %v1493
        %v1891 = vsub.f32 %v505, %v1497
        %v1892 = vsub.f32 %v506, %v1501
        %v1893 = vsub.f32 %v507, %v1505
        %v1894 = vsub.f32 %v508, %v1509
        %v1895 = vsub.f32 %v509, %v1513
        %v1896 = vsub.f32 %v510, %v1517
        %v1897 = vsub.f32 %v511, %v1521
        %v1898 = vsub.f32 %v512, %v1525
        %v1899 = vsub.f32 %v513, %v1529
        %v1900 = vsub.f32 %v514, %v1533
        %v1901 = vsub.f32 %v515, %v1537
        %v1902 = vsub.f32 %v516, %v1541
        %v1903 = vsub.f32 %v517, %v1545
        %v1904 = vsub.f32 %v518, %v1549
        %v1905 = vsub.f32 %v519, %v1553
        %v1906 = vsub.f32 %v520, %v1557
        %v1907 = vsub.f32 %v521, %v1561
        %v1908 = vsub.f32 %v522, %v1565
        %v1909 = vsub.f32 %v523, %v1569
        %v1910 = vsub.f32 %v524, %v1493
        %v1911 = vsub.f32 %v525, %v1497
        %v1912 = vsub.f32 %v526, %v1501
        %v1913 = vsub.f32 %v527, %v1505
        %v1914 = vsub.f32 %v528, %v1509
        %v1915 = vsub.f32 %v529, %v1513
        %v1916 = vsub.f32 %v530, %v1517
        %v1917 = vsub.f32 %v531, %v1521
        %v1918 = vsub.f32 %v532, %v1525
        %v1919 = vsub.f32 %v533, %v1529
        %v1920 = vsub.f32 %v534, %v1533
        %v1921 = vsub.f32 %v535, %v1537
        %v1922 = vsub.f32 %v536, %v1541
        %v1923 = vsub.f32 %v537, %v1545
        %v1924 = vsub.f32 %v538, %v1549
        %v1925 = vsub.f32 %v539, %v1553
        %v1926 = vsub.f32 %v540, %v1557
        %v1927 = vsub.f32 %v541, %v1561
        %v1928 = vsub.f32 %v542, %v1565
        %v1929 = vsub.f32 %v543, %v1569
        %v1930 = vsub.f32 %v544, %v1493
        %v1931 = vsub.f32 %v545, %v1497
        %v1932 = vsub.f32 %v546, %v1501
        %v1933 = vsub.f32 %v547, %v1505
        %v1934 = vsub.f32 %v548, %v1509
        %v1935 = vsub.f32 %v549, %v1513
        %v1936 = vsub.f32 %v550, %v1517
        %v1937 = vsub.f32 %v551, %v1521
        %v1938 = vsub.f32 %v552, %v1525
        %v1939 = vsub.f32 %v553, %v1529
        %v1940 = vsub.f32 %v554, %v1533
        %v1941 = vsub.f32 %v555, %v1537
        %v1942 = vsub.f32 %v556, %v1541
        %v1943 = vsub.f32 %v557, %v1545
        %v1944 = vsub.f32 %v558, %v1549
        %v1945 = vsub.f32 %v559, %v1553
        %v1946 = vsub.f32 %v560, %v1557
        %v1947 = vsub.f32 %v561, %v1561
        %v1948 = vsub.f32 %v562, %v1565
        %v1949 = vsub.f32 %v563, %v1569
        %v1950 = vsub.f32 %v564, %v1493
        %v1951 = vsub.f32 %v565, %v1497
        %v1952 = vsub.f32 %v566, %v1501
        %v1953 = vsub.f32 %v567, %v1505
        %v1954 = vsub.f32 %v568, %v1509
        %v1955 = vsub.f32 %v569, %v1513
        %v1956 = vsub.f32 %v570, %v1517
        %v1957 = vsub.f32 %v571, %v1521
        %v1958 = vsub.f32 %v572, %v1525
        %v1959 = vsub.f32 %v573, %v1529
        %v1960 = vsub.f32 %v574, %v1533
        %v1961 = vsub.f32 %v575, %v1537
        %v1962 = vsub.f32 %v576, %v1541
        %v1963 = vsub.f32 %v577, %v1545
        %v1964 = vsub.f32 %v578, %v1549
        %v1965 = vsub.f32 %v579, %v1553
        %v1966 = vsub.f32 %v580, %v1557
        %v1967 = vsub.f32 %v581, %v1561
        %v1968 = vsub.f32 %v582, %v1565
        %v1969 = vsub.f32 %v583, %v1569
        %v1970 = vsub.f32 %v584, %v1493
        %v1971 = vsub.f32 %v585, %v1497
        %v1972 = vsub.f32 %v586, %v1501
        %v1973 = vsub.f32 %v587, %v1505
        %v1974 = vsub.f32 %v588, %v1509
        %v1975 = vsub.f32 %v589, %v1513
        %v1976 = vsub.f32 %v590, %v1517
        %v1977 = vsub.f32 %v591, %v1521
        %v1978 = vsub.f32 %v592, %v1525
        %v1979 = vsub.f32 %v593, %v1529
        %v1980 = vsub.f32 %v594, %v1533
        %v1981 = vsub.f32 %v595, %v1537
        %v1982 = vsub.f32 %v596, %v1541
        %v1983 = vsub.f32 %v597, %v1545
        %v1984 = vsub.f32 %v598, %v1549
        %v1985 = vsub.f32 %v599, %v1553
        %v1986 = vsub.f32 %v600, %v1557
        %v1987 = vsub.f32 %v601, %v1561
        %v1988 = vsub.f32 %v602, %v1565
        %v1989 = vsub.f32 %v603, %v1569
        %v1990 = vsub.f32 %v604, %v1493
        %v1991 = vsub.f32 %v605, %v1497
        %v1992 = vsub.f32 %v606, %v1501
        %v1993 = vsub.f32 %v607, %v1505
        %v1994 = vsub.f32 %v608, %v1509
        %v1995 = vsub.f32 %v609, %v1513
        %v1996 = vsub.f32 %v610, %v1517
        %v1997 = vsub.f32 %v611, %v1521
        %v1998 = vsub.f32 %v612, %v1525
        %v1999 = vsub.f32 %v613, %v1529
        %v2000 = vsub.f32 %v614, %v1533
        %v2001 = vsub.f32 %v615, %v1537
        %v2002 = vsub.f32 %v616, %v1541
        %v2003 = vsub.f32 %v617, %v1545
        %v2004 = vsub.f32 %v618, %v1549
        %v2005 = vsub.f32 %v619, %v1553
        %v2006 = vsub.f32 %v620, %v1557
        %v2007 = vsub.f32 %v621, %v1561
        %v2008 = vsub.f32 %v622, %v1565
        %v2009 = vsub.f32 %v623, %v1569
        %v2010 = vsub.f32 %v624, %v1493
        %v2011 = vsub.f32 %v625, %v1497
        %v2012 = vsub.f32 %v626, %v1501
        %v2013 = vsub.f32 %v627, %v1505
        %v2014 = vsub.f32 %v628, %v1509
        %v2015 = vsub.f32 %v629, %v1513
        %v2016 = vsub.f32 %v630, %v1517
        %v2017 = vsub.f32 %v631, %v1521
        %v2018 = vsub.f32 %v632, %v1525
        %v2019 = vsub.f32 %v633, %v1529
        %v2020 = vsub.f32 %v634, %v1533
        %v2021 = vsub.f32 %v635, %v1537
        %v2022 = vsub.f32 %v636, %v1541
        %v2023 = vsub.f32 %v637, %v1545
        %v2024 = vsub.f32 %v638, %v1549
        %v2025 = vsub.f32 %v639, %v1553
        %v2026 = vsub.f32 %v640, %v1557
        %v2027 = vsub.f32 %v641, %v1561
        %v2028 = vsub.f32 %v642, %v1565
        %v2029 = vsub.f32 %v643, %v1569
        %v2030 = vsub.f32 %v644, %v1493
        %v2031 = vsub.f32 %v645, %v1497
        %v2032 = vsub.f32 %v646, %v1501
        %v2033 = vsub.f32 %v647, %v1505
        %v2034 = vsub.f32 %v648, %v1509
        %v2035 = vsub.f32 %v649, %v1513
        %v2036 = vsub.f32 %v650, %v1517
        %v2037 = vsub.f32 %v651, %v1521
        %v2038 = vsub.f32 %v652, %v1525
        %v2039 = vsub.f32 %v653, %v1529
        %v2040 = vsub.f32 %v654, %v1533
        %v2041 = vsub.f32 %v655, %v1537
        %v2042 = vsub.f32 %v656, %v1541
        %v2043 = vsub.f32 %v657, %v1545
        %v2044 = vsub.f32 %v658, %v1549
        %v2045 = vsub.f32 %v659, %v1553
        %v2046 = vsub.f32 %v660, %v1557
        %v2047 = vsub.f32 %v661, %v1561
        %v2048 = vsub.f32 %v662, %v1565
        %v2049 = vsub.f32 %v663, %v1569
        %v2050 = vsub.f32 %v664, %v1493
        %v2051 = vsub.f32 %v665, %v1497
        %v2052 = vsub.f32 %v666, %v1501
        %v2053 = vsub.f32 %v667, %v1505
        %v2054 = vsub.f32 %v668, %v1509
        %v2055 = vsub.f32 %v669, %v1513
        %v2056 = vsub.f32 %v670, %v1517
        %v2057 = vsub.f32 %v671, %v1521
        %v2058 = vsub.f32 %v672, %v1525
        %v2059 = vsub.f32 %v673, %v1529
        %v2060 = vsub.f32 %v674, %v1533
        %v2061 = vsub.f32 %v675, %v1537
        %v2062 = vsub.f32 %v676, %v1541
        %v2063 = vsub.f32 %v677, %v1545
        %v2064 = vsub.f32 %v678, %v1549
        %v2065 = vsub.f32 %v679, %v1553
        %v2066 = vsub.f32 %v680, %v1557
        %v2067 = vsub.f32 %v681, %v1561
        %v2068 = vsub.f32 %v682, %v1565
        %v2069 = vsub.f32 %v683, %v1569
        %v2070 = vsub.f32 %v684, %v1493
        %v2071 = vsub.f32 %v685, %v1497
        %v2072 = vsub.f32 %v686, %v1501
        %v2073 = vsub.f32 %v687, %v1505
        %v2074 = vsub.f32 %v688, %v1509
        %v2075 = vsub.f32 %v689, %v1513
        %v2076 = vsub.f32 %v690, %v1517
        %v2077 = vsub.f32 %v691, %v1521
        %v2078 = vsub.f32 %v692, %v1525
        %v2079 = vsub.f32 %v693, %v1529
        %v2080 = vsub.f32 %v694, %v1533
        %v2081 = vsub.f32 %v695, %v1537
        %v2082 = vsub.f32 %v696, %v1541
        %v2083 = vsub.f32 %v697, %v1545
        %v2084 = vsub.f32 %v698, %v1549
        %v2085 = vsub.f32 %v699, %v1553
        %v2086 = vsub.f32 %v700, %v1557
        %v2087 = vsub.f32 %v701, %v1561
        %v2088 = vsub.f32 %v702, %v1565
        %v2089 = vsub.f32 %v703, %v1569
        %v2090 = vsub.f32 %v704, %v1493
        %v2091 = vsub.f32 %v705, %v1497
        %v2092 = vsub.f32 %v706, %v1501
        %v2093 = vsub.f32 %v707, %v1505
        %v2094 = vsub.f32 %v708, %v1509
        %v2095 = vsub.f32 %v709, %v1513
        %v2096 = vsub.f32 %v710, %v1517
        %v2097 = vsub.f32 %v711, %v1521
        %v2098 = vsub.f32 %v712, %v1525
        %v2099 = vsub.f32 %v713, %v1529
        %v2100 = vsub.f32 %v714, %v1533
        %v2101 = vsub.f32 %v715, %v1537
        %v2102 = vsub.f32 %v716, %v1541
        %v2103 = vsub.f32 %v717, %v1545
        %v2104 = vsub.f32 %v718, %v1549
        %v2105 = vsub.f32 %v719, %v1553
        %v2106 = vsub.f32 %v720, %v1557
        %v2107 = vsub.f32 %v721, %v1561
        %v2108 = vsub.f32 %v722, %v1565
        %v2109 = vsub.f32 %v723, %v1569
        %v2110 = vsub.f32 %v724, %v1493
        %v2111 = vsub.f32 %v725, %v1497
        %v2112 = vsub.f32 %v726, %v1501
        %v2113 = vsub.f32 %v727, %v1505
        %v2114 = vsub.f32 %v728, %v1509
        %v2115 = vsub.f32 %v729, %v1513
        %v2116 = vsub.f32 %v730, %v1517
        %v2117 = vsub.f32 %v731, %v1521
        %v2118 = vsub.f32 %v732, %v1525
        %v2119 = vsub.f32 %v733, %v1529
        %v2120 = vsub.f32 %v734, %v1533
        %v2121 = vsub.f32 %v735, %v1537
        %v2122 = vsub.f32 %v736, %v1541
        %v2123 = vsub.f32 %v737, %v1545
        %v2124 = vsub.f32 %v738, %v1549
        %v2125 = vsub.f32 %v739, %v1553
        %v2126 = vsub.f32 %v740, %v1557
        %v2127 = vsub.f32 %v741, %v1561
        %v2128 = vsub.f32 %v742, %v1565
        %v2129 = vsub.f32 %v743, %v1569
        %v2130 = vsub.f32 %v744, %v1493
        %v2131 = vsub.f32 %v745, %v1497
        %v2132 = vsub.f32 %v746, %v1501
        %v2133 = vsub.f32 %v747, %v1505
        %v2134 = vsub.f32 %v748, %v1509
        %v2135 = vsub.f32 %v749, %v1513
        %v2136 = vsub.f32 %v750, %v1517
        %v2137 = vsub.f32 %v751, %v1521
        %v2138 = vsub.f32 %v752, %v1525
        %v2139 = vsub.f32 %v753, %v1529
        %v2140 = vsub.f32 %v754, %v1533
        %v2141 = vsub.f32 %v755, %v1537
        %v2142 = vsub.f32 %v756, %v1541
        %v2143 = vsub.f32 %v757, %v1545
        %v2144 = vsub.f32 %v758, %v1549
        %v2145 = vsub.f32 %v759, %v1553
        %v2146 = vsub.f32 %v760, %v1557
        %v2147 = vsub.f32 %v761, %v1561
        %v2148 = vsub.f32 %v762, %v1565
        %v2149 = vsub.f32 %v763, %v1569
        %v2150 = vsub.f32 %v764, %v1493
        %v2151 = vsub.f32 %v765, %v1497
        %v2152 = vsub.f32 %v766, %v1501
        %v2153 = vsub.f32 %v767, %v1505
        %v2154 = vsub.f32 %v768, %v1509
        %v2155 = vsub.f32 %v769, %v1513
        %v2156 = vsub.f32 %v770, %v1517
        %v2157 = vsub.f32 %v771, %v1521
        %v2158 = vsub.f32 %v772, %v1525
        %v2159 = vsub.f32 %v773, %v1529
        %v2160 = vsub.f32 %v774, %v1533
        %v2161 = vsub.f32 %v775, %v1537
        %v2162 = vsub.f32 %v776, %v1541
        %v2163 = vsub.f32 %v777, %v1545
        %v2164 = vsub.f32 %v778, %v1549
        %v2165 = vsub.f32 %v779, %v1553
        %v2166 = vsub.f32 %v780, %v1557
        %v2167 = vsub.f32 %v781, %v1561
        %v2168 = vsub.f32 %v782, %v1565
        %v2169 = vsub.f32 %v783, %v1569
        %v2170 = vsub.f32 %v784, %v1493
        %v2171 = vsub.f32 %v785, %v1497
        %v2172 = vsub.f32 %v786, %v1501
        %v2173 = vsub.f32 %v787, %v1505
        %v2174 = vsub.f32 %v788, %v1509
        %v2175 = vsub.f32 %v789, %v1513
        %v2176 = vsub.f32 %v790, %v1517
        %v2177 = vsub.f32 %v791, %v1521
        %v2178 = vsub.f32 %v792, %v1525
        %v2179 = vsub.f32 %v793, %v1529
        %v2180 = vsub.f32 %v794, %v1533
        %v2181 = vsub.f32 %v795, %v1537
        %v2182 = vsub.f32 %v796, %v1541
        %v2183 = vsub.f32 %v797, %v1545
        %v2184 = vsub.f32 %v798, %v1549
        %v2185 = vsub.f32 %v799, %v1553
        %v2186 = vsub.f32 %v800, %v1557
        %v2187 = vsub.f32 %v801, %v1561
        %v2188 = vsub.f32 %v802, %v1565
        %v2189 = vsub.f32 %v803, %v1569
        %v2190 = vsub.f32 %v804, %v1493
        %v2191 = vsub.f32 %v805, %v1497
        %v2192 = vsub.f32 %v806, %v1501
        %v2193 = vsub.f32 %v807, %v1505
        %v2194 = vsub.f32 %v808, %v1509
        %v2195 = vsub.f32 %v809, %v1513
        %v2196 = vsub.f32 %v810, %v1517
        %v2197 = vsub.f32 %v811, %v1521
        %v2198 = vsub.f32 %v812, %v1525
        %v2199 = vsub.f32 %v813, %v1529
        %v2200 = vsub.f32 %v814, %v1533
        %v2201 = vsub.f32 %v815, %v1537
        %v2202 = vsub.f32 %v816, %v1541
        %v2203 = vsub.f32 %v817, %v1545
        %v2204 = vsub.f32 %v818, %v1549
        %v2205 = vsub.f32 %v819, %v1553
        %v2206 = vsub.f32 %v820, %v1557
        %v2207 = vsub.f32 %v821, %v1561
        %v2208 = vsub.f32 %v822, %v1565
        %v2209 = vsub.f32 %v823, %v1569
        %v2210 = vsub.f32 %v824, %v1493
        %v2211 = vsub.f32 %v825, %v1497
        %v2212 = vsub.f32 %v826, %v1501
        %v2213 = vsub.f32 %v827, %v1505
        %v2214 = vsub.f32 %v828, %v1509
        %v2215 = vsub.f32 %v829, %v1513
        %v2216 = vsub.f32 %v830, %v1517
        %v2217 = vsub.f32 %v831, %v1521
        %v2218 = vsub.f32 %v832, %v1525
        %v2219 = vsub.f32 %v833, %v1529
        %v2220 = vsub.f32 %v834, %v1533
        %v2221 = vsub.f32 %v835, %v1537
        %v2222 = vsub.f32 %v836, %v1541
        %v2223 = vsub.f32 %v837, %v1545
        %v2224 = vsub.f32 %v838, %v1549
        %v2225 = vsub.f32 %v839, %v1553
        %v2226 = vsub.f32 %v840, %v1557
        %v2227 = vsub.f32 %v841, %v1561
        %v2228 = vsub.f32 %v842, %v1565
        %v2229 = vsub.f32 %v843, %v1569
        %v2230 = vsub.f32 %v844, %v1493
        %v2231 = vsub.f32 %v845, %v1497
        %v2232 = vsub.f32 %v846, %v1501
        %v2233 = vsub.f32 %v847, %v1505
        %v2234 = vsub.f32 %v848, %v1509
        %v2235 = vsub.f32 %v849, %v1513
        %v2236 = vsub.f32 %v850, %v1517
        %v2237 = vsub.f32 %v851, %v1521
        %v2238 = vsub.f32 %v852, %v1525
        %v2239 = vsub.f32 %v853, %v1529
        %v2240 = vsub.f32 %v854, %v1533
        %v2241 = vsub.f32 %v855, %v1537
        %v2242 = vsub.f32 %v856, %v1541
        %v2243 = vsub.f32 %v857, %v1545
        %v2244 = vsub.f32 %v858, %v1549
        %v2245 = vsub.f32 %v859, %v1553
        %v2246 = vsub.f32 %v860, %v1557
        %v2247 = vsub.f32 %v861, %v1561
        %v2248 = vsub.f32 %v862, %v1565
        %v2249 = vsub.f32 %v863, %v1569
        %v2250 = vsub.f32 %v864, %v1493
        %v2251 = vsub.f32 %v865, %v1497
        %v2252 = vsub.f32 %v866, %v1501
        %v2253 = vsub.f32 %v867, %v1505
        %v2254 = vsub.f32 %v868, %v1509
        %v2255 = vsub.f32 %v869, %v1513
        %v2256 = vsub.f32 %v870, %v1517
        %v2257 = vsub.f32 %v871, %v1521
        %v2258 = vsub.f32 %v872, %v1525
        %v2259 = vsub.f32 %v873, %v1529
        %v2260 = vsub.f32 %v874, %v1533
        %v2261 = vsub.f32 %v875, %v1537
        %v2262 = vsub.f32 %v876, %v1541
        %v2263 = vsub.f32 %v877, %v1545
        %v2264 = vsub.f32 %v878, %v1549
        %v2265 = vsub.f32 %v879, %v1553
        %v2266 = vsub.f32 %v880, %v1557
        %v2267 = vsub.f32 %v881, %v1561
        %v2268 = vsub.f32 %v882, %v1565
        %v2269 = vsub.f32 %v883, %v1569
        %v2270 = vsub.f32 %v884, %v1493
        %v2271 = vsub.f32 %v885, %v1497
        %v2272 = vsub.f32 %v886, %v1501
        %v2273 = vsub.f32 %v887, %v1505
        %v2274 = vsub.f32 %v888, %v1509
        %v2275 = vsub.f32 %v889, %v1513
        %v2276 = vsub.f32 %v890, %v1517
        %v2277 = vsub.f32 %v891, %v1521
        %v2278 = vsub.f32 %v892, %v1525
        %v2279 = vsub.f32 %v893, %v1529
        %v2280 = vsub.f32 %v894, %v1533
        %v2281 = vsub.f32 %v895, %v1537
        %v2282 = vsub.f32 %v896, %v1541
        %v2283 = vsub.f32 %v897, %v1545
        %v2284 = vsub.f32 %v898, %v1549
        %v2285 = vsub.f32 %v899, %v1553
        %v2286 = vsub.f32 %v900, %v1557
        %v2287 = vsub.f32 %v901, %v1561
        %v2288 = vsub.f32 %v902, %v1565
        %v2289 = vsub.f32 %v903, %v1569
        %v2290 = vsub.f32 %v904, %v1493
        %v2291 = vsub.f32 %v905, %v1497
        %v2292 = vsub.f32 %v906, %v1501
        %v2293 = vsub.f32 %v907, %v1505
        %v2294 = vsub.f32 %v908, %v1509
        %v2295 = vsub.f32 %v909, %v1513
        %v2296 = vsub.f32 %v910, %v1517
        %v2297 = vsub.f32 %v911, %v1521
        %v2298 = vsub.f32 %v912, %v1525
        %v2299 = vsub.f32 %v913, %v1529
        %v2300 = vsub.f32 %v914, %v1533
        %v2301 = vsub.f32 %v915, %v1537
        %v2302 = vsub.f32 %v916, %v1541
        %v2303 = vsub.f32 %v917, %v1545
        %v2304 = vsub.f32 %v918, %v1549
        %v2305 = vsub.f32 %v919, %v1553
        %v2306 = vsub.f32 %v920, %v1557
        %v2307 = vsub.f32 %v921, %v1561
        %v2308 = vsub.f32 %v922, %v1565
        %v2309 = vsub.f32 %v923, %v1569
        %v2310 = vsub.f32 %v924, %v1493
        %v2311 = vsub.f32 %v925, %v1497
        %v2312 = vsub.f32 %v926, %v1501
        %v2313 = vsub.f32 %v927, %v1505
        %v2314 = vsub.f32 %v928, %v1509
        %v2315 = vsub.f32 %v929, %v1513
        %v2316 = vsub.f32 %v930, %v1517
        %v2317 = vsub.f32 %v931, %v1521
        %v2318 = vsub.f32 %v932, %v1525
        %v2319 = vsub.f32 %v933, %v1529
        %v2320 = vsub.f32 %v934, %v1533
        %v2321 = vsub.f32 %v935, %v1537
        %v2322 = vsub.f32 %v936, %v1541
        %v2323 = vsub.f32 %v937, %v1545
        %v2324 = vsub.f32 %v938, %v1549
        %v2325 = vsub.f32 %v939, %v1553
        %v2326 = vsub.f32 %v940, %v1557
        %v2327 = vsub.f32 %v941, %v1561
        %v2328 = vsub.f32 %v942, %v1565
        %v2329 = vsub.f32 %v943, %v1569
        %v2330 = vsub.f32 %v944, %v1493
        %v2331 = vsub.f32 %v945, %v1497
        %v2332 = vsub.f32 %v946, %v1501
        %v2333 = vsub.f32 %v947, %v1505
        %v2334 = vsub.f32 %v948, %v1509
        %v2335 = vsub.f32 %v949, %v1513
        %v2336 = vsub.f32 %v950, %v1517
        %v2337 = vsub.f32 %v951, %v1521
        %v2338 = vsub.f32 %v952, %v1525
        %v2339 = vsub.f32 %v953, %v1529
        %v2340 = vsub.f32 %v954, %v1533
        %v2341 = vsub.f32 %v955, %v1537
        %v2342 = vsub.f32 %v956, %v1541
        %v2343 = vsub.f32 %v957, %v1545
        %v2344 = vsub.f32 %v958, %v1549
        %v2345 = vsub.f32 %v959, %v1553
        %v2346 = vsub.f32 %v960, %v1557
        %v2347 = vsub.f32 %v961, %v1561
        %v2348 = vsub.f32 %v962, %v1565
        %v2349 = vsub.f32 %v963, %v1569
        %v2350 = vsub.f32 %v964, %v1493
        %v2351 = vsub.f32 %v965, %v1497
        %v2352 = vsub.f32 %v966, %v1501
        %v2353 = vsub.f32 %v967, %v1505
        %v2354 = vsub.f32 %v968, %v1509
        %v2355 = vsub.f32 %v969, %v1513
        %v2356 = vsub.f32 %v970, %v1517
        %v2357 = vsub.f32 %v971, %v1521
        %v2358 = vsub.f32 %v972, %v1525
        %v2359 = vsub.f32 %v973, %v1529
        %v2360 = vsub.f32 %v974, %v1533
        %v2361 = vsub.f32 %v975, %v1537
        %v2362 = vsub.f32 %v976, %v1541
        %v2363 = vsub.f32 %v977, %v1545
        %v2364 = vsub.f32 %v978, %v1549
        %v2365 = vsub.f32 %v979, %v1553
        %v2366 = vsub.f32 %v980, %v1557
        %v2367 = vsub.f32 %v981, %v1561
        %v2368 = vsub.f32 %v982, %v1565
        %v2369 = vsub.f32 %v983, %v1569
        %v2370 = vsub.f32 %v984, %v1493
        %v2371 = vsub.f32 %v985, %v1497
        %v2372 = vsub.f32 %v986, %v1501
        %v2373 = vsub.f32 %v987, %v1505
        %v2374 = vsub.f32 %v988, %v1509
        %v2375 = vsub.f32 %v989, %v1513
        %v2376 = vsub.f32 %v990, %v1517
        %v2377 = vsub.f32 %v991, %v1521
        %v2378 = vsub.f32 %v992, %v1525
        %v2379 = vsub.f32 %v993, %v1529
        %v2380 = vsub.f32 %v994, %v1533
        %v2381 = vsub.f32 %v995, %v1537
        %v2382 = vsub.f32 %v996, %v1541
        %v2383 = vsub.f32 %v997, %v1545
        %v2384 = vsub.f32 %v998, %v1549
        %v2385 = vsub.f32 %v999, %v1553
        %v2386 = vsub.f32 %v1000, %v1557
        %v2387 = vsub.f32 %v1001, %v1561
        %v2388 = vsub.f32 %v1002, %v1565
        %v2389 = vsub.f32 %v1003, %v1569
        %v2390 = vsub.f32 %v1004, %v1493
        %v2391 = vsub.f32 %v1005, %v1497
        %v2392 = vsub.f32 %v1006, %v1501
        %v2393 = vsub.f32 %v1007, %v1505
        %v2394 = vsub.f32 %v1008, %v1509
        %v2395 = vsub.f32 %v1009, %v1513
        %v2396 = vsub.f32 %v1010, %v1517
        %v2397 = vsub.f32 %v1011, %v1521
        %v2398 = vsub.f32 %v1012, %v1525
        %v2399 = vsub.f32 %v1013, %v1529
        %v2400 = vsub.f32 %v1014, %v1533
        %v2401 = vsub.f32 %v1015, %v1537
        %v2402 = vsub.f32 %v1016, %v1541
        %v2403 = vsub.f32 %v1017, %v1545
        %v2404 = vsub.f32 %v1018, %v1549
        %v2405 = vsub.f32 %v1019, %v1553
        %v2406 = vsub.f32 %v1020, %v1557
        %v2407 = vsub.f32 %v1021, %v1561
        %v2408 = vsub.f32 %v1022, %v1565
        %v2409 = vsub.f32 %v1023, %v1569
        %v2410 = vsub.f32 %v1024, %v1493
        %v2411 = vsub.f32 %v1025, %v1497
        %v2412 = vsub.f32 %v1026, %v1501
        %v2413 = vsub.f32 %v1027, %v1505
        %v2414 = vsub.f32 %v1028, %v1509
        %v2415 = vsub.f32 %v1029, %v1513
        %v2416 = vsub.f32 %v1030, %v1517
        %v2417 = vsub.f32 %v1031, %v1521
        %v2418 = vsub.f32 %v1032, %v1525
        %v2419 = vsub.f32 %v1033, %v1529
        %v2420 = vsub.f32 %v1034, %v1533
        %v2421 = vsub.f32 %v1035, %v1537
        %v2422 = vsub.f32 %v1036, %v1541
        %v2423 = vsub.f32 %v1037, %v1545
        %v2424 = vsub.f32 %v1038, %v1549
        %v2425 = vsub.f32 %v1039, %v1553
        %v2426 = vsub.f32 %v1040, %v1557
        %v2427 = vsub.f32 %v1041, %v1561
        %v2428 = vsub.f32 %v1042, %v1565
        %v2429 = vsub.f32 %v1043, %v1569
        %v2430 = vsub.f32 %v1044, %v1493
        %v2431 = vsub.f32 %v1045, %v1497
        %v2432 = vsub.f32 %v1046, %v1501
        %v2433 = vsub.f32 %v1047, %v1505
        %v2434 = vsub.f32 %v1048, %v1509
        %v2435 = vsub.f32 %v1049, %v1513
        %v2436 = vsub.f32 %v1050, %v1517
        %v2437 = vsub.f32 %v1051, %v1521
        %v2438 = vsub.f32 %v1052, %v1525
        %v2439 = vsub.f32 %v1053, %v1529
        %v2440 = vsub.f32 %v1054, %v1533
        %v2441 = vsub.f32 %v1055, %v1537
        %v2442 = vsub.f32 %v1056, %v1541
        %v2443 = vsub.f32 %v1057, %v1545
        %v2444 = vsub.f32 %v1058, %v1549
        %v2445 = vsub.f32 %v1059, %v1553
        %v2446 = vsub.f32 %v1060, %v1557
        %v2447 = vsub.f32 %v1061, %v1561
        %v2448 = vsub.f32 %v1062, %v1565
        %v2449 = vsub.f32 %v1063, %v1569
        %v2450 = vsub.f32 %v1064, %v1493
        %v2451 = vsub.f32 %v1065, %v1497
        %v2452 = vsub.f32 %v1066, %v1501
        %v2453 = vsub.f32 %v1067, %v1505
        %v2454 = vsub.f32 %v1068, %v1509
        %v2455 = vsub.f32 %v1069, %v1513
        %v2456 = vsub.f32 %v1070, %v1517
        %v2457 = vsub.f32 %v1071, %v1521
        %v2458 = vsub.f32 %v1072, %v1525
        %v2459 = vsub.f32 %v1073, %v1529
        %v2460 = vsub.f32 %v1074, %v1533
        %v2461 = vsub.f32 %v1075, %v1537
        %v2462 = vsub.f32 %v1076, %v1541
        %v2463 = vsub.f32 %v1077, %v1545
        %v2464 = vsub.f32 %v1078, %v1549
        %v2465 = vsub.f32 %v1079, %v1553
        %v2466 = vsub.f32 %v1080, %v1557
        %v2467 = vsub.f32 %v1081, %v1561
        %v2468 = vsub.f32 %v1082, %v1565
        %v2469 = vsub.f32 %v1083, %v1569
        %v2470 = vsub.f32 %v1084, %v1493
        %v2471 = vsub.f32 %v1085, %v1497
        %v2472 = vsub.f32 %v1086, %v1501
        %v2473 = vsub.f32 %v1087, %v1505
        %v2474 = vsub.f32 %v1088, %v1509
        %v2475 = vsub.f32 %v1089, %v1513
        %v2476 = vsub.f32 %v1090, %v1517
        %v2477 = vsub.f32 %v1091, %v1521
        %v2478 = vsub.f32 %v1092, %v1525
        %v2479 = vsub.f32 %v1093, %v1529
        %v2480 = vsub.f32 %v1094, %v1533
        %v2481 = vsub.f32 %v1095, %v1537
        %v2482 = vsub.f32 %v1096, %v1541
        %v2483 = vsub.f32 %v1097, %v1545
        %v2484 = vsub.f32 %v1098, %v1549
        %v2485 = vsub.f32 %v1099, %v1553
        %v2486 = vsub.f32 %v1100, %v1557
        %v2487 = vsub.f32 %v1101, %v1561
        %v2488 = vsub.f32 %v1102, %v1565
        %v2489 = vsub.f32 %v1103, %v1569
        %v2490 = vsub.f32 %v1104, %v1493
        %v2491 = vsub.f32 %v1105, %v1497
        %v2492 = vsub.f32 %v1106, %v1501
        %v2493 = vsub.f32 %v1107, %v1505
        %v2494 = vsub.f32 %v1108, %v1509
        %v2495 = vsub.f32 %v1109, %v1513
        %v2496 = vsub.f32 %v1110, %v1517
        %v2497 = vsub.f32 %v1111, %v1521
        %v2498 = vsub.f32 %v1112, %v1525
        %v2499 = vsub.f32 %v1113, %v1529
        %v2500 = vsub.f32 %v1114, %v1533
        %v2501 = vsub.f32 %v1115, %v1537
        %v2502 = vsub.f32 %v1116, %v1541
        %v2503 = vsub.f32 %v1117, %v1545
        %v2504 = vsub.f32 %v1118, %v1549
        %v2505 = vsub.f32 %v1119, %v1553
        %v2506 = vsub.f32 %v1120, %v1557
        %v2507 = vsub.f32 %v1121, %v1561
        %v2508 = vsub.f32 %v1122, %v1565
        %v2509 = vsub.f32 %v1123, %v1569
        %v2510 = vsub.f32 %v1124, %v1493
        %v2511 = vsub.f32 %v1125, %v1497
        %v2512 = vsub.f32 %v1126, %v1501
        %v2513 = vsub.f32 %v1127, %v1505
        %v2514 = vsub.f32 %v1128, %v1509
        %v2515 = vsub.f32 %v1129, %v1513
        %v2516 = vsub.f32 %v1130, %v1517
        %v2517 = vsub.f32 %v1131, %v1521
        %v2518 = vsub.f32 %v1132, %v1525
        %v2519 = vsub.f32 %v1133, %v1529
        %v2520 = vsub.f32 %v1134, %v1533
        %v2521 = vsub.f32 %v1135, %v1537
        %v2522 = vsub.f32 %v1136, %v1541
        %v2523 = vsub.f32 %v1137, %v1545
        %v2524 = vsub.f32 %v1138, %v1549
        %v2525 = vsub.f32 %v1139, %v1553
        %v2526 = vsub.f32 %v1140, %v1557
        %v2527 = vsub.f32 %v1141, %v1561
        %v2528 = vsub.f32 %v1142, %v1565
        %v2529 = vsub.f32 %v1143, %v1569
        %v2530 = vsub.f32 %v1144, %v1493
        %v2531 = vsub.f32 %v1145, %v1497
        %v2532 = vsub.f32 %v1146, %v1501
        %v2533 = vsub.f32 %v1147, %v1505
        %v2534 = vsub.f32 %v1148, %v1509
        %v2535 = vsub.f32 %v1149, %v1513
        %v2536 = vsub.f32 %v1150, %v1517
        %v2537 = vsub.f32 %v1151, %v1521
        %v2538 = vsub.f32 %v1152, %v1525
        %v2539 = vsub.f32 %v1153, %v1529
        %v2540 = vsub.f32 %v1154, %v1533
        %v2541 = vsub.f32 %v1155, %v1537
        %v2542 = vsub.f32 %v1156, %v1541
        %v2543 = vsub.f32 %v1157, %v1545
        %v2544 = vsub.f32 %v1158, %v1549
        %v2545 = vsub.f32 %v1159, %v1553
        %v2546 = vsub.f32 %v1160, %v1557
        %v2547 = vsub.f32 %v1161, %v1561
        %v2548 = vsub.f32 %v1162, %v1565
        %v2549 = vsub.f32 %v1163, %v1569
        %v2550 = vsub.f32 %v1164, %v1493
        %v2551 = vsub.f32 %v1165, %v1497
        %v2552 = vsub.f32 %v1166, %v1501
        %v2553 = vsub.f32 %v1167, %v1505
        %v2554 = vsub.f32 %v1168, %v1509
        %v2555 = vsub.f32 %v1169, %v1513
        %v2556 = vsub.f32 %v1170, %v1517
        %v2557 = vsub.f32 %v1171, %v1521
        %v2558 = vsub.f32 %v1172, %v1525
        %v2559 = vsub.f32 %v1173, %v1529
        %v2560 = vsub.f32 %v1174, %v1533
        %v2561 = vsub.f32 %v1175, %v1537
        %v2562 = vsub.f32 %v1176, %v1541
        %v2563 = vsub.f32 %v1177, %v1545
        %v2564 = vsub.f32 %v1178, %v1549
        %v2565 = vsub.f32 %v1179, %v1553
        %v2566 = vsub.f32 %v1180, %v1557
        %v2567 = vsub.f32 %v1181, %v1561
        %v2568 = vsub.f32 %v1182, %v1565
        %v2569 = vsub.f32 %v1183, %v1569
        %v2570 = vsub.f32 %v1184, %v1493
        %v2571 = vsub.f32 %v1185, %v1497
        %v2572 = vsub.f32 %v1186, %v1501
        %v2573 = vsub.f32 %v1187, %v1505
        %v2574 = vsub.f32 %v1188, %v1509
        %v2575 = vsub.f32 %v1189, %v1513
        %v2576 = vsub.f32 %v1190, %v1517
        %v2577 = vsub.f32 %v1191, %v1521
        %v2578 = vsub.f32 %v1192, %v1525
        %v2579 = vsub.f32 %v1193, %v1529
        %v2580 = vsub.f32 %v1194, %v1533
        %v2581 = vsub.f32 %v1195, %v1537
        %v2582 = vsub.f32 %v1196, %v1541
        %v2583 = vsub.f32 %v1197, %v1545
        %v2584 = vsub.f32 %v1198, %v1549
        %v2585 = vsub.f32 %v1199, %v1553
        %v2586 = vsub.f32 %v1200, %v1557
        %v2587 = vsub.f32 %v1201, %v1561
        %v2588 = vsub.f32 %v1202, %v1565
        %v2589 = vsub.f32 %v1203, %v1569
        %v2590 = vsub.f32 %v1204, %v1493
        %v2591 = vsub.f32 %v1205, %v1497
        %v2592 = vsub.f32 %v1206, %v1501
        %v2593 = vsub.f32 %v1207, %v1505
        %v2594 = vsub.f32 %v1208, %v1509
        %v2595 = vsub.f32 %v1209, %v1513
        %v2596 = vsub.f32 %v1210, %v1517
        %v2597 = vsub.f32 %v1211, %v1521
        %v2598 = vsub.f32 %v1212, %v1525
        %v2599 = vsub.f32 %v1213, %v1529
        %v2600 = vsub.f32 %v1214, %v1533
        %v2601 = vsub.f32 %v1215, %v1537
        %v2602 = vsub.f32 %v1216, %v1541
        %v2603 = vsub.f32 %v1217, %v1545
        %v2604 = vsub.f32 %v1218, %v1549
        %v2605 = vsub.f32 %v1219, %v1553
        %v2606 = vsub.f32 %v1220, %v1557
        %v2607 = vsub.f32 %v1221, %v1561
        %v2608 = vsub.f32 %v1222, %v1565
        %v2609 = vsub.f32 %v1223, %v1569
        %v2610 = vsub.f32 %v1224, %v1493
        %v2611 = vsub.f32 %v1225, %v1497
        %v2612 = vsub.f32 %v1226, %v1501
        %v2613 = vsub.f32 %v1227, %v1505
        %v2614 = vsub.f32 %v1228, %v1509
        %v2615 = vsub.f32 %v1229, %v1513
        %v2616 = vsub.f32 %v1230, %v1517
        %v2617 = vsub.f32 %v1231, %v1521
        %v2618 = vsub.f32 %v1232, %v1525
        %v2619 = vsub.f32 %v1233, %v1529
        %v2620 = vsub.f32 %v1234, %v1533
        %v2621 = vsub.f32 %v1235, %v1537
        %v2622 = vsub.f32 %v1236, %v1541
        %v2623 = vsub.f32 %v1237, %v1545
        %v2624 = vsub.f32 %v1238, %v1549
        %v2625 = vsub.f32 %v1239, %v1553
        %v2626 = vsub.f32 %v1240, %v1557
        %v2627 = vsub.f32 %v1241, %v1561
        %v2628 = vsub.f32 %v1242, %v1565
        %v2629 = vsub.f32 %v1243, %v1569
        %v2630 = vsub.f32 %v1244, %v1493
        %v2631 = vsub.f32 %v1245, %v1497
        %v2632 = vsub.f32 %v1246, %v1501
        %v2633 = vsub.f32 %v1247, %v1505
        %v2634 = vsub.f32 %v1248, %v1509
        %v2635 = vsub.f32 %v1249, %v1513
        %v2636 = vsub.f32 %v1250, %v1517
        %v2637 = vsub.f32 %v1251, %v1521
        %v2638 = vsub.f32 %v1252, %v1525
        %v2639 = vsub.f32 %v1253, %v1529
        %v2640 = vsub.f32 %v1254, %v1533
        %v2641 = vsub.f32 %v1255, %v1537
        %v2642 = vsub.f32 %v1256, %v1541
        %v2643 = vsub.f32 %v1257, %v1545
        %v2644 = vsub.f32 %v1258, %v1549
        %v2645 = vsub.f32 %v1259, %v1553
        %v2646 = vsub.f32 %v1260, %v1557
        %v2647 = vsub.f32 %v1261, %v1561
        %v2648 = vsub.f32 %v1262, %v1565
        %v2649 = vsub.f32 %v1263, %v1569
        %v2650 = vsub.f32 %v1264, %v1493
        %v2651 = vsub.f32 %v1265, %v1497
        %v2652 = vsub.f32 %v1266, %v1501
        %v2653 = vsub.f32 %v1267, %v1505
        %v2654 = vsub.f32 %v1268, %v1509
        %v2655 = vsub.f32 %v1269, %v1513
        %v2656 = vsub.f32 %v1270, %v1517
        %v2657 = vsub.f32 %v1271, %v1521
        %v2658 = vsub.f32 %v1272, %v1525
        %v2659 = vsub.f32 %v1273, %v1529
        %v2660 = vsub.f32 %v1274, %v1533
        %v2661 = vsub.f32 %v1275, %v1537
        %v2662 = vsub.f32 %v1276, %v1541
        %v2663 = vsub.f32 %v1277, %v1545
        %v2664 = vsub.f32 %v1278, %v1549
        %v2665 = vsub.f32 %v1279, %v1553
        %v2666 = vsub.f32 %v1280, %v1557
        %v2667 = vsub.f32 %v1281, %v1561
        %v2668 = vsub.f32 %v1282, %v1565
        %v2669 = vsub.f32 %v1283, %v1569
        %v2670 = vsub.f32 %v1284, %v1493
        %v2671 = vsub.f32 %v1285, %v1497
        %v2672 = vsub.f32 %v1286, %v1501
        %v2673 = vsub.f32 %v1287, %v1505
        %v2674 = vsub.f32 %v1288, %v1509
        %v2675 = vsub.f32 %v1289, %v1513
        %v2676 = vsub.f32 %v1290, %v1517
        %v2677 = vsub.f32 %v1291, %v1521
        %v2678 = vsub.f32 %v1292, %v1525
        %v2679 = vsub.f32 %v1293, %v1529
        %v2680 = vsub.f32 %v1294, %v1533
        %v2681 = vsub.f32 %v1295, %v1537
        %v2682 = vsub.f32 %v1296, %v1541
        %v2683 = vsub.f32 %v1297, %v1545
        %v2684 = vsub.f32 %v1298, %v1549
        %v2685 = vsub.f32 %v1299, %v1553
        %v2686 = vsub.f32 %v1300, %v1557
        %v2687 = vsub.f32 %v1301, %v1561
        %v2688 = vsub.f32 %v1302, %v1565
        %v2689 = vsub.f32 %v1303, %v1569
        %v2690 = vsub.f32 %v1304, %v1493
        %v2691 = vsub.f32 %v1305, %v1497
        %v2692 = vsub.f32 %v1306, %v1501
        %v2693 = vsub.f32 %v1307, %v1505
        %v2694 = vsub.f32 %v1308, %v1509
        %v2695 = vsub.f32 %v1309, %v1513
        %v2696 = vsub.f32 %v1310, %v1517
        %v2697 = vsub.f32 %v1311, %v1521
        %v2698 = vsub.f32 %v1312, %v1525
        %v2699 = vsub.f32 %v1313, %v1529
        %v2700 = vsub.f32 %v1314, %v1533
        %v2701 = vsub.f32 %v1315, %v1537
        %v2702 = vsub.f32 %v1316, %v1541
        %v2703 = vsub.f32 %v1317, %v1545
        %v2704 = vsub.f32 %v1318, %v1549
        %v2705 = vsub.f32 %v1319, %v1553
        %v2706 = vsub.f32 %v1320, %v1557
        %v2707 = vsub.f32 %v1321, %v1561
        %v2708 = vsub.f32 %v1322, %v1565
        %v2709 = vsub.f32 %v1323, %v1569
        %v2710 = vsub.f32 %v1324, %v1493
        %v2711 = vsub.f32 %v1325, %v1497
        %v2712 = vsub.f32 %v1326, %v1501
        %v2713 = vsub.f32 %v1327, %v1505
        %v2714 = vsub.f32 %v1328, %v1509
        %v2715 = vsub.f32 %v1329, %v1513
        %v2716 = vsub.f32 %v1330, %v1517
        %v2717 = vsub.f32 %v1331, %v1521
        %v2718 = vsub.f32 %v1332, %v1525
        %v2719 = vsub.f32 %v1333, %v1529
        %v2720 = vsub.f32 %v1334, %v1533
        %v2721 = vsub.f32 %v1335, %v1537
        %v2722 = vsub.f32 %v1336, %v1541
        %v2723 = vsub.f32 %v1337, %v1545
        %v2724 = vsub.f32 %v1338, %v1549
        %v2725 = vsub.f32 %v1339, %v1553
        %v2726 = vsub.f32 %v1340, %v1557
        %v2727 = vsub.f32 %v1341, %v1561
        %v2728 = vsub.f32 %v1342, %v1565
        %v2729 = vsub.f32 %v1343, %v1569
        %v2730 = vsub.f32 %v1344, %v1493
        %v2731 = vsub.f32 %v1345, %v1497
        %v2732 = vsub.f32 %v1346, %v1501
        %v2733 = vsub.f32 %v1347, %v1505
        %v2734 = vsub.f32 %v1348, %v1509
        %v2735 = vsub.f32 %v1349, %v1513
        %v2736 = vsub.f32 %v1350, %v1517
        %v2737 = vsub.f32 %v1351, %v1521
        %v2738 = vsub.f32 %v1352, %v1525
        %v2739 = vsub.f32 %v1353, %v1529
        %v2740 = vsub.f32 %v1354, %v1533
        %v2741 = vsub.f32 %v1355, %v1537
        %v2742 = vsub.f32 %v1356, %v1541
        %v2743 = vsub.f32 %v1357, %v1545
        %v2744 = vsub.f32 %v1358, %v1549
        %v2745 = vsub.f32 %v1359, %v1553
        %v2746 = vsub.f32 %v1360, %v1557
        %v2747 = vsub.f32 %v1361, %v1561
        %v2748 = vsub.f32 %v1362, %v1565
        %v2749 = vsub.f32 %v1363, %v1569
        %v2750 = vsub.f32 %v1364, %v1493
        %v2751 = vsub.f32 %v1365, %v1497
        %v2752 = vsub.f32 %v1366, %v1501
        %v2753 = vsub.f32 %v1367, %v1505
        %v2754 = vsub.f32 %v1368, %v1509
        %v2755 = vsub.f32 %v1369, %v1513
        %v2756 = vsub.f32 %v1370, %v1517
        %v2757 = vsub.f32 %v1371, %v1521
        %v2758 = vsub.f32 %v1372, %v1525
        %v2759 = vsub.f32 %v1373, %v1529
        %v2760 = vsub.f32 %v1374, %v1533
        %v2761 = vsub.f32 %v1375, %v1537
        %v2762 = vsub.f32 %v1376, %v1541
        %v2763 = vsub.f32 %v1377, %v1545
        %v2764 = vsub.f32 %v1378, %v1549
        %v2765 = vsub.f32 %v1379, %v1553
        %v2766 = vsub.f32 %v1380, %v1557
        %v2767 = vsub.f32 %v1381, %v1561
        %v2768 = vsub.f32 %v1382, %v1565
        %v2769 = vsub.f32 %v1383, %v1569
        %v2770 = vsub.f32 %v1384, %v1493
        %v2771 = vsub.f32 %v1385, %v1497
        %v2772 = vsub.f32 %v1386, %v1501
        %v2773 = vsub.f32 %v1387, %v1505
        %v2774 = vsub.f32 %v1388, %v1509
        %v2775 = vsub.f32 %v1389, %v1513
        %v2776 = vsub.f32 %v1390, %v1517
        %v2777 = vsub.f32 %v1391, %v1521
        %v2778 = vsub.f32 %v1392, %v1525
        %v2779 = vsub.f32 %v1393, %v1529
        %v2780 = vsub.f32 %v1394, %v1533
        %v2781 = vsub.f32 %v1395, %v1537
        %v2782 = vsub.f32 %v1396, %v1541
        %v2783 = vsub.f32 %v1397, %v1545
        %v2784 = vsub.f32 %v1398, %v1549
        %v2785 = vsub.f32 %v1399, %v1553
        %v2786 = vsub.f32 %v1400, %v1557
        %v2787 = vsub.f32 %v1401, %v1561
        %v2788 = vsub.f32 %v1402, %v1565
        %v2789 = vsub.f32 %v1403, %v1569
        %v2790 = vsub.f32 %v1404, %v1493
        %v2791 = vsub.f32 %v1405, %v1497
        %v2792 = vsub.f32 %v1406, %v1501
        %v2793 = vsub.f32 %v1407, %v1505
        %v2794 = vsub.f32 %v1408, %v1509
        %v2795 = vsub.f32 %v1409, %v1513
        %v2796 = vsub.f32 %v1410, %v1517
        %v2797 = vsub.f32 %v1411, %v1521
        %v2798 = vsub.f32 %v1412, %v1525
        %v2799 = vsub.f32 %v1413, %v1529
        %v2800 = vsub.f32 %v1414, %v1533
        %v2801 = vsub.f32 %v1415, %v1537
        %v2802 = vsub.f32 %v1416, %v1541
        %v2803 = vsub.f32 %v1417, %v1545
        %v2804 = vsub.f32 %v1418, %v1549
        %v2805 = vsub.f32 %v1419, %v1553
        %v2806 = vsub.f32 %v1420, %v1557
        %v2807 = vsub.f32 %v1421, %v1561
        %v2808 = vsub.f32 %v1422, %v1565
        %v2809 = vsub.f32 %v1423, %v1569
        %v2810 = vsub.f32 %v1424, %v1493
        %v2811 = vsub.f32 %v1425, %v1497
        %v2812 = vsub.f32 %v1426, %v1501
        %v2813 = vsub.f32 %v1427, %v1505
        %v2814 = vsub.f32 %v1428, %v1509
        %v2815 = vsub.f32 %v1429, %v1513
        %v2816 = vsub.f32 %v1430, %v1517
        %v2817 = vsub.f32 %v1431, %v1521
        %v2818 = vsub.f32 %v1432, %v1525
        %v2819 = vsub.f32 %v1433, %v1529
        %v2820 = vsub.f32 %v1434, %v1533
        %v2821 = vsub.f32 %v1435, %v1537
        %v2822 = vsub.f32 %v1436, %v1541
        %v2823 = vsub.f32 %v1437, %v1545
        %v2824 = vsub.f32 %v1438, %v1549
        %v2825 = vsub.f32 %v1439, %v1553
        %v2826 = vsub.f32 %v1440, %v1557
        %v2827 = vsub.f32 %v1441, %v1561
        %v2828 = vsub.f32 %v1442, %v1565
        %v2829 = vsub.f32 %v1443, %v1569
        %v2830 = vsub.f32 %v1444, %v1493
        %v2831 = vsub.f32 %v1445, %v1497
        %v2832 = vsub.f32 %v1446, %v1501
        %v2833 = vsub.f32 %v1447, %v1505
        %v2834 = vsub.f32 %v1448, %v1509
        %v2835 = vsub.f32 %v1449, %v1513
        %v2836 = vsub.f32 %v1450, %v1517
        %v2837 = vsub.f32 %v1451, %v1521
        %v2838 = vsub.f32 %v1452, %v1525
        %v2839 = vsub.f32 %v1453, %v1529
        %v2840 = vsub.f32 %v1454, %v1533
        %v2841 = vsub.f32 %v1455, %v1537
        %v2842 = vsub.f32 %v1456, %v1541
        %v2843 = vsub.f32 %v1457, %v1545
        %v2844 = vsub.f32 %v1458, %v1549
        %v2845 = vsub.f32 %v1459, %v1553
        %v2846 = vsub.f32 %v1460, %v1557
        %v2847 = vsub.f32 %v1461, %v1561
        %v2848 = vsub.f32 %v1462, %v1565
        %v2849 = vsub.f32 %v1463, %v1569
        %v2850 = vsub.f32 %v1464, %v1493
        %v2851 = vsub.f32 %v1465, %v1497
        %v2852 = vsub.f32 %v1466, %v1501
        %v2853 = vsub.f32 %v1467, %v1505
        %v2854 = vsub.f32 %v1468, %v1509
        %v2855 = vsub.f32 %v1469, %v1513
        %v2856 = vsub.f32 %v1470, %v1517
        %v2857 = vsub.f32 %v1471, %v1521
        %v2858 = vsub.f32 %v1472, %v1525
        %v2859 = vsub.f32 %v1473, %v1529
        %v2860 = vsub.f32 %v1474, %v1533
        %v2861 = vsub.f32 %v1475, %v1537
        %v2862 = vsub.f32 %v1476, %v1541
        %v2863 = vsub.f32 %v1477, %v1545
        %v2864 = vsub.f32 %v1478, %v1549
        %v2865 = vsub.f32 %v1479, %v1553
        %v2866 = vsub.f32 %v1480, %v1557
        %v2867 = vsub.f32 %v1481, %v1561
        %v2868 = vsub.f32 %v1482, %v1565
        %v2869 = vsub.f32 %v1483, %v1569
        %2870 = vst [vmem:[%s194] sm:$0xff] %v1590
        %2871 = vst [vmem:[%s194 + $0x8] sm:$0xff] %v1591
        %2872 = vst [vmem:[%s194 + $0x10] sm:$0xff] %v1592
        %2873 = vst [vmem:[%s194 + $0x18] sm:$0xff] %v1593
        %2874 = vst [vmem:[%s194 + $0x20] sm:$0xff] %v1594
        %2875 = vst [vmem:[%s194 + $0x28] sm:$0xff] %v1595
        %2876 = vst [vmem:[%s194 + $0x30] sm:$0xff] %v1596
        %2877 = vst [vmem:[%s194 + $0x38] sm:$0xff] %v1597
        %2878 = vst [vmem:[%s194 + $0x40] sm:$0xff] %v1598
        %2879 = vst [vmem:[%s194 + $0x48] sm:$0xff] %v1599
        %2880 = vst [vmem:[%s194 + $0x50] sm:$0xff] %v1600
        %2881 = vst [vmem:[%s194 + $0x58] sm:$0xff] %v1601
        %2882 = vst [vmem:[%s194 + $0x60] sm:$0xff] %v1602
        %2883 = vst [vmem:[%s194 + $0x68] sm:$0xff] %v1603
        %2884 = vst [vmem:[%s194 + $0x70] sm:$0xff] %v1604
        %2885 = vst [vmem:[%s194 + $0x78] sm:$0xff] %v1605
        %2886 = vst [vmem:[%s194 + $0x80] sm:$0xff] %v1606
        %2887 = vst [vmem:[%s194 + $0x88] sm:$0xff] %v1607
        %2888 = vst [vmem:[%s194 + $0x90] sm:$0xff] %v1608
        %2889 = vst [vmem:[%s194 + $0x98] sm:$0xff] %v1609
        %2890 = vst [vmem:[%s194 + $0xa0] sm:$0xff] %v1610
        %2891 = vst [vmem:[%s194 + $0xa8] sm:$0xff] %v1611
        %2892 = vst [vmem:[%s194 + $0xb0] sm:$0xff] %v1612
        %2893 = vst [vmem:[%s194 + $0xb8] sm:$0xff] %v1613
        %2894 = vst [vmem:[%s194 + $0xc0] sm:$0xff] %v1614
        %2895 = vst [vmem:[%s194 + $0xc8] sm:$0xff] %v1615
        %2896 = vst [vmem:[%s194 + $0xd0] sm:$0xff] %v1616
        %2897 = vst [vmem:[%s194 + $0xd8] sm:$0xff] %v1617
        %2898 = vst [vmem:[%s194 + $0xe0] sm:$0xff] %v1618
        %2899 = vst [vmem:[%s194 + $0xe8] sm:$0xff] %v1619
        %2900 = vst [vmem:[%s194 + $0xf0] sm:$0xff] %v1620
        %2901 = vst [vmem:[%s194 + $0xf8] sm:$0xff] %v1621
        %2902 = vst [vmem:[%s194 + $0x100] sm:$0xff] %v1622
        %2903 = vst [vmem:[%s194 + $0x108] sm:$0xff] %v1623
        %2904 = vst [vmem:[%s194 + $0x110] sm:$0xff] %v1624
        %2905 = vst [vmem:[%s194 + $0x118] sm:$0xff] %v1625
        %2906 = vst [vmem:[%s194 + $0x120] sm:$0xff] %v1626
        %2907 = vst [vmem:[%s194 + $0x128] sm:$0xff] %v1627
        %2908 = vst [vmem:[%s194 + $0x130] sm:$0xff] %v1628
        %2909 = vst [vmem:[%s194 + $0x138] sm:$0xff] %v1629
        %2910 = vst [vmem:[%s194 + $0x140] sm:$0xff] %v1630
        %2911 = vst [vmem:[%s194 + $0x148] sm:$0xff] %v1631
        %2912 = vst [vmem:[%s194 + $0x150] sm:$0xff] %v1632
        %2913 = vst [vmem:[%s194 + $0x158] sm:$0xff] %v1633
        %2914 = vst [vmem:[%s194 + $0x160] sm:$0xff] %v1634
        %2915 = vst [vmem:[%s194 + $0x168] sm:$0xff] %v1635
        %2916 = vst [vmem:[%s194 + $0x170] sm:$0xff] %v1636
        %2917 = vst [vmem:[%s194 + $0x178] sm:$0xff] %v1637
        %2918 = vst [vmem:[%s194 + $0x180] sm:$0xff] %v1638
        %2919 = vst [vmem:[%s194 + $0x188] sm:$0xff] %v1639
        %2920 = vst [vmem:[%s194 + $0x190] sm:$0xff] %v1640
        %2921 = vst [vmem:[%s194 + $0x198] sm:$0xff] %v1641
        %2922 = vst [vmem:[%s194 + $0x1a0] sm:$0xff] %v1642
        %2923 = vst [vmem:[%s194 + $0x1a8] sm:$0xff] %v1643
        %2924 = vst [vmem:[%s194 + $0x1b0] sm:$0xff] %v1644
        %2925 = vst [vmem:[%s194 + $0x1b8] sm:$0xff] %v1645
        %2926 = vst [vmem:[%s194 + $0x1c0] sm:$0xff] %v1646
        %2927 = vst [vmem:[%s194 + $0x1c8] sm:$0xff] %v1647
        %2928 = vst [vmem:[%s194 + $0x1d0] sm:$0xff] %v1648
        %2929 = vst [vmem:[%s194 + $0x1d8] sm:$0xff] %v1649
        %2930 = vst [vmem:[%s194 + $0x1e0] sm:$0xff] %v1650
        %2931 = vst [vmem:[%s194 + $0x1e8] sm:$0xff] %v1651
        %2932 = vst [vmem:[%s194 + $0x1f0] sm:$0xff] %v1652
        %2933 = vst [vmem:[%s194 + $0x1f8] sm:$0xff] %v1653
        %2934 = vst [vmem:[%s194 + $0x200] sm:$0xff] %v1654
        %2935 = vst [vmem:[%s194 + $0x208] sm:$0xff] %v1655
        %2936 = vst [vmem:[%s194 + $0x210] sm:$0xff] %v1656
        %2937 = vst [vmem:[%s194 + $0x218] sm:$0xff] %v1657
        %2938 = vst [vmem:[%s194 + $0x220] sm:$0xff] %v1658
        %2939 = vst [vmem:[%s194 + $0x228] sm:$0xff] %v1659
        %2940 = vst [vmem:[%s194 + $0x230] sm:$0xff] %v1660
        %2941 = vst [vmem:[%s194 + $0x238] sm:$0xff] %v1661
        %2942 = vst [vmem:[%s194 + $0x240] sm:$0xff] %v1662
        %2943 = vst [vmem:[%s194 + $0x248] sm:$0xff] %v1663
        %2944 = vst [vmem:[%s194 + $0x250] sm:$0xff] %v1664
        %2945 = vst [vmem:[%s194 + $0x258] sm:$0xff] %v1665
        %2946 = vst [vmem:[%s194 + $0x260] sm:$0xff] %v1666
        %2947 = vst [vmem:[%s194 + $0x268] sm:$0xff] %v1667
        %2948 = vst [vmem:[%s194 + $0x270] sm:$0xff] %v1668
        %2949 = vst [vmem:[%s194 + $0x278] sm:$0xff] %v1669
        %2950 = vst [vmem:[%s194 + $0x280] sm:$0xff] %v1670
        %2951 = vst [vmem:[%s194 + $0x288] sm:$0xff] %v1671
        %2952 = vst [vmem:[%s194 + $0x290] sm:$0xff] %v1672
        %2953 = vst [vmem:[%s194 + $0x298] sm:$0xff] %v1673
        %2954 = vst [vmem:[%s194 + $0x2a0] sm:$0xff] %v1674
        %2955 = vst [vmem:[%s194 + $0x2a8] sm:$0xff] %v1675
        %2956 = vst [vmem:[%s194 + $0x2b0] sm:$0xff] %v1676
        %2957 = vst [vmem:[%s194 + $0x2b8] sm:$0xff] %v1677
        %2958 = vst [vmem:[%s194 + $0x2c0] sm:$0xff] %v1678
        %2959 = vst [vmem:[%s194 + $0x2c8] sm:$0xff] %v1679
        %2960 = vst [vmem:[%s194 + $0x2d0] sm:$0xff] %v1680
        %2961 = vst [vmem:[%s194 + $0x2d8] sm:$0xff] %v1681
        %2962 = vst [vmem:[%s194 + $0x2e0] sm:$0xff] %v1682
        %2963 = vst [vmem:[%s194 + $0x2e8] sm:$0xff] %v1683
        %2964 = vst [vmem:[%s194 + $0x2f0] sm:$0xff] %v1684
        %2965 = vst [vmem:[%s194 + $0x2f8] sm:$0xff] %v1685
        %2966 = vst [vmem:[%s194 + $0x300] sm:$0xff] %v1686
        %2967 = vst [vmem:[%s194 + $0x308] sm:$0xff] %v1687
        %2968 = vst [vmem:[%s194 + $0x310] sm:$0xff] %v1688
        %2969 = vst [vmem:[%s194 + $0x318] sm:$0xff] %v1689
        %2970 = vst [vmem:[%s194 + $0x320] sm:$0xff] %v1690
        %2971 = vst [vmem:[%s194 + $0x328] sm:$0xff] %v1691
        %2972 = vst [vmem:[%s194 + $0x330] sm:$0xff] %v1692
        %2973 = vst [vmem:[%s194 + $0x338] sm:$0xff] %v1693
        %2974 = vst [vmem:[%s194 + $0x340] sm:$0xff] %v1694
        %2975 = vst [vmem:[%s194 + $0x348] sm:$0xff] %v1695
        %2976 = vst [vmem:[%s194 + $0x350] sm:$0xff] %v1696
        %2977 = vst [vmem:[%s194 + $0x358] sm:$0xff] %v1697
        %2978 = vst [vmem:[%s194 + $0x360] sm:$0xff] %v1698
        %2979 = vst [vmem:[%s194 + $0x368] sm:$0xff] %v1699
        %2980 = vst [vmem:[%s194 + $0x370] sm:$0xff] %v1700
        %2981 = vst [vmem:[%s194 + $0x378] sm:$0xff] %v1701
        %2982 = vst [vmem:[%s194 + $0x380] sm:$0xff] %v1702
        %2983 = vst [vmem:[%s194 + $0x388] sm:$0xff] %v1703
        %2984 = vst [vmem:[%s194 + $0x390] sm:$0xff] %v1704
        %2985 = vst [vmem:[%s194 + $0x398] sm:$0xff] %v1705
        %2986 = vst [vmem:[%s194 + $0x3a0] sm:$0xff] %v1706
        %2987 = vst [vmem:[%s194 + $0x3a8] sm:$0xff] %v1707
        %2988 = vst [vmem:[%s194 + $0x3b0] sm:$0xff] %v1708
        %2989 = vst [vmem:[%s194 + $0x3b8] sm:$0xff] %v1709
        %2990 = vst [vmem:[%s194 + $0x3c0] sm:$0xff] %v1710
        %2991 = vst [vmem:[%s194 + $0x3c8] sm:$0xff] %v1711
        %2992 = vst [vmem:[%s194 + $0x3d0] sm:$0xff] %v1712
        %2993 = vst [vmem:[%s194 + $0x3d8] sm:$0xff] %v1713
        %2994 = vst [vmem:[%s194 + $0x3e0] sm:$0xff] %v1714
        %2995 = vst [vmem:[%s194 + $0x3e8] sm:$0xff] %v1715
        %2996 = vst [vmem:[%s194 + $0x3f0] sm:$0xff] %v1716
        %2997 = vst [vmem:[%s194 + $0x3f8] sm:$0xff] %v1717
        %2998 = vst [vmem:[%s194 + $0x400] sm:$0xff] %v1718
        %2999 = vst [vmem:[%s194 + $0x408] sm:$0xff] %v1719
        %3000 = vst [vmem:[%s194 + $0x410] sm:$0xff] %v1720
        %3001 = vst [vmem:[%s194 + $0x418] sm:$0xff] %v1721
        %3002 = vst [vmem:[%s194 + $0x420] sm:$0xff] %v1722
        %3003 = vst [vmem:[%s194 + $0x428] sm:$0xff] %v1723
        %3004 = vst [vmem:[%s194 + $0x430] sm:$0xff] %v1724
        %3005 = vst [vmem:[%s194 + $0x438] sm:$0xff] %v1725
        %3006 = vst [vmem:[%s194 + $0x440] sm:$0xff] %v1726
        %3007 = vst [vmem:[%s194 + $0x448] sm:$0xff] %v1727
        %3008 = vst [vmem:[%s194 + $0x450] sm:$0xff] %v1728
        %3009 = vst [vmem:[%s194 + $0x458] sm:$0xff] %v1729
        %3010 = vst [vmem:[%s194 + $0x460] sm:$0xff] %v1730
        %3011 = vst [vmem:[%s194 + $0x468] sm:$0xff] %v1731
        %3012 = vst [vmem:[%s194 + $0x470] sm:$0xff] %v1732
        %3013 = vst [vmem:[%s194 + $0x478] sm:$0xff] %v1733
        %3014 = vst [vmem:[%s194 + $0x480] sm:$0xff] %v1734
        %3015 = vst [vmem:[%s194 + $0x488] sm:$0xff] %v1735
        %3016 = vst [vmem:[%s194 + $0x490] sm:$0xff] %v1736
        %3017 = vst [vmem:[%s194 + $0x498] sm:$0xff] %v1737
        %3018 = vst [vmem:[%s194 + $0x4a0] sm:$0xff] %v1738
        %3019 = vst [vmem:[%s194 + $0x4a8] sm:$0xff] %v1739
        %3020 = vst [vmem:[%s194 + $0x4b0] sm:$0xff] %v1740
        %3021 = vst [vmem:[%s194 + $0x4b8] sm:$0xff] %v1741
        %3022 = vst [vmem:[%s194 + $0x4c0] sm:$0xff] %v1742
        %3023 = vst [vmem:[%s194 + $0x4c8] sm:$0xff] %v1743
        %3024 = vst [vmem:[%s194 + $0x4d0] sm:$0xff] %v1744
        %3025 = vst [vmem:[%s194 + $0x4d8] sm:$0xff] %v1745
        %3026 = vst [vmem:[%s194 + $0x4e0] sm:$0xff] %v1746
        %3027 = vst [vmem:[%s194 + $0x4e8] sm:$0xff] %v1747
        %3028 = vst [vmem:[%s194 + $0x4f0] sm:$0xff] %v1748
        %3029 = vst [vmem:[%s194 + $0x4f8] sm:$0xff] %v1749
        %3030 = vst [vmem:[%s194 + $0x500] sm:$0xff] %v1750
        %3031 = vst [vmem:[%s194 + $0x508] sm:$0xff] %v1751
        %3032 = vst [vmem:[%s194 + $0x510] sm:$0xff] %v1752
        %3033 = vst [vmem:[%s194 + $0x518] sm:$0xff] %v1753
        %3034 = vst [vmem:[%s194 + $0x520] sm:$0xff] %v1754
        %3035 = vst [vmem:[%s194 + $0x528] sm:$0xff] %v1755
        %3036 = vst [vmem:[%s194 + $0x530] sm:$0xff] %v1756
        %3037 = vst [vmem:[%s194 + $0x538] sm:$0xff] %v1757
        %3038 = vst [vmem:[%s194 + $0x540] sm:$0xff] %v1758
        %3039 = vst [vmem:[%s194 + $0x548] sm:$0xff] %v1759
        %3040 = vst [vmem:[%s194 + $0x550] sm:$0xff] %v1760
        %3041 = vst [vmem:[%s194 + $0x558] sm:$0xff] %v1761
        %3042 = vst [vmem:[%s194 + $0x560] sm:$0xff] %v1762
        %3043 = vst [vmem:[%s194 + $0x568] sm:$0xff] %v1763
        %3044 = vst [vmem:[%s194 + $0x570] sm:$0xff] %v1764
        %3045 = vst [vmem:[%s194 + $0x578] sm:$0xff] %v1765
        %3046 = vst [vmem:[%s194 + $0x580] sm:$0xff] %v1766
        %3047 = vst [vmem:[%s194 + $0x588] sm:$0xff] %v1767
        %3048 = vst [vmem:[%s194 + $0x590] sm:$0xff] %v1768
        %3049 = vst [vmem:[%s194 + $0x598] sm:$0xff] %v1769
        %3050 = vst [vmem:[%s194 + $0x5a0] sm:$0xff] %v1770
        %3051 = vst [vmem:[%s194 + $0x5a8] sm:$0xff] %v1771
        %3052 = vst [vmem:[%s194 + $0x5b0] sm:$0xff] %v1772
        %3053 = vst [vmem:[%s194 + $0x5b8] sm:$0xff] %v1773
        %3054 = vst [vmem:[%s194 + $0x5c0] sm:$0xff] %v1774
        %3055 = vst [vmem:[%s194 + $0x5c8] sm:$0xff] %v1775
        %3056 = vst [vmem:[%s194 + $0x5d0] sm:$0xff] %v1776
        %3057 = vst [vmem:[%s194 + $0x5d8] sm:$0xff] %v1777
        %3058 = vst [vmem:[%s194 + $0x5e0] sm:$0xff] %v1778
        %3059 = vst [vmem:[%s194 + $0x5e8] sm:$0xff] %v1779
        %3060 = vst [vmem:[%s194 + $0x5f0] sm:$0xff] %v1780
        %3061 = vst [vmem:[%s194 + $0x5f8] sm:$0xff] %v1781
        %3062 = vst [vmem:[%s194 + $0x600] sm:$0xff] %v1782
        %3063 = vst [vmem:[%s194 + $0x608] sm:$0xff] %v1783
        %3064 = vst [vmem:[%s194 + $0x610] sm:$0xff] %v1784
        %3065 = vst [vmem:[%s194 + $0x618] sm:$0xff] %v1785
        %3066 = vst [vmem:[%s194 + $0x620] sm:$0xff] %v1786
        %3067 = vst [vmem:[%s194 + $0x628] sm:$0xff] %v1787
        %3068 = vst [vmem:[%s194 + $0x630] sm:$0xff] %v1788
        %3069 = vst [vmem:[%s194 + $0x638] sm:$0xff] %v1789
        %3070 = vst [vmem:[%s194 + $0x640] sm:$0xff] %v1790
        %3071 = vst [vmem:[%s194 + $0x648] sm:$0xff] %v1791
        %3072 = vst [vmem:[%s194 + $0x650] sm:$0xff] %v1792
        %3073 = vst [vmem:[%s194 + $0x658] sm:$0xff] %v1793
        %3074 = vst [vmem:[%s194 + $0x660] sm:$0xff] %v1794
        %3075 = vst [vmem:[%s194 + $0x668] sm:$0xff] %v1795
        %3076 = vst [vmem:[%s194 + $0x670] sm:$0xff] %v1796
        %3077 = vst [vmem:[%s194 + $0x678] sm:$0xff] %v1797
        %3078 = vst [vmem:[%s194 + $0x680] sm:$0xff] %v1798
        %3079 = vst [vmem:[%s194 + $0x688] sm:$0xff] %v1799
        %3080 = vst [vmem:[%s194 + $0x690] sm:$0xff] %v1800
        %3081 = vst [vmem:[%s194 + $0x698] sm:$0xff] %v1801
        %3082 = vst [vmem:[%s194 + $0x6a0] sm:$0xff] %v1802
        %3083 = vst [vmem:[%s194 + $0x6a8] sm:$0xff] %v1803
        %3084 = vst [vmem:[%s194 + $0x6b0] sm:$0xff] %v1804
        %3085 = vst [vmem:[%s194 + $0x6b8] sm:$0xff] %v1805
        %3086 = vst [vmem:[%s194 + $0x6c0] sm:$0xff] %v1806
        %3087 = vst [vmem:[%s194 + $0x6c8] sm:$0xff] %v1807
        %3088 = vst [vmem:[%s194 + $0x6d0] sm:$0xff] %v1808
        %3089 = vst [vmem:[%s194 + $0x6d8] sm:$0xff] %v1809
        %3090 = vst [vmem:[%s194 + $0x6e0] sm:$0xff] %v1810
        %3091 = vst [vmem:[%s194 + $0x6e8] sm:$0xff] %v1811
        %3092 = vst [vmem:[%s194 + $0x6f0] sm:$0xff] %v1812
        %3093 = vst [vmem:[%s194 + $0x6f8] sm:$0xff] %v1813
        %3094 = vst [vmem:[%s194 + $0x700] sm:$0xff] %v1814
        %3095 = vst [vmem:[%s194 + $0x708] sm:$0xff] %v1815
        %3096 = vst [vmem:[%s194 + $0x710] sm:$0xff] %v1816
        %3097 = vst [vmem:[%s194 + $0x718] sm:$0xff] %v1817
        %3098 = vst [vmem:[%s194 + $0x720] sm:$0xff] %v1818
        %3099 = vst [vmem:[%s194 + $0x728] sm:$0xff] %v1819
        %3100 = vst [vmem:[%s194 + $0x730] sm:$0xff] %v1820
        %3101 = vst [vmem:[%s194 + $0x738] sm:$0xff] %v1821
        %3102 = vst [vmem:[%s194 + $0x740] sm:$0xff] %v1822
        %3103 = vst [vmem:[%s194 + $0x748] sm:$0xff] %v1823
        %3104 = vst [vmem:[%s194 + $0x750] sm:$0xff] %v1824
        %3105 = vst [vmem:[%s194 + $0x758] sm:$0xff] %v1825
        %3106 = vst [vmem:[%s194 + $0x760] sm:$0xff] %v1826
        %3107 = vst [vmem:[%s194 + $0x768] sm:$0xff] %v1827
        %3108 = vst [vmem:[%s194 + $0x770] sm:$0xff] %v1828
        %3109 = vst [vmem:[%s194 + $0x778] sm:$0xff] %v1829
        %3110 = vst [vmem:[%s194 + $0x780] sm:$0xff] %v1830
        %3111 = vst [vmem:[%s194 + $0x788] sm:$0xff] %v1831
        %3112 = vst [vmem:[%s194 + $0x790] sm:$0xff] %v1832
        %3113 = vst [vmem:[%s194 + $0x798] sm:$0xff] %v1833
        %3114 = vst [vmem:[%s194 + $0x7a0] sm:$0xff] %v1834
        %3115 = vst [vmem:[%s194 + $0x7a8] sm:$0xff] %v1835
        %3116 = vst [vmem:[%s194 + $0x7b0] sm:$0xff] %v1836
        %3117 = vst [vmem:[%s194 + $0x7b8] sm:$0xff] %v1837
        %3118 = vst [vmem:[%s194 + $0x7c0] sm:$0xff] %v1838
        %3119 = vst [vmem:[%s194 + $0x7c8] sm:$0xff] %v1839
        %3120 = vst [vmem:[%s194 + $0x7d0] sm:$0xff] %v1840
        %3121 = vst [vmem:[%s194 + $0x7d8] sm:$0xff] %v1841
        %3122 = vst [vmem:[%s194 + $0x7e0] sm:$0xff] %v1842
        %3123 = vst [vmem:[%s194 + $0x7e8] sm:$0xff] %v1843
        %3124 = vst [vmem:[%s194 + $0x7f0] sm:$0xff] %v1844
        %3125 = vst [vmem:[%s194 + $0x7f8] sm:$0xff] %v1845
        %3126 = vst [vmem:[%s194 + $0x800] sm:$0xff] %v1846
        %3127 = vst [vmem:[%s194 + $0x808] sm:$0xff] %v1847
        %3128 = vst [vmem:[%s194 + $0x810] sm:$0xff] %v1848
        %3129 = vst [vmem:[%s194 + $0x818] sm:$0xff] %v1849
        %3130 = vst [vmem:[%s194 + $0x820] sm:$0xff] %v1850
        %3131 = vst [vmem:[%s194 + $0x828] sm:$0xff] %v1851
        %3132 = vst [vmem:[%s194 + $0x830] sm:$0xff] %v1852
        %3133 = vst [vmem:[%s194 + $0x838] sm:$0xff] %v1853
        %3134 = vst [vmem:[%s194 + $0x840] sm:$0xff] %v1854
        %3135 = vst [vmem:[%s194 + $0x848] sm:$0xff] %v1855
        %3136 = vst [vmem:[%s194 + $0x850] sm:$0xff] %v1856
        %3137 = vst [vmem:[%s194 + $0x858] sm:$0xff] %v1857
        %3138 = vst [vmem:[%s194 + $0x860] sm:$0xff] %v1858
        %3139 = vst [vmem:[%s194 + $0x868] sm:$0xff] %v1859
        %3140 = vst [vmem:[%s194 + $0x870] sm:$0xff] %v1860
        %3141 = vst [vmem:[%s194 + $0x878] sm:$0xff] %v1861
        %3142 = vst [vmem:[%s194 + $0x880] sm:$0xff] %v1862
        %3143 = vst [vmem:[%s194 + $0x888] sm:$0xff] %v1863
        %3144 = vst [vmem:[%s194 + $0x890] sm:$0xff] %v1864
        %3145 = vst [vmem:[%s194 + $0x898] sm:$0xff] %v1865
        %3146 = vst [vmem:[%s194 + $0x8a0] sm:$0xff] %v1866
        %3147 = vst [vmem:[%s194 + $0x8a8] sm:$0xff] %v1867
        %3148 = vst [vmem:[%s194 + $0x8b0] sm:$0xff] %v1868
        %3149 = vst [vmem:[%s194 + $0x8b8] sm:$0xff] %v1869
        %3150 = vst [vmem:[%s194 + $0x8c0] sm:$0xff] %v1870
        %3151 = vst [vmem:[%s194 + $0x8c8] sm:$0xff] %v1871
        %3152 = vst [vmem:[%s194 + $0x8d0] sm:$0xff] %v1872
        %3153 = vst [vmem:[%s194 + $0x8d8] sm:$0xff] %v1873
        %3154 = vst [vmem:[%s194 + $0x8e0] sm:$0xff] %v1874
        %3155 = vst [vmem:[%s194 + $0x8e8] sm:$0xff] %v1875
        %3156 = vst [vmem:[%s194 + $0x8f0] sm:$0xff] %v1876
        %3157 = vst [vmem:[%s194 + $0x8f8] sm:$0xff] %v1877
        %3158 = vst [vmem:[%s194 + $0x900] sm:$0xff] %v1878
        %3159 = vst [vmem:[%s194 + $0x908] sm:$0xff] %v1879
        %3160 = vst [vmem:[%s194 + $0x910] sm:$0xff] %v1880
        %3161 = vst [vmem:[%s194 + $0x918] sm:$0xff] %v1881
        %3162 = vst [vmem:[%s194 + $0x920] sm:$0xff] %v1882
        %3163 = vst [vmem:[%s194 + $0x928] sm:$0xff] %v1883
        %3164 = vst [vmem:[%s194 + $0x930] sm:$0xff] %v1884
        %3165 = vst [vmem:[%s194 + $0x938] sm:$0xff] %v1885
        %3166 = vst [vmem:[%s194 + $0x940] sm:$0xff] %v1886
        %3167 = vst [vmem:[%s194 + $0x948] sm:$0xff] %v1887
        %3168 = vst [vmem:[%s194 + $0x950] sm:$0xff] %v1888
        %3169 = vst [vmem:[%s194 + $0x958] sm:$0xff] %v1889
        %3170 = vst [vmem:[%s194 + $0x960] sm:$0xff] %v1890
        %3171 = vst [vmem:[%s194 + $0x968] sm:$0xff] %v1891
        %3172 = vst [vmem:[%s194 + $0x970] sm:$0xff] %v1892
        %3173 = vst [vmem:[%s194 + $0x978] sm:$0xff] %v1893
        %3174 = vst [vmem:[%s194 + $0x980] sm:$0xff] %v1894
        %3175 = vst [vmem:[%s194 + $0x988] sm:$0xff] %v1895
        %3176 = vst [vmem:[%s194 + $0x990] sm:$0xff] %v1896
        %3177 = vst [vmem:[%s194 + $0x998] sm:$0xff] %v1897
        %3178 = vst [vmem:[%s194 + $0x9a0] sm:$0xff] %v1898
        %3179 = vst [vmem:[%s194 + $0x9a8] sm:$0xff] %v1899
        %3180 = vst [vmem:[%s194 + $0x9b0] sm:$0xff] %v1900
        %3181 = vst [vmem:[%s194 + $0x9b8] sm:$0xff] %v1901
        %3182 = vst [vmem:[%s194 + $0x9c0] sm:$0xff] %v1902
        %3183 = vst [vmem:[%s194 + $0x9c8] sm:$0xff] %v1903
        %3184 = vst [vmem:[%s194 + $0x9d0] sm:$0xff] %v1904
        %3185 = vst [vmem:[%s194 + $0x9d8] sm:$0xff] %v1905
        %3186 = vst [vmem:[%s194 + $0x9e0] sm:$0xff] %v1906
        %3187 = vst [vmem:[%s194 + $0x9e8] sm:$0xff] %v1907
        %3188 = vst [vmem:[%s194 + $0x9f0] sm:$0xff] %v1908
        %3189 = vst [vmem:[%s194 + $0x9f8] sm:$0xff] %v1909
        %3190 = vst [vmem:[%s194 + $0xa00] sm:$0xff] %v1910
        %3191 = vst [vmem:[%s194 + $0xa08] sm:$0xff] %v1911
        %3192 = vst [vmem:[%s194 + $0xa10] sm:$0xff] %v1912
        %3193 = vst [vmem:[%s194 + $0xa18] sm:$0xff] %v1913
        %3194 = vst [vmem:[%s194 + $0xa20] sm:$0xff] %v1914
        %3195 = vst [vmem:[%s194 + $0xa28] sm:$0xff] %v1915
        %3196 = vst [vmem:[%s194 + $0xa30] sm:$0xff] %v1916
        %3197 = vst [vmem:[%s194 + $0xa38] sm:$0xff] %v1917
        %3198 = vst [vmem:[%s194 + $0xa40] sm:$0xff] %v1918
        %3199 = vst [vmem:[%s194 + $0xa48] sm:$0xff] %v1919
        %3200 = vst [vmem:[%s194 + $0xa50] sm:$0xff] %v1920
        %3201 = vst [vmem:[%s194 + $0xa58] sm:$0xff] %v1921
        %3202 = vst [vmem:[%s194 + $0xa60] sm:$0xff] %v1922
        %3203 = vst [vmem:[%s194 + $0xa68] sm:$0xff] %v1923
        %3204 = vst [vmem:[%s194 + $0xa70] sm:$0xff] %v1924
        %3205 = vst [vmem:[%s194 + $0xa78] sm:$0xff] %v1925
        %3206 = vst [vmem:[%s194 + $0xa80] sm:$0xff] %v1926
        %3207 = vst [vmem:[%s194 + $0xa88] sm:$0xff] %v1927
        %3208 = vst [vmem:[%s194 + $0xa90] sm:$0xff] %v1928
        %3209 = vst [vmem:[%s194 + $0xa98] sm:$0xff] %v1929
        %3210 = vst [vmem:[%s194 + $0xaa0] sm:$0xff] %v1930
        %3211 = vst [vmem:[%s194 + $0xaa8] sm:$0xff] %v1931
        %3212 = vst [vmem:[%s194 + $0xab0] sm:$0xff] %v1932
        %3213 = vst [vmem:[%s194 + $0xab8] sm:$0xff] %v1933
        %3214 = vst [vmem:[%s194 + $0xac0] sm:$0xff] %v1934
        %3215 = vst [vmem:[%s194 + $0xac8] sm:$0xff] %v1935
        %3216 = vst [vmem:[%s194 + $0xad0] sm:$0xff] %v1936
        %3217 = vst [vmem:[%s194 + $0xad8] sm:$0xff] %v1937
        %3218 = vst [vmem:[%s194 + $0xae0] sm:$0xff] %v1938
        %3219 = vst [vmem:[%s194 + $0xae8] sm:$0xff] %v1939
        %3220 = vst [vmem:[%s194 + $0xaf0] sm:$0xff] %v1940
        %3221 = vst [vmem:[%s194 + $0xaf8] sm:$0xff] %v1941
        %3222 = vst [vmem:[%s194 + $0xb00] sm:$0xff] %v1942
        %3223 = vst [vmem:[%s194 + $0xb08] sm:$0xff] %v1943
        %3224 = vst [vmem:[%s194 + $0xb10] sm:$0xff] %v1944
        %3225 = vst [vmem:[%s194 + $0xb18] sm:$0xff] %v1945
        %3226 = vst [vmem:[%s194 + $0xb20] sm:$0xff] %v1946
        %3227 = vst [vmem:[%s194 + $0xb28] sm:$0xff] %v1947
        %3228 = vst [vmem:[%s194 + $0xb30] sm:$0xff] %v1948
        %3229 = vst [vmem:[%s194 + $0xb38] sm:$0xff] %v1949
        %3230 = vst [vmem:[%s194 + $0xb40] sm:$0xff] %v1950
        %3231 = vst [vmem:[%s194 + $0xb48] sm:$0xff] %v1951
        %3232 = vst [vmem:[%s194 + $0xb50] sm:$0xff] %v1952
        %3233 = vst [vmem:[%s194 + $0xb58] sm:$0xff] %v1953
        %3234 = vst [vmem:[%s194 + $0xb60] sm:$0xff] %v1954
        %3235 = vst [vmem:[%s194 + $0xb68] sm:$0xff] %v1955
        %3236 = vst [vmem:[%s194 + $0xb70] sm:$0xff] %v1956
        %3237 = vst [vmem:[%s194 + $0xb78] sm:$0xff] %v1957
        %3238 = vst [vmem:[%s194 + $0xb80] sm:$0xff] %v1958
        %3239 = vst [vmem:[%s194 + $0xb88] sm:$0xff] %v1959
        %3240 = vst [vmem:[%s194 + $0xb90] sm:$0xff] %v1960
        %3241 = vst [vmem:[%s194 + $0xb98] sm:$0xff] %v1961
        %3242 = vst [vmem:[%s194 + $0xba0] sm:$0xff] %v1962
        %3243 = vst [vmem:[%s194 + $0xba8] sm:$0xff] %v1963
        %3244 = vst [vmem:[%s194 + $0xbb0] sm:$0xff] %v1964
        %3245 = vst [vmem:[%s194 + $0xbb8] sm:$0xff] %v1965
        %3246 = vst [vmem:[%s194 + $0xbc0] sm:$0xff] %v1966
        %3247 = vst [vmem:[%s194 + $0xbc8] sm:$0xff] %v1967
        %3248 = vst [vmem:[%s194 + $0xbd0] sm:$0xff] %v1968
        %3249 = vst [vmem:[%s194 + $0xbd8] sm:$0xff] %v1969
        %3250 = vst [vmem:[%s194 + $0xbe0] sm:$0xff] %v1970
        %3251 = vst [vmem:[%s194 + $0xbe8] sm:$0xff] %v1971
        %3252 = vst [vmem:[%s194 + $0xbf0] sm:$0xff] %v1972
        %3253 = vst [vmem:[%s194 + $0xbf8] sm:$0xff] %v1973
        %3254 = vst [vmem:[%s194 + $0xc00] sm:$0xff] %v1974
        %3255 = vst [vmem:[%s194 + $0xc08] sm:$0xff] %v1975
        %3256 = vst [vmem:[%s194 + $0xc10] sm:$0xff] %v1976
        %3257 = vst [vmem:[%s194 + $0xc18] sm:$0xff] %v1977
        %3258 = vst [vmem:[%s194 + $0xc20] sm:$0xff] %v1978
        %3259 = vst [vmem:[%s194 + $0xc28] sm:$0xff] %v1979
        %3260 = vst [vmem:[%s194 + $0xc30] sm:$0xff] %v1980
        %3261 = vst [vmem:[%s194 + $0xc38] sm:$0xff] %v1981
        %3262 = vst [vmem:[%s194 + $0xc40] sm:$0xff] %v1982
        %3263 = vst [vmem:[%s194 + $0xc48] sm:$0xff] %v1983
        %3264 = vst [vmem:[%s194 + $0xc50] sm:$0xff] %v1984
        %3265 = vst [vmem:[%s194 + $0xc58] sm:$0xff] %v1985
        %3266 = vst [vmem:[%s194 + $0xc60] sm:$0xff] %v1986
        %3267 = vst [vmem:[%s194 + $0xc68] sm:$0xff] %v1987
        %3268 = vst [vmem:[%s194 + $0xc70] sm:$0xff] %v1988
        %3269 = vst [vmem:[%s194 + $0xc78] sm:$0xff] %v1989
        %3270 = vst [vmem:[%s194 + $0xc80] sm:$0xff] %v1990
        %3271 = vst [vmem:[%s194 + $0xc88] sm:$0xff] %v1991
        %3272 = vst [vmem:[%s194 + $0xc90] sm:$0xff] %v1992
        %3273 = vst [vmem:[%s194 + $0xc98] sm:$0xff] %v1993
        %3274 = vst [vmem:[%s194 + $0xca0] sm:$0xff] %v1994
        %3275 = vst [vmem:[%s194 + $0xca8] sm:$0xff] %v1995
        %3276 = vst [vmem:[%s194 + $0xcb0] sm:$0xff] %v1996
        %3277 = vst [vmem:[%s194 + $0xcb8] sm:$0xff] %v1997
        %3278 = vst [vmem:[%s194 + $0xcc0] sm:$0xff] %v1998
        %3279 = vst [vmem:[%s194 + $0xcc8] sm:$0xff] %v1999
        %3280 = vst [vmem:[%s194 + $0xcd0] sm:$0xff] %v2000
        %3281 = vst [vmem:[%s194 + $0xcd8] sm:$0xff] %v2001
        %3282 = vst [vmem:[%s194 + $0xce0] sm:$0xff] %v2002
        %3283 = vst [vmem:[%s194 + $0xce8] sm:$0xff] %v2003
        %3284 = vst [vmem:[%s194 + $0xcf0] sm:$0xff] %v2004
        %3285 = vst [vmem:[%s194 + $0xcf8] sm:$0xff] %v2005
        %3286 = vst [vmem:[%s194 + $0xd00] sm:$0xff] %v2006
        %3287 = vst [vmem:[%s194 + $0xd08] sm:$0xff] %v2007
        %3288 = vst [vmem:[%s194 + $0xd10] sm:$0xff] %v2008
        %3289 = vst [vmem:[%s194 + $0xd18] sm:$0xff] %v2009
        %3290 = vst [vmem:[%s194 + $0xd20] sm:$0xff] %v2010
        %3291 = vst [vmem:[%s194 + $0xd28] sm:$0xff] %v2011
        %3292 = vst [vmem:[%s194 + $0xd30] sm:$0xff] %v2012
        %3293 = vst [vmem:[%s194 + $0xd38] sm:$0xff] %v2013
        %3294 = vst [vmem:[%s194 + $0xd40] sm:$0xff] %v2014
        %3295 = vst [vmem:[%s194 + $0xd48] sm:$0xff] %v2015
        %3296 = vst [vmem:[%s194 + $0xd50] sm:$0xff] %v2016
        %3297 = vst [vmem:[%s194 + $0xd58] sm:$0xff] %v2017
        %3298 = vst [vmem:[%s194 + $0xd60] sm:$0xff] %v2018
        %3299 = vst [vmem:[%s194 + $0xd68] sm:$0xff] %v2019
        %3300 = vst [vmem:[%s194 + $0xd70] sm:$0xff] %v2020
        %3301 = vst [vmem:[%s194 + $0xd78] sm:$0xff] %v2021
        %3302 = vst [vmem:[%s194 + $0xd80] sm:$0xff] %v2022
        %3303 = vst [vmem:[%s194 + $0xd88] sm:$0xff] %v2023
        %3304 = vst [vmem:[%s194 + $0xd90] sm:$0xff] %v2024
        %3305 = vst [vmem:[%s194 + $0xd98] sm:$0xff] %v2025
        %3306 = vst [vmem:[%s194 + $0xda0] sm:$0xff] %v2026
        %3307 = vst [vmem:[%s194 + $0xda8] sm:$0xff] %v2027
        %3308 = vst [vmem:[%s194 + $0xdb0] sm:$0xff] %v2028
        %3309 = vst [vmem:[%s194 + $0xdb8] sm:$0xff] %v2029
        %3310 = vst [vmem:[%s194 + $0xdc0] sm:$0xff] %v2030
        %3311 = vst [vmem:[%s194 + $0xdc8] sm:$0xff] %v2031
        %3312 = vst [vmem:[%s194 + $0xdd0] sm:$0xff] %v2032
        %3313 = vst [vmem:[%s194 + $0xdd8] sm:$0xff] %v2033
        %3314 = vst [vmem:[%s194 + $0xde0] sm:$0xff] %v2034
        %3315 = vst [vmem:[%s194 + $0xde8] sm:$0xff] %v2035
        %3316 = vst [vmem:[%s194 + $0xdf0] sm:$0xff] %v2036
        %3317 = vst [vmem:[%s194 + $0xdf8] sm:$0xff] %v2037
        %3318 = vst [vmem:[%s194 + $0xe00] sm:$0xff] %v2038
        %3319 = vst [vmem:[%s194 + $0xe08] sm:$0xff] %v2039
        %3320 = vst [vmem:[%s194 + $0xe10] sm:$0xff] %v2040
        %3321 = vst [vmem:[%s194 + $0xe18] sm:$0xff] %v2041
        %3322 = vst [vmem:[%s194 + $0xe20] sm:$0xff] %v2042
        %3323 = vst [vmem:[%s194 + $0xe28] sm:$0xff] %v2043
        %3324 = vst [vmem:[%s194 + $0xe30] sm:$0xff] %v2044
        %3325 = vst [vmem:[%s194 + $0xe38] sm:$0xff] %v2045
        %3326 = vst [vmem:[%s194 + $0xe40] sm:$0xff] %v2046
        %3327 = vst [vmem:[%s194 + $0xe48] sm:$0xff] %v2047
        %3328 = vst [vmem:[%s194 + $0xe50] sm:$0xff] %v2048
        %3329 = vst [vmem:[%s194 + $0xe58] sm:$0xff] %v2049
        %3330 = vst [vmem:[%s194 + $0xe60] sm:$0xff] %v2050
        %3331 = vst [vmem:[%s194 + $0xe68] sm:$0xff] %v2051
        %3332 = vst [vmem:[%s194 + $0xe70] sm:$0xff] %v2052
        %3333 = vst [vmem:[%s194 + $0xe78] sm:$0xff] %v2053
        %3334 = vst [vmem:[%s194 + $0xe80] sm:$0xff] %v2054
        %3335 = vst [vmem:[%s194 + $0xe88] sm:$0xff] %v2055
        %3336 = vst [vmem:[%s194 + $0xe90] sm:$0xff] %v2056
        %3337 = vst [vmem:[%s194 + $0xe98] sm:$0xff] %v2057
        %3338 = vst [vmem:[%s194 + $0xea0] sm:$0xff] %v2058
        %3339 = vst [vmem:[%s194 + $0xea8] sm:$0xff] %v2059
        %3340 = vst [vmem:[%s194 + $0xeb0] sm:$0xff] %v2060
        %3341 = vst [vmem:[%s194 + $0xeb8] sm:$0xff] %v2061
        %3342 = vst [vmem:[%s194 + $0xec0] sm:$0xff] %v2062
        %3343 = vst [vmem:[%s194 + $0xec8] sm:$0xff] %v2063
        %3344 = vst [vmem:[%s194 + $0xed0] sm:$0xff] %v2064
        %3345 = vst [vmem:[%s194 + $0xed8] sm:$0xff] %v2065
        %3346 = vst [vmem:[%s194 + $0xee0] sm:$0xff] %v2066
        %3347 = vst [vmem:[%s194 + $0xee8] sm:$0xff] %v2067
        %3348 = vst [vmem:[%s194 + $0xef0] sm:$0xff] %v2068
        %3349 = vst [vmem:[%s194 + $0xef8] sm:$0xff] %v2069
        %3350 = vst [vmem:[%s194 + $0xf00] sm:$0xff] %v2070
        %3351 = vst [vmem:[%s194 + $0xf08] sm:$0xff] %v2071
        %3352 = vst [vmem:[%s194 + $0xf10] sm:$0xff] %v2072
        %3353 = vst [vmem:[%s194 + $0xf18] sm:$0xff] %v2073
        %3354 = vst [vmem:[%s194 + $0xf20] sm:$0xff] %v2074
        %3355 = vst [vmem:[%s194 + $0xf28] sm:$0xff] %v2075
        %3356 = vst [vmem:[%s194 + $0xf30] sm:$0xff] %v2076
        %3357 = vst [vmem:[%s194 + $0xf38] sm:$0xff] %v2077
        %3358 = vst [vmem:[%s194 + $0xf40] sm:$0xff] %v2078
        %3359 = vst [vmem:[%s194 + $0xf48] sm:$0xff] %v2079
        %3360 = vst [vmem:[%s194 + $0xf50] sm:$0xff] %v2080
        %3361 = vst [vmem:[%s194 + $0xf58] sm:$0xff] %v2081
        %3362 = vst [vmem:[%s194 + $0xf60] sm:$0xff] %v2082
        %3363 = vst [vmem:[%s194 + $0xf68] sm:$0xff] %v2083
        %3364 = vst [vmem:[%s194 + $0xf70] sm:$0xff] %v2084
        %3365 = vst [vmem:[%s194 + $0xf78] sm:$0xff] %v2085
        %3366 = vst [vmem:[%s194 + $0xf80] sm:$0xff] %v2086
        %3367 = vst [vmem:[%s194 + $0xf88] sm:$0xff] %v2087
        %3368 = vst [vmem:[%s194 + $0xf90] sm:$0xff] %v2088
        %3369 = vst [vmem:[%s194 + $0xf98] sm:$0xff] %v2089
        %3370 = vst [vmem:[%s194 + $0xfa0] sm:$0xff] %v2090
        %3371 = vst [vmem:[%s194 + $0xfa8] sm:$0xff] %v2091
        %3372 = vst [vmem:[%s194 + $0xfb0] sm:$0xff] %v2092
        %3373 = vst [vmem:[%s194 + $0xfb8] sm:$0xff] %v2093
        %3374 = vst [vmem:[%s194 + $0xfc0] sm:$0xff] %v2094
        %3375 = vst [vmem:[%s194 + $0xfc8] sm:$0xff] %v2095
        %3376 = vst [vmem:[%s194 + $0xfd0] sm:$0xff] %v2096
        %3377 = vst [vmem:[%s194 + $0xfd8] sm:$0xff] %v2097
        %3378 = vst [vmem:[%s194 + $0xfe0] sm:$0xff] %v2098
        %3379 = vst [vmem:[%s194 + $0xfe8] sm:$0xff] %v2099
        %3380 = vst [vmem:[%s194 + $0xff0] sm:$0xff] %v2100
        %3381 = vst [vmem:[%s194 + $0xff8] sm:$0xff] %v2101
        %3382 = vst [vmem:[%s194 + $0x1000] sm:$0xff] %v2102
        %3383 = vst [vmem:[%s194 + $0x1008] sm:$0xff] %v2103
        %3384 = vst [vmem:[%s194 + $0x1010] sm:$0xff] %v2104
        %3385 = vst [vmem:[%s194 + $0x1018] sm:$0xff] %v2105
        %3386 = vst [vmem:[%s194 + $0x1020] sm:$0xff] %v2106
        %3387 = vst [vmem:[%s194 + $0x1028] sm:$0xff] %v2107
        %3388 = vst [vmem:[%s194 + $0x1030] sm:$0xff] %v2108
        %3389 = vst [vmem:[%s194 + $0x1038] sm:$0xff] %v2109
        %3390 = vst [vmem:[%s194 + $0x1040] sm:$0xff] %v2110
        %3391 = vst [vmem:[%s194 + $0x1048] sm:$0xff] %v2111
        %3392 = vst [vmem:[%s194 + $0x1050] sm:$0xff] %v2112
        %3393 = vst [vmem:[%s194 + $0x1058] sm:$0xff] %v2113
        %3394 = vst [vmem:[%s194 + $0x1060] sm:$0xff] %v2114
        %3395 = vst [vmem:[%s194 + $0x1068] sm:$0xff] %v2115
        %3396 = vst [vmem:[%s194 + $0x1070] sm:$0xff] %v2116
        %3397 = vst [vmem:[%s194 + $0x1078] sm:$0xff] %v2117
        %3398 = vst [vmem:[%s194 + $0x1080] sm:$0xff] %v2118
        %3399 = vst [vmem:[%s194 + $0x1088] sm:$0xff] %v2119
        %3400 = vst [vmem:[%s194 + $0x1090] sm:$0xff] %v2120
        %3401 = vst [vmem:[%s194 + $0x1098] sm:$0xff] %v2121
        %3402 = vst [vmem:[%s194 + $0x10a0] sm:$0xff] %v2122
        %3403 = vst [vmem:[%s194 + $0x10a8] sm:$0xff] %v2123
        %3404 = vst [vmem:[%s194 + $0x10b0] sm:$0xff] %v2124
        %3405 = vst [vmem:[%s194 + $0x10b8] sm:$0xff] %v2125
        %3406 = vst [vmem:[%s194 + $0x10c0] sm:$0xff] %v2126
        %3407 = vst [vmem:[%s194 + $0x10c8] sm:$0xff] %v2127
        %3408 = vst [vmem:[%s194 + $0x10d0] sm:$0xff] %v2128
        %3409 = vst [vmem:[%s194 + $0x10d8] sm:$0xff] %v2129
        %3410 = vst [vmem:[%s194 + $0x10e0] sm:$0xff] %v2130
        %3411 = vst [vmem:[%s194 + $0x10e8] sm:$0xff] %v2131
        %3412 = vst [vmem:[%s194 + $0x10f0] sm:$0xff] %v2132
        %3413 = vst [vmem:[%s194 + $0x10f8] sm:$0xff] %v2133
        %3414 = vst [vmem:[%s194 + $0x1100] sm:$0xff] %v2134
        %3415 = vst [vmem:[%s194 + $0x1108] sm:$0xff] %v2135
        %3416 = vst [vmem:[%s194 + $0x1110] sm:$0xff] %v2136
        %3417 = vst [vmem:[%s194 + $0x1118] sm:$0xff] %v2137
        %3418 = vst [vmem:[%s194 + $0x1120] sm:$0xff] %v2138
        %3419 = vst [vmem:[%s194 + $0x1128] sm:$0xff] %v2139
        %3420 = vst [vmem:[%s194 + $0x1130] sm:$0xff] %v2140
        %3421 = vst [vmem:[%s194 + $0x1138] sm:$0xff] %v2141
        %3422 = vst [vmem:[%s194 + $0x1140] sm:$0xff] %v2142
        %3423 = vst [vmem:[%s194 + $0x1148] sm:$0xff] %v2143
        %3424 = vst [vmem:[%s194 + $0x1150] sm:$0xff] %v2144
        %3425 = vst [vmem:[%s194 + $0x1158] sm:$0xff] %v2145
        %3426 = vst [vmem:[%s194 + $0x1160] sm:$0xff] %v2146
        %3427 = vst [vmem:[%s194 + $0x1168] sm:$0xff] %v2147
        %3428 = vst [vmem:[%s194 + $0x1170] sm:$0xff] %v2148
        %3429 = vst [vmem:[%s194 + $0x1178] sm:$0xff] %v2149
        %3430 = vst [vmem:[%s194 + $0x1180] sm:$0xff] %v2150
        %3431 = vst [vmem:[%s194 + $0x1188] sm:$0xff] %v2151
        %3432 = vst [vmem:[%s194 + $0x1190] sm:$0xff] %v2152
        %3433 = vst [vmem:[%s194 + $0x1198] sm:$0xff] %v2153
        %3434 = vst [vmem:[%s194 + $0x11a0] sm:$0xff] %v2154
        %3435 = vst [vmem:[%s194 + $0x11a8] sm:$0xff] %v2155
        %3436 = vst [vmem:[%s194 + $0x11b0] sm:$0xff] %v2156
        %3437 = vst [vmem:[%s194 + $0x11b8] sm:$0xff] %v2157
        %3438 = vst [vmem:[%s194 + $0x11c0] sm:$0xff] %v2158
        %3439 = vst [vmem:[%s194 + $0x11c8] sm:$0xff] %v2159
        %3440 = vst [vmem:[%s194 + $0x11d0] sm:$0xff] %v2160
        %3441 = vst [vmem:[%s194 + $0x11d8] sm:$0xff] %v2161
        %3442 = vst [vmem:[%s194 + $0x11e0] sm:$0xff] %v2162
        %3443 = vst [vmem:[%s194 + $0x11e8] sm:$0xff] %v2163
        %3444 = vst [vmem:[%s194 + $0x11f0] sm:$0xff] %v2164
        %3445 = vst [vmem:[%s194 + $0x11f8] sm:$0xff] %v2165
        %3446 = vst [vmem:[%s194 + $0x1200] sm:$0xff] %v2166
        %3447 = vst [vmem:[%s194 + $0x1208] sm:$0xff] %v2167
        %3448 = vst [vmem:[%s194 + $0x1210] sm:$0xff] %v2168
        %3449 = vst [vmem:[%s194 + $0x1218] sm:$0xff] %v2169
        %3450 = vst [vmem:[%s194 + $0x1220] sm:$0xff] %v2170
        %3451 = vst [vmem:[%s194 + $0x1228] sm:$0xff] %v2171
        %3452 = vst [vmem:[%s194 + $0x1230] sm:$0xff] %v2172
        %3453 = vst [vmem:[%s194 + $0x1238] sm:$0xff] %v2173
        %3454 = vst [vmem:[%s194 + $0x1240] sm:$0xff] %v2174
        %3455 = vst [vmem:[%s194 + $0x1248] sm:$0xff] %v2175
        %3456 = vst [vmem:[%s194 + $0x1250] sm:$0xff] %v2176
        %3457 = vst [vmem:[%s194 + $0x1258] sm:$0xff] %v2177
        %3458 = vst [vmem:[%s194 + $0x1260] sm:$0xff] %v2178
        %3459 = vst [vmem:[%s194 + $0x1268] sm:$0xff] %v2179
        %3460 = vst [vmem:[%s194 + $0x1270] sm:$0xff] %v2180
        %3461 = vst [vmem:[%s194 + $0x1278] sm:$0xff] %v2181
        %3462 = vst [vmem:[%s194 + $0x1280] sm:$0xff] %v2182
        %3463 = vst [vmem:[%s194 + $0x1288] sm:$0xff] %v2183
        %3464 = vst [vmem:[%s194 + $0x1290] sm:$0xff] %v2184
        %3465 = vst [vmem:[%s194 + $0x1298] sm:$0xff] %v2185
        %3466 = vst [vmem:[%s194 + $0x12a0] sm:$0xff] %v2186
        %3467 = vst [vmem:[%s194 + $0x12a8] sm:$0xff] %v2187
        %3468 = vst [vmem:[%s194 + $0x12b0] sm:$0xff] %v2188
        %3469 = vst [vmem:[%s194 + $0x12b8] sm:$0xff] %v2189
        %3470 = vst [vmem:[%s194 + $0x12c0] sm:$0xff] %v2190
        %3471 = vst [vmem:[%s194 + $0x12c8] sm:$0xff] %v2191
        %3472 = vst [vmem:[%s194 + $0x12d0] sm:$0xff] %v2192
        %3473 = vst [vmem:[%s194 + $0x12d8] sm:$0xff] %v2193
        %3474 = vst [vmem:[%s194 + $0x12e0] sm:$0xff] %v2194
        %3475 = vst [vmem:[%s194 + $0x12e8] sm:$0xff] %v2195
        %3476 = vst [vmem:[%s194 + $0x12f0] sm:$0xff] %v2196
        %3477 = vst [vmem:[%s194 + $0x12f8] sm:$0xff] %v2197
        %3478 = vst [vmem:[%s194 + $0x1300] sm:$0xff] %v2198
        %3479 = vst [vmem:[%s194 + $0x1308] sm:$0xff] %v2199
        %3480 = vst [vmem:[%s194 + $0x1310] sm:$0xff] %v2200
        %3481 = vst [vmem:[%s194 + $0x1318] sm:$0xff] %v2201
        %3482 = vst [vmem:[%s194 + $0x1320] sm:$0xff] %v2202
        %3483 = vst [vmem:[%s194 + $0x1328] sm:$0xff] %v2203
        %3484 = vst [vmem:[%s194 + $0x1330] sm:$0xff] %v2204
        %3485 = vst [vmem:[%s194 + $0x1338] sm:$0xff] %v2205
        %3486 = vst [vmem:[%s194 + $0x1340] sm:$0xff] %v2206
        %3487 = vst [vmem:[%s194 + $0x1348] sm:$0xff] %v2207
        %3488 = vst [vmem:[%s194 + $0x1350] sm:$0xff] %v2208
        %3489 = vst [vmem:[%s194 + $0x1358] sm:$0xff] %v2209
        %3490 = vst [vmem:[%s194 + $0x1360] sm:$0xff] %v2210
        %3491 = vst [vmem:[%s194 + $0x1368] sm:$0xff] %v2211
        %3492 = vst [vmem:[%s194 + $0x1370] sm:$0xff] %v2212
        %3493 = vst [vmem:[%s194 + $0x1378] sm:$0xff] %v2213
        %3494 = vst [vmem:[%s194 + $0x1380] sm:$0xff] %v2214
        %3495 = vst [vmem:[%s194 + $0x1388] sm:$0xff] %v2215
        %3496 = vst [vmem:[%s194 + $0x1390] sm:$0xff] %v2216
        %3497 = vst [vmem:[%s194 + $0x1398] sm:$0xff] %v2217
        %3498 = vst [vmem:[%s194 + $0x13a0] sm:$0xff] %v2218
        %3499 = vst [vmem:[%s194 + $0x13a8] sm:$0xff] %v2219
        %3500 = vst [vmem:[%s194 + $0x13b0] sm:$0xff] %v2220
        %3501 = vst [vmem:[%s194 + $0x13b8] sm:$0xff] %v2221
        %3502 = vst [vmem:[%s194 + $0x13c0] sm:$0xff] %v2222
        %3503 = vst [vmem:[%s194 + $0x13c8] sm:$0xff] %v2223
        %3504 = vst [vmem:[%s194 + $0x13d0] sm:$0xff] %v2224
        %3505 = vst [vmem:[%s194 + $0x13d8] sm:$0xff] %v2225
        %3506 = vst [vmem:[%s194 + $0x13e0] sm:$0xff] %v2226
        %3507 = vst [vmem:[%s194 + $0x13e8] sm:$0xff] %v2227
        %3508 = vst [vmem:[%s194 + $0x13f0] sm:$0xff] %v2228
        %3509 = vst [vmem:[%s194 + $0x13f8] sm:$0xff] %v2229
        %3510 = vst [vmem:[%s194 + $0x1400] sm:$0xff] %v2230
        %3511 = vst [vmem:[%s194 + $0x1408] sm:$0xff] %v2231
        %3512 = vst [vmem:[%s194 + $0x1410] sm:$0xff] %v2232
        %3513 = vst [vmem:[%s194 + $0x1418] sm:$0xff] %v2233
        %3514 = vst [vmem:[%s194 + $0x1420] sm:$0xff] %v2234
        %3515 = vst [vmem:[%s194 + $0x1428] sm:$0xff] %v2235
        %3516 = vst [vmem:[%s194 + $0x1430] sm:$0xff] %v2236
        %3517 = vst [vmem:[%s194 + $0x1438] sm:$0xff] %v2237
        %3518 = vst [vmem:[%s194 + $0x1440] sm:$0xff] %v2238
        %3519 = vst [vmem:[%s194 + $0x1448] sm:$0xff] %v2239
        %3520 = vst [vmem:[%s194 + $0x1450] sm:$0xff] %v2240
        %3521 = vst [vmem:[%s194 + $0x1458] sm:$0xff] %v2241
        %3522 = vst [vmem:[%s194 + $0x1460] sm:$0xff] %v2242
        %3523 = vst [vmem:[%s194 + $0x1468] sm:$0xff] %v2243
        %3524 = vst [vmem:[%s194 + $0x1470] sm:$0xff] %v2244
        %3525 = vst [vmem:[%s194 + $0x1478] sm:$0xff] %v2245
        %3526 = vst [vmem:[%s194 + $0x1480] sm:$0xff] %v2246
        %3527 = vst [vmem:[%s194 + $0x1488] sm:$0xff] %v2247
        %3528 = vst [vmem:[%s194 + $0x1490] sm:$0xff] %v2248
        %3529 = vst [vmem:[%s194 + $0x1498] sm:$0xff] %v2249
        %3530 = vst [vmem:[%s194 + $0x14a0] sm:$0xff] %v2250
        %3531 = vst [vmem:[%s194 + $0x14a8] sm:$0xff] %v2251
        %3532 = vst [vmem:[%s194 + $0x14b0] sm:$0xff] %v2252
        %3533 = vst [vmem:[%s194 + $0x14b8] sm:$0xff] %v2253
        %3534 = vst [vmem:[%s194 + $0x14c0] sm:$0xff] %v2254
        %3535 = vst [vmem:[%s194 + $0x14c8] sm:$0xff] %v2255
        %3536 = vst [vmem:[%s194 + $0x14d0] sm:$0xff] %v2256
        %3537 = vst [vmem:[%s194 + $0x14d8] sm:$0xff] %v2257
        %3538 = vst [vmem:[%s194 + $0x14e0] sm:$0xff] %v2258
        %3539 = vst [vmem:[%s194 + $0x14e8] sm:$0xff] %v2259
        %3540 = vst [vmem:[%s194 + $0x14f0] sm:$0xff] %v2260
        %3541 = vst [vmem:[%s194 + $0x14f8] sm:$0xff] %v2261
        %3542 = vst [vmem:[%s194 + $0x1500] sm:$0xff] %v2262
        %3543 = vst [vmem:[%s194 + $0x1508] sm:$0xff] %v2263
        %3544 = vst [vmem:[%s194 + $0x1510] sm:$0xff] %v2264
        %3545 = vst [vmem:[%s194 + $0x1518] sm:$0xff] %v2265
        %3546 = vst [vmem:[%s194 + $0x1520] sm:$0xff] %v2266
        %3547 = vst [vmem:[%s194 + $0x1528] sm:$0xff] %v2267
        %3548 = vst [vmem:[%s194 + $0x1530] sm:$0xff] %v2268
        %3549 = vst [vmem:[%s194 + $0x1538] sm:$0xff] %v2269
        %3550 = vst [vmem:[%s194 + $0x1540] sm:$0xff] %v2270
        %3551 = vst [vmem:[%s194 + $0x1548] sm:$0xff] %v2271
        %3552 = vst [vmem:[%s194 + $0x1550] sm:$0xff] %v2272
        %3553 = vst [vmem:[%s194 + $0x1558] sm:$0xff] %v2273
        %3554 = vst [vmem:[%s194 + $0x1560] sm:$0xff] %v2274
        %3555 = vst [vmem:[%s194 + $0x1568] sm:$0xff] %v2275
        %3556 = vst [vmem:[%s194 + $0x1570] sm:$0xff] %v2276
        %3557 = vst [vmem:[%s194 + $0x1578] sm:$0xff] %v2277
        %3558 = vst [vmem:[%s194 + $0x1580] sm:$0xff] %v2278
        %3559 = vst [vmem:[%s194 + $0x1588] sm:$0xff] %v2279
        %3560 = vst [vmem:[%s194 + $0x1590] sm:$0xff] %v2280
        %3561 = vst [vmem:[%s194 + $0x1598] sm:$0xff] %v2281
        %3562 = vst [vmem:[%s194 + $0x15a0] sm:$0xff] %v2282
        %3563 = vst [vmem:[%s194 + $0x15a8] sm:$0xff] %v2283
        %3564 = vst [vmem:[%s194 + $0x15b0] sm:$0xff] %v2284
        %3565 = vst [vmem:[%s194 + $0x15b8] sm:$0xff] %v2285
        %3566 = vst [vmem:[%s194 + $0x15c0] sm:$0xff] %v2286
        %3567 = vst [vmem:[%s194 + $0x15c8] sm:$0xff] %v2287
        %3568 = vst [vmem:[%s194 + $0x15d0] sm:$0xff] %v2288
        %3569 = vst [vmem:[%s194 + $0x15d8] sm:$0xff] %v2289
        %3570 = vst [vmem:[%s194 + $0x15e0] sm:$0xff] %v2290
        %3571 = vst [vmem:[%s194 + $0x15e8] sm:$0xff] %v2291
        %3572 = vst [vmem:[%s194 + $0x15f0] sm:$0xff] %v2292
        %3573 = vst [vmem:[%s194 + $0x15f8] sm:$0xff] %v2293
        %3574 = vst [vmem:[%s194 + $0x1600] sm:$0xff] %v2294
        %3575 = vst [vmem:[%s194 + $0x1608] sm:$0xff] %v2295
        %3576 = vst [vmem:[%s194 + $0x1610] sm:$0xff] %v2296
        %3577 = vst [vmem:[%s194 + $0x1618] sm:$0xff] %v2297
        %3578 = vst [vmem:[%s194 + $0x1620] sm:$0xff] %v2298
        %3579 = vst [vmem:[%s194 + $0x1628] sm:$0xff] %v2299
        %3580 = vst [vmem:[%s194 + $0x1630] sm:$0xff] %v2300
        %3581 = vst [vmem:[%s194 + $0x1638] sm:$0xff] %v2301
        %3582 = vst [vmem:[%s194 + $0x1640] sm:$0xff] %v2302
        %3583 = vst [vmem:[%s194 + $0x1648] sm:$0xff] %v2303
        %3584 = vst [vmem:[%s194 + $0x1650] sm:$0xff] %v2304
        %3585 = vst [vmem:[%s194 + $0x1658] sm:$0xff] %v2305
        %3586 = vst [vmem:[%s194 + $0x1660] sm:$0xff] %v2306
        %3587 = vst [vmem:[%s194 + $0x1668] sm:$0xff] %v2307
        %3588 = vst [vmem:[%s194 + $0x1670] sm:$0xff] %v2308
        %3589 = vst [vmem:[%s194 + $0x1678] sm:$0xff] %v2309
        %3590 = vst [vmem:[%s194 + $0x1680] sm:$0xff] %v2310
        %3591 = vst [vmem:[%s194 + $0x1688] sm:$0xff] %v2311
        %3592 = vst [vmem:[%s194 + $0x1690] sm:$0xff] %v2312
        %3593 = vst [vmem:[%s194 + $0x1698] sm:$0xff] %v2313
        %3594 = vst [vmem:[%s194 + $0x16a0] sm:$0xff] %v2314
        %3595 = vst [vmem:[%s194 + $0x16a8] sm:$0xff] %v2315
        %3596 = vst [vmem:[%s194 + $0x16b0] sm:$0xff] %v2316
        %3597 = vst [vmem:[%s194 + $0x16b8] sm:$0xff] %v2317
        %3598 = vst [vmem:[%s194 + $0x16c0] sm:$0xff] %v2318
        %3599 = vst [vmem:[%s194 + $0x16c8] sm:$0xff] %v2319
        %3600 = vst [vmem:[%s194 + $0x16d0] sm:$0xff] %v2320
        %3601 = vst [vmem:[%s194 + $0x16d8] sm:$0xff] %v2321
        %3602 = vst [vmem:[%s194 + $0x16e0] sm:$0xff] %v2322
        %3603 = vst [vmem:[%s194 + $0x16e8] sm:$0xff] %v2323
        %3604 = vst [vmem:[%s194 + $0x16f0] sm:$0xff] %v2324
        %3605 = vst [vmem:[%s194 + $0x16f8] sm:$0xff] %v2325
        %3606 = vst [vmem:[%s194 + $0x1700] sm:$0xff] %v2326
        %3607 = vst [vmem:[%s194 + $0x1708] sm:$0xff] %v2327
        %3608 = vst [vmem:[%s194 + $0x1710] sm:$0xff] %v2328
        %3609 = vst [vmem:[%s194 + $0x1718] sm:$0xff] %v2329
        %3610 = vst [vmem:[%s194 + $0x1720] sm:$0xff] %v2330
        %3611 = vst [vmem:[%s194 + $0x1728] sm:$0xff] %v2331
        %3612 = vst [vmem:[%s194 + $0x1730] sm:$0xff] %v2332
        %3613 = vst [vmem:[%s194 + $0x1738] sm:$0xff] %v2333
        %3614 = vst [vmem:[%s194 + $0x1740] sm:$0xff] %v2334
        %3615 = vst [vmem:[%s194 + $0x1748] sm:$0xff] %v2335
        %3616 = vst [vmem:[%s194 + $0x1750] sm:$0xff] %v2336
        %3617 = vst [vmem:[%s194 + $0x1758] sm:$0xff] %v2337
        %3618 = vst [vmem:[%s194 + $0x1760] sm:$0xff] %v2338
        %3619 = vst [vmem:[%s194 + $0x1768] sm:$0xff] %v2339
        %3620 = vst [vmem:[%s194 + $0x1770] sm:$0xff] %v2340
        %3621 = vst [vmem:[%s194 + $0x1778] sm:$0xff] %v2341
        %3622 = vst [vmem:[%s194 + $0x1780] sm:$0xff] %v2342
        %3623 = vst [vmem:[%s194 + $0x1788] sm:$0xff] %v2343
        %3624 = vst [vmem:[%s194 + $0x1790] sm:$0xff] %v2344
        %3625 = vst [vmem:[%s194 + $0x1798] sm:$0xff] %v2345
        %3626 = vst [vmem:[%s194 + $0x17a0] sm:$0xff] %v2346
        %3627 = vst [vmem:[%s194 + $0x17a8] sm:$0xff] %v2347
        %3628 = vst [vmem:[%s194 + $0x17b0] sm:$0xff] %v2348
        %3629 = vst [vmem:[%s194 + $0x17b8] sm:$0xff] %v2349
        %3630 = vst [vmem:[%s194 + $0x17c0] sm:$0xff] %v2350
        %3631 = vst [vmem:[%s194 + $0x17c8] sm:$0xff] %v2351
        %3632 = vst [vmem:[%s194 + $0x17d0] sm:$0xff] %v2352
        %3633 = vst [vmem:[%s194 + $0x17d8] sm:$0xff] %v2353
        %3634 = vst [vmem:[%s194 + $0x17e0] sm:$0xff] %v2354
        %3635 = vst [vmem:[%s194 + $0x17e8] sm:$0xff] %v2355
        %3636 = vst [vmem:[%s194 + $0x17f0] sm:$0xff] %v2356
        %3637 = vst [vmem:[%s194 + $0x17f8] sm:$0xff] %v2357
        %3638 = vst [vmem:[%s194 + $0x1800] sm:$0xff] %v2358
        %3639 = vst [vmem:[%s194 + $0x1808] sm:$0xff] %v2359
        %3640 = vst [vmem:[%s194 + $0x1810] sm:$0xff] %v2360
        %3641 = vst [vmem:[%s194 + $0x1818] sm:$0xff] %v2361
        %3642 = vst [vmem:[%s194 + $0x1820] sm:$0xff] %v2362
        %3643 = vst [vmem:[%s194 + $0x1828] sm:$0xff] %v2363
        %3644 = vst [vmem:[%s194 + $0x1830] sm:$0xff] %v2364
        %3645 = vst [vmem:[%s194 + $0x1838] sm:$0xff] %v2365
        %3646 = vst [vmem:[%s194 + $0x1840] sm:$0xff] %v2366
        %3647 = vst [vmem:[%s194 + $0x1848] sm:$0xff] %v2367
        %3648 = vst [vmem:[%s194 + $0x1850] sm:$0xff] %v2368
        %3649 = vst [vmem:[%s194 + $0x1858] sm:$0xff] %v2369
        %3650 = vst [vmem:[%s194 + $0x1860] sm:$0xff] %v2370
        %3651 = vst [vmem:[%s194 + $0x1868] sm:$0xff] %v2371
        %3652 = vst [vmem:[%s194 + $0x1870] sm:$0xff] %v2372
        %3653 = vst [vmem:[%s194 + $0x1878] sm:$0xff] %v2373
        %3654 = vst [vmem:[%s194 + $0x1880] sm:$0xff] %v2374
        %3655 = vst [vmem:[%s194 + $0x1888] sm:$0xff] %v2375
        %3656 = vst [vmem:[%s194 + $0x1890] sm:$0xff] %v2376
        %3657 = vst [vmem:[%s194 + $0x1898] sm:$0xff] %v2377
        %3658 = vst [vmem:[%s194 + $0x18a0] sm:$0xff] %v2378
        %3659 = vst [vmem:[%s194 + $0x18a8] sm:$0xff] %v2379
        %3660 = vst [vmem:[%s194 + $0x18b0] sm:$0xff] %v2380
        %3661 = vst [vmem:[%s194 + $0x18b8] sm:$0xff] %v2381
        %3662 = vst [vmem:[%s194 + $0x18c0] sm:$0xff] %v2382
        %3663 = vst [vmem:[%s194 + $0x18c8] sm:$0xff] %v2383
        %3664 = vst [vmem:[%s194 + $0x18d0] sm:$0xff] %v2384
        %3665 = vst [vmem:[%s194 + $0x18d8] sm:$0xff] %v2385
        %3666 = vst [vmem:[%s194 + $0x18e0] sm:$0xff] %v2386
        %3667 = vst [vmem:[%s194 + $0x18e8] sm:$0xff] %v2387
        %3668 = vst [vmem:[%s194 + $0x18f0] sm:$0xff] %v2388
        %3669 = vst [vmem:[%s194 + $0x18f8] sm:$0xff] %v2389
        %3670 = vst [vmem:[%s194 + $0x1900] sm:$0xff] %v2390
        %3671 = vst [vmem:[%s194 + $0x1908] sm:$0xff] %v2391
        %3672 = vst [vmem:[%s194 + $0x1910] sm:$0xff] %v2392
        %3673 = vst [vmem:[%s194 + $0x1918] sm:$0xff] %v2393
        %3674 = vst [vmem:[%s194 + $0x1920] sm:$0xff] %v2394
        %3675 = vst [vmem:[%s194 + $0x1928] sm:$0xff] %v2395
        %3676 = vst [vmem:[%s194 + $0x1930] sm:$0xff] %v2396
        %3677 = vst [vmem:[%s194 + $0x1938] sm:$0xff] %v2397
        %3678 = vst [vmem:[%s194 + $0x1940] sm:$0xff] %v2398
        %3679 = vst [vmem:[%s194 + $0x1948] sm:$0xff] %v2399
        %3680 = vst [vmem:[%s194 + $0x1950] sm:$0xff] %v2400
        %3681 = vst [vmem:[%s194 + $0x1958] sm:$0xff] %v2401
        %3682 = vst [vmem:[%s194 + $0x1960] sm:$0xff] %v2402
        %3683 = vst [vmem:[%s194 + $0x1968] sm:$0xff] %v2403
        %3684 = vst [vmem:[%s194 + $0x1970] sm:$0xff] %v2404
        %3685 = vst [vmem:[%s194 + $0x1978] sm:$0xff] %v2405
        %3686 = vst [vmem:[%s194 + $0x1980] sm:$0xff] %v2406
        %3687 = vst [vmem:[%s194 + $0x1988] sm:$0xff] %v2407
        %3688 = vst [vmem:[%s194 + $0x1990] sm:$0xff] %v2408
        %3689 = vst [vmem:[%s194 + $0x1998] sm:$0xff] %v2409
        %3690 = vst [vmem:[%s194 + $0x19a0] sm:$0xff] %v2410
        %3691 = vst [vmem:[%s194 + $0x19a8] sm:$0xff] %v2411
        %3692 = vst [vmem:[%s194 + $0x19b0] sm:$0xff] %v2412
        %3693 = vst [vmem:[%s194 + $0x19b8] sm:$0xff] %v2413
        %3694 = vst [vmem:[%s194 + $0x19c0] sm:$0xff] %v2414
        %3695 = vst [vmem:[%s194 + $0x19c8] sm:$0xff] %v2415
        %3696 = vst [vmem:[%s194 + $0x19d0] sm:$0xff] %v2416
        %3697 = vst [vmem:[%s194 + $0x19d8] sm:$0xff] %v2417
        %3698 = vst [vmem:[%s194 + $0x19e0] sm:$0xff] %v2418
        %3699 = vst [vmem:[%s194 + $0x19e8] sm:$0xff] %v2419
        %3700 = vst [vmem:[%s194 + $0x19f0] sm:$0xff] %v2420
        %3701 = vst [vmem:[%s194 + $0x19f8] sm:$0xff] %v2421
        %3702 = vst [vmem:[%s194 + $0x1a00] sm:$0xff] %v2422
        %3703 = vst [vmem:[%s194 + $0x1a08] sm:$0xff] %v2423
        %3704 = vst [vmem:[%s194 + $0x1a10] sm:$0xff] %v2424
        %3705 = vst [vmem:[%s194 + $0x1a18] sm:$0xff] %v2425
        %3706 = vst [vmem:[%s194 + $0x1a20] sm:$0xff] %v2426
        %3707 = vst [vmem:[%s194 + $0x1a28] sm:$0xff] %v2427
        %3708 = vst [vmem:[%s194 + $0x1a30] sm:$0xff] %v2428
        %3709 = vst [vmem:[%s194 + $0x1a38] sm:$0xff] %v2429
        %3710 = vst [vmem:[%s194 + $0x1a40] sm:$0xff] %v2430
        %3711 = vst [vmem:[%s194 + $0x1a48] sm:$0xff] %v2431
        %3712 = vst [vmem:[%s194 + $0x1a50] sm:$0xff] %v2432
        %3713 = vst [vmem:[%s194 + $0x1a58] sm:$0xff] %v2433
        %3714 = vst [vmem:[%s194 + $0x1a60] sm:$0xff] %v2434
        %3715 = vst [vmem:[%s194 + $0x1a68] sm:$0xff] %v2435
        %3716 = vst [vmem:[%s194 + $0x1a70] sm:$0xff] %v2436
        %3717 = vst [vmem:[%s194 + $0x1a78] sm:$0xff] %v2437
        %3718 = vst [vmem:[%s194 + $0x1a80] sm:$0xff] %v2438
        %3719 = vst [vmem:[%s194 + $0x1a88] sm:$0xff] %v2439
        %3720 = vst [vmem:[%s194 + $0x1a90] sm:$0xff] %v2440
        %3721 = vst [vmem:[%s194 + $0x1a98] sm:$0xff] %v2441
        %3722 = vst [vmem:[%s194 + $0x1aa0] sm:$0xff] %v2442
        %3723 = vst [vmem:[%s194 + $0x1aa8] sm:$0xff] %v2443
        %3724 = vst [vmem:[%s194 + $0x1ab0] sm:$0xff] %v2444
        %3725 = vst [vmem:[%s194 + $0x1ab8] sm:$0xff] %v2445
        %3726 = vst [vmem:[%s194 + $0x1ac0] sm:$0xff] %v2446
        %3727 = vst [vmem:[%s194 + $0x1ac8] sm:$0xff] %v2447
        %3728 = vst [vmem:[%s194 + $0x1ad0] sm:$0xff] %v2448
        %3729 = vst [vmem:[%s194 + $0x1ad8] sm:$0xff] %v2449
        %3730 = vst [vmem:[%s194 + $0x1ae0] sm:$0xff] %v2450
        %3731 = vst [vmem:[%s194 + $0x1ae8] sm:$0xff] %v2451
        %3732 = vst [vmem:[%s194 + $0x1af0] sm:$0xff] %v2452
        %3733 = vst [vmem:[%s194 + $0x1af8] sm:$0xff] %v2453
        %3734 = vst [vmem:[%s194 + $0x1b00] sm:$0xff] %v2454
        %3735 = vst [vmem:[%s194 + $0x1b08] sm:$0xff] %v2455
        %3736 = vst [vmem:[%s194 + $0x1b10] sm:$0xff] %v2456
        %3737 = vst [vmem:[%s194 + $0x1b18] sm:$0xff] %v2457
        %3738 = vst [vmem:[%s194 + $0x1b20] sm:$0xff] %v2458
        %3739 = vst [vmem:[%s194 + $0x1b28] sm:$0xff] %v2459
        %3740 = vst [vmem:[%s194 + $0x1b30] sm:$0xff] %v2460
        %3741 = vst [vmem:[%s194 + $0x1b38] sm:$0xff] %v2461
        %3742 = vst [vmem:[%s194 + $0x1b40] sm:$0xff] %v2462
        %3743 = vst [vmem:[%s194 + $0x1b48] sm:$0xff] %v2463
        %3744 = vst [vmem:[%s194 + $0x1b50] sm:$0xff] %v2464
        %3745 = vst [vmem:[%s194 + $0x1b58] sm:$0xff] %v2465
        %3746 = vst [vmem:[%s194 + $0x1b60] sm:$0xff] %v2466
        %3747 = vst [vmem:[%s194 + $0x1b68] sm:$0xff] %v2467
        %3748 = vst [vmem:[%s194 + $0x1b70] sm:$0xff] %v2468
        %3749 = vst [vmem:[%s194 + $0x1b78] sm:$0xff] %v2469
        %3750 = vst [vmem:[%s194 + $0x1b80] sm:$0xff] %v2470
        %3751 = vst [vmem:[%s194 + $0x1b88] sm:$0xff] %v2471
        %3752 = vst [vmem:[%s194 + $0x1b90] sm:$0xff] %v2472
        %3753 = vst [vmem:[%s194 + $0x1b98] sm:$0xff] %v2473
        %3754 = vst [vmem:[%s194 + $0x1ba0] sm:$0xff] %v2474
        %3755 = vst [vmem:[%s194 + $0x1ba8] sm:$0xff] %v2475
        %3756 = vst [vmem:[%s194 + $0x1bb0] sm:$0xff] %v2476
        %3757 = vst [vmem:[%s194 + $0x1bb8] sm:$0xff] %v2477
        %3758 = vst [vmem:[%s194 + $0x1bc0] sm:$0xff] %v2478
        %3759 = vst [vmem:[%s194 + $0x1bc8] sm:$0xff] %v2479
        %3760 = vst [vmem:[%s194 + $0x1bd0] sm:$0xff] %v2480
        %3761 = vst [vmem:[%s194 + $0x1bd8] sm:$0xff] %v2481
        %3762 = vst [vmem:[%s194 + $0x1be0] sm:$0xff] %v2482
        %3763 = vst [vmem:[%s194 + $0x1be8] sm:$0xff] %v2483
        %3764 = vst [vmem:[%s194 + $0x1bf0] sm:$0xff] %v2484
        %3765 = vst [vmem:[%s194 + $0x1bf8] sm:$0xff] %v2485
        %3766 = vst [vmem:[%s194 + $0x1c00] sm:$0xff] %v2486
        %3767 = vst [vmem:[%s194 + $0x1c08] sm:$0xff] %v2487
        %3768 = vst [vmem:[%s194 + $0x1c10] sm:$0xff] %v2488
        %3769 = vst [vmem:[%s194 + $0x1c18] sm:$0xff] %v2489
        %3770 = vst [vmem:[%s194 + $0x1c20] sm:$0xff] %v2490
        %3771 = vst [vmem:[%s194 + $0x1c28] sm:$0xff] %v2491
        %3772 = vst [vmem:[%s194 + $0x1c30] sm:$0xff] %v2492
        %3773 = vst [vmem:[%s194 + $0x1c38] sm:$0xff] %v2493
        %3774 = vst [vmem:[%s194 + $0x1c40] sm:$0xff] %v2494
        %3775 = vst [vmem:[%s194 + $0x1c48] sm:$0xff] %v2495
        %3776 = vst [vmem:[%s194 + $0x1c50] sm:$0xff] %v2496
        %3777 = vst [vmem:[%s194 + $0x1c58] sm:$0xff] %v2497
        %3778 = vst [vmem:[%s194 + $0x1c60] sm:$0xff] %v2498
        %3779 = vst [vmem:[%s194 + $0x1c68] sm:$0xff] %v2499
        %3780 = vst [vmem:[%s194 + $0x1c70] sm:$0xff] %v2500
        %3781 = vst [vmem:[%s194 + $0x1c78] sm:$0xff] %v2501
        %3782 = vst [vmem:[%s194 + $0x1c80] sm:$0xff] %v2502
        %3783 = vst [vmem:[%s194 + $0x1c88] sm:$0xff] %v2503
        %3784 = vst [vmem:[%s194 + $0x1c90] sm:$0xff] %v2504
        %3785 = vst [vmem:[%s194 + $0x1c98] sm:$0xff] %v2505
        %3786 = vst [vmem:[%s194 + $0x1ca0] sm:$0xff] %v2506
        %3787 = vst [vmem:[%s194 + $0x1ca8] sm:$0xff] %v2507
        %3788 = vst [vmem:[%s194 + $0x1cb0] sm:$0xff] %v2508
        %3789 = vst [vmem:[%s194 + $0x1cb8] sm:$0xff] %v2509
        %3790 = vst [vmem:[%s194 + $0x1cc0] sm:$0xff] %v2510
        %3791 = vst [vmem:[%s194 + $0x1cc8] sm:$0xff] %v2511
        %3792 = vst [vmem:[%s194 + $0x1cd0] sm:$0xff] %v2512
        %3793 = vst [vmem:[%s194 + $0x1cd8] sm:$0xff] %v2513
        %3794 = vst [vmem:[%s194 + $0x1ce0] sm:$0xff] %v2514
        %3795 = vst [vmem:[%s194 + $0x1ce8] sm:$0xff] %v2515
        %3796 = vst [vmem:[%s194 + $0x1cf0] sm:$0xff] %v2516
        %3797 = vst [vmem:[%s194 + $0x1cf8] sm:$0xff] %v2517
        %3798 = vst [vmem:[%s194 + $0x1d00] sm:$0xff] %v2518
        %3799 = vst [vmem:[%s194 + $0x1d08] sm:$0xff] %v2519
        %3800 = vst [vmem:[%s194 + $0x1d10] sm:$0xff] %v2520
        %3801 = vst [vmem:[%s194 + $0x1d18] sm:$0xff] %v2521
        %3802 = vst [vmem:[%s194 + $0x1d20] sm:$0xff] %v2522
        %3803 = vst [vmem:[%s194 + $0x1d28] sm:$0xff] %v2523
        %3804 = vst [vmem:[%s194 + $0x1d30] sm:$0xff] %v2524
        %3805 = vst [vmem:[%s194 + $0x1d38] sm:$0xff] %v2525
        %3806 = vst [vmem:[%s194 + $0x1d40] sm:$0xff] %v2526
        %3807 = vst [vmem:[%s194 + $0x1d48] sm:$0xff] %v2527
        %3808 = vst [vmem:[%s194 + $0x1d50] sm:$0xff] %v2528
        %3809 = vst [vmem:[%s194 + $0x1d58] sm:$0xff] %v2529
        %3810 = vst [vmem:[%s194 + $0x1d60] sm:$0xff] %v2530
        %3811 = vst [vmem:[%s194 + $0x1d68] sm:$0xff] %v2531
        %3812 = vst [vmem:[%s194 + $0x1d70] sm:$0xff] %v2532
        %3813 = vst [vmem:[%s194 + $0x1d78] sm:$0xff] %v2533
        %3814 = vst [vmem:[%s194 + $0x1d80] sm:$0xff] %v2534
        %3815 = vst [vmem:[%s194 + $0x1d88] sm:$0xff] %v2535
        %3816 = vst [vmem:[%s194 + $0x1d90] sm:$0xff] %v2536
        %3817 = vst [vmem:[%s194 + $0x1d98] sm:$0xff] %v2537
        %3818 = vst [vmem:[%s194 + $0x1da0] sm:$0xff] %v2538
        %3819 = vst [vmem:[%s194 + $0x1da8] sm:$0xff] %v2539
        %3820 = vst [vmem:[%s194 + $0x1db0] sm:$0xff] %v2540
        %3821 = vst [vmem:[%s194 + $0x1db8] sm:$0xff] %v2541
        %3822 = vst [vmem:[%s194 + $0x1dc0] sm:$0xff] %v2542
        %3823 = vst [vmem:[%s194 + $0x1dc8] sm:$0xff] %v2543
        %3824 = vst [vmem:[%s194 + $0x1dd0] sm:$0xff] %v2544
        %3825 = vst [vmem:[%s194 + $0x1dd8] sm:$0xff] %v2545
        %3826 = vst [vmem:[%s194 + $0x1de0] sm:$0xff] %v2546
        %3827 = vst [vmem:[%s194 + $0x1de8] sm:$0xff] %v2547
        %3828 = vst [vmem:[%s194 + $0x1df0] sm:$0xff] %v2548
        %3829 = vst [vmem:[%s194 + $0x1df8] sm:$0xff] %v2549
        %3830 = vst [vmem:[%s194 + $0x1e00] sm:$0xff] %v2550
        %3831 = vst [vmem:[%s194 + $0x1e08] sm:$0xff] %v2551
        %3832 = vst [vmem:[%s194 + $0x1e10] sm:$0xff] %v2552
        %3833 = vst [vmem:[%s194 + $0x1e18] sm:$0xff] %v2553
        %3834 = vst [vmem:[%s194 + $0x1e20] sm:$0xff] %v2554
        %3835 = vst [vmem:[%s194 + $0x1e28] sm:$0xff] %v2555
        %3836 = vst [vmem:[%s194 + $0x1e30] sm:$0xff] %v2556
        %3837 = vst [vmem:[%s194 + $0x1e38] sm:$0xff] %v2557
        %3838 = vst [vmem:[%s194 + $0x1e40] sm:$0xff] %v2558
        %3839 = vst [vmem:[%s194 + $0x1e48] sm:$0xff] %v2559
        %3840 = vst [vmem:[%s194 + $0x1e50] sm:$0xff] %v2560
        %3841 = vst [vmem:[%s194 + $0x1e58] sm:$0xff] %v2561
        %3842 = vst [vmem:[%s194 + $0x1e60] sm:$0xff] %v2562
        %3843 = vst [vmem:[%s194 + $0x1e68] sm:$0xff] %v2563
        %3844 = vst [vmem:[%s194 + $0x1e70] sm:$0xff] %v2564
        %3845 = vst [vmem:[%s194 + $0x1e78] sm:$0xff] %v2565
        %3846 = vst [vmem:[%s194 + $0x1e80] sm:$0xff] %v2566
        %3847 = vst [vmem:[%s194 + $0x1e88] sm:$0xff] %v2567
        %3848 = vst [vmem:[%s194 + $0x1e90] sm:$0xff] %v2568
        %3849 = vst [vmem:[%s194 + $0x1e98] sm:$0xff] %v2569
        %3850 = vst [vmem:[%s194 + $0x1ea0] sm:$0xff] %v2570
        %3851 = vst [vmem:[%s194 + $0x1ea8] sm:$0xff] %v2571
        %3852 = vst [vmem:[%s194 + $0x1eb0] sm:$0xff] %v2572
        %3853 = vst [vmem:[%s194 + $0x1eb8] sm:$0xff] %v2573
        %3854 = vst [vmem:[%s194 + $0x1ec0] sm:$0xff] %v2574
        %3855 = vst [vmem:[%s194 + $0x1ec8] sm:$0xff] %v2575
        %3856 = vst [vmem:[%s194 + $0x1ed0] sm:$0xff] %v2576
        %3857 = vst [vmem:[%s194 + $0x1ed8] sm:$0xff] %v2577
        %3858 = vst [vmem:[%s194 + $0x1ee0] sm:$0xff] %v2578
        %3859 = vst [vmem:[%s194 + $0x1ee8] sm:$0xff] %v2579
        %3860 = vst [vmem:[%s194 + $0x1ef0] sm:$0xff] %v2580
        %3861 = vst [vmem:[%s194 + $0x1ef8] sm:$0xff] %v2581
        %3862 = vst [vmem:[%s194 + $0x1f00] sm:$0xff] %v2582
        %3863 = vst [vmem:[%s194 + $0x1f08] sm:$0xff] %v2583
        %3864 = vst [vmem:[%s194 + $0x1f10] sm:$0xff] %v2584
        %3865 = vst [vmem:[%s194 + $0x1f18] sm:$0xff] %v2585
        %3866 = vst [vmem:[%s194 + $0x1f20] sm:$0xff] %v2586
        %3867 = vst [vmem:[%s194 + $0x1f28] sm:$0xff] %v2587
        %3868 = vst [vmem:[%s194 + $0x1f30] sm:$0xff] %v2588
        %3869 = vst [vmem:[%s194 + $0x1f38] sm:$0xff] %v2589
        %3870 = vst [vmem:[%s194 + $0x1f40] sm:$0xff] %v2590
        %3871 = vst [vmem:[%s194 + $0x1f48] sm:$0xff] %v2591
        %3872 = vst [vmem:[%s194 + $0x1f50] sm:$0xff] %v2592
        %3873 = vst [vmem:[%s194 + $0x1f58] sm:$0xff] %v2593
        %3874 = vst [vmem:[%s194 + $0x1f60] sm:$0xff] %v2594
        %3875 = vst [vmem:[%s194 + $0x1f68] sm:$0xff] %v2595
        %3876 = vst [vmem:[%s194 + $0x1f70] sm:$0xff] %v2596
        %3877 = vst [vmem:[%s194 + $0x1f78] sm:$0xff] %v2597
        %3878 = vst [vmem:[%s194 + $0x1f80] sm:$0xff] %v2598
        %3879 = vst [vmem:[%s194 + $0x1f88] sm:$0xff] %v2599
        %3880 = vst [vmem:[%s194 + $0x1f90] sm:$0xff] %v2600
        %3881 = vst [vmem:[%s194 + $0x1f98] sm:$0xff] %v2601
        %3882 = vst [vmem:[%s194 + $0x1fa0] sm:$0xff] %v2602
        %3883 = vst [vmem:[%s194 + $0x1fa8] sm:$0xff] %v2603
        %3884 = vst [vmem:[%s194 + $0x1fb0] sm:$0xff] %v2604
        %3885 = vst [vmem:[%s194 + $0x1fb8] sm:$0xff] %v2605
        %3886 = vst [vmem:[%s194 + $0x1fc0] sm:$0xff] %v2606
        %3887 = vst [vmem:[%s194 + $0x1fc8] sm:$0xff] %v2607
        %3888 = vst [vmem:[%s194 + $0x1fd0] sm:$0xff] %v2608
        %3889 = vst [vmem:[%s194 + $0x1fd8] sm:$0xff] %v2609
        %3890 = vst [vmem:[%s194 + $0x1fe0] sm:$0xff] %v2610
        %3891 = vst [vmem:[%s194 + $0x1fe8] sm:$0xff] %v2611
        %3892 = vst [vmem:[%s194 + $0x1ff0] sm:$0xff] %v2612
        %3893 = vst [vmem:[%s194 + $0x1ff8] sm:$0xff] %v2613
        %3894 = vst [vmem:[%s194 + $0x2000] sm:$0xff] %v2614
        %3895 = vst [vmem:[%s194 + $0x2008] sm:$0xff] %v2615
        %3896 = vst [vmem:[%s194 + $0x2010] sm:$0xff] %v2616
        %3897 = vst [vmem:[%s194 + $0x2018] sm:$0xff] %v2617
        %3898 = vst [vmem:[%s194 + $0x2020] sm:$0xff] %v2618
        %3899 = vst [vmem:[%s194 + $0x2028] sm:$0xff] %v2619
        %3900 = vst [vmem:[%s194 + $0x2030] sm:$0xff] %v2620
        %3901 = vst [vmem:[%s194 + $0x2038] sm:$0xff] %v2621
        %3902 = vst [vmem:[%s194 + $0x2040] sm:$0xff] %v2622
        %3903 = vst [vmem:[%s194 + $0x2048] sm:$0xff] %v2623
        %3904 = vst [vmem:[%s194 + $0x2050] sm:$0xff] %v2624
        %3905 = vst [vmem:[%s194 + $0x2058] sm:$0xff] %v2625
        %3906 = vst [vmem:[%s194 + $0x2060] sm:$0xff] %v2626
        %3907 = vst [vmem:[%s194 + $0x2068] sm:$0xff] %v2627
        %3908 = vst [vmem:[%s194 + $0x2070] sm:$0xff] %v2628
        %3909 = vst [vmem:[%s194 + $0x2078] sm:$0xff] %v2629
        %3910 = vst [vmem:[%s194 + $0x2080] sm:$0xff] %v2630
        %3911 = vst [vmem:[%s194 + $0x2088] sm:$0xff] %v2631
        %3912 = vst [vmem:[%s194 + $0x2090] sm:$0xff] %v2632
        %3913 = vst [vmem:[%s194 + $0x2098] sm:$0xff] %v2633
        %3914 = vst [vmem:[%s194 + $0x20a0] sm:$0xff] %v2634
        %3915 = vst [vmem:[%s194 + $0x20a8] sm:$0xff] %v2635
        %3916 = vst [vmem:[%s194 + $0x20b0] sm:$0xff] %v2636
        %3917 = vst [vmem:[%s194 + $0x20b8] sm:$0xff] %v2637
        %3918 = vst [vmem:[%s194 + $0x20c0] sm:$0xff] %v2638
        %3919 = vst [vmem:[%s194 + $0x20c8] sm:$0xff] %v2639
        %3920 = vst [vmem:[%s194 + $0x20d0] sm:$0xff] %v2640
        %3921 = vst [vmem:[%s194 + $0x20d8] sm:$0xff] %v2641
        %3922 = vst [vmem:[%s194 + $0x20e0] sm:$0xff] %v2642
        %3923 = vst [vmem:[%s194 + $0x20e8] sm:$0xff] %v2643
        %3924 = vst [vmem:[%s194 + $0x20f0] sm:$0xff] %v2644
        %3925 = vst [vmem:[%s194 + $0x20f8] sm:$0xff] %v2645
        %3926 = vst [vmem:[%s194 + $0x2100] sm:$0xff] %v2646
        %3927 = vst [vmem:[%s194 + $0x2108] sm:$0xff] %v2647
        %3928 = vst [vmem:[%s194 + $0x2110] sm:$0xff] %v2648
        %3929 = vst [vmem:[%s194 + $0x2118] sm:$0xff] %v2649
        %3930 = vst [vmem:[%s194 + $0x2120] sm:$0xff] %v2650
        %3931 = vst [vmem:[%s194 + $0x2128] sm:$0xff] %v2651
        %3932 = vst [vmem:[%s194 + $0x2130] sm:$0xff] %v2652
        %3933 = vst [vmem:[%s194 + $0x2138] sm:$0xff] %v2653
        %3934 = vst [vmem:[%s194 + $0x2140] sm:$0xff] %v2654
        %3935 = vst [vmem:[%s194 + $0x2148] sm:$0xff] %v2655
        %3936 = vst [vmem:[%s194 + $0x2150] sm:$0xff] %v2656
        %3937 = vst [vmem:[%s194 + $0x2158] sm:$0xff] %v2657
        %3938 = vst [vmem:[%s194 + $0x2160] sm:$0xff] %v2658
        %3939 = vst [vmem:[%s194 + $0x2168] sm:$0xff] %v2659
        %3940 = vst [vmem:[%s194 + $0x2170] sm:$0xff] %v2660
        %3941 = vst [vmem:[%s194 + $0x2178] sm:$0xff] %v2661
        %3942 = vst [vmem:[%s194 + $0x2180] sm:$0xff] %v2662
        %3943 = vst [vmem:[%s194 + $0x2188] sm:$0xff] %v2663
        %3944 = vst [vmem:[%s194 + $0x2190] sm:$0xff] %v2664
        %3945 = vst [vmem:[%s194 + $0x2198] sm:$0xff] %v2665
        %3946 = vst [vmem:[%s194 + $0x21a0] sm:$0xff] %v2666
        %3947 = vst [vmem:[%s194 + $0x21a8] sm:$0xff] %v2667
        %3948 = vst [vmem:[%s194 + $0x21b0] sm:$0xff] %v2668
        %3949 = vst [vmem:[%s194 + $0x21b8] sm:$0xff] %v2669
        %3950 = vst [vmem:[%s194 + $0x21c0] sm:$0xff] %v2670
        %3951 = vst [vmem:[%s194 + $0x21c8] sm:$0xff] %v2671
        %3952 = vst [vmem:[%s194 + $0x21d0] sm:$0xff] %v2672
        %3953 = vst [vmem:[%s194 + $0x21d8] sm:$0xff] %v2673
        %3954 = vst [vmem:[%s194 + $0x21e0] sm:$0xff] %v2674
        %3955 = vst [vmem:[%s194 + $0x21e8] sm:$0xff] %v2675
        %3956 = vst [vmem:[%s194 + $0x21f0] sm:$0xff] %v2676
        %3957 = vst [vmem:[%s194 + $0x21f8] sm:$0xff] %v2677
        %3958 = vst [vmem:[%s194 + $0x2200] sm:$0xff] %v2678
        %3959 = vst [vmem:[%s194 + $0x2208] sm:$0xff] %v2679
        %3960 = vst [vmem:[%s194 + $0x2210] sm:$0xff] %v2680
        %3961 = vst [vmem:[%s194 + $0x2218] sm:$0xff] %v2681
        %3962 = vst [vmem:[%s194 + $0x2220] sm:$0xff] %v2682
        %3963 = vst [vmem:[%s194 + $0x2228] sm:$0xff] %v2683
        %3964 = vst [vmem:[%s194 + $0x2230] sm:$0xff] %v2684
        %3965 = vst [vmem:[%s194 + $0x2238] sm:$0xff] %v2685
        %3966 = vst [vmem:[%s194 + $0x2240] sm:$0xff] %v2686
        %3967 = vst [vmem:[%s194 + $0x2248] sm:$0xff] %v2687
        %3968 = vst [vmem:[%s194 + $0x2250] sm:$0xff] %v2688
        %3969 = vst [vmem:[%s194 + $0x2258] sm:$0xff] %v2689
        %3970 = vst [vmem:[%s194 + $0x2260] sm:$0xff] %v2690
        %3971 = vst [vmem:[%s194 + $0x2268] sm:$0xff] %v2691
        %3972 = vst [vmem:[%s194 + $0x2270] sm:$0xff] %v2692
        %3973 = vst [vmem:[%s194 + $0x2278] sm:$0xff] %v2693
        %3974 = vst [vmem:[%s194 + $0x2280] sm:$0xff] %v2694
        %3975 = vst [vmem:[%s194 + $0x2288] sm:$0xff] %v2695
        %3976 = vst [vmem:[%s194 + $0x2290] sm:$0xff] %v2696
        %3977 = vst [vmem:[%s194 + $0x2298] sm:$0xff] %v2697
        %3978 = vst [vmem:[%s194 + $0x22a0] sm:$0xff] %v2698
        %3979 = vst [vmem:[%s194 + $0x22a8] sm:$0xff] %v2699
        %3980 = vst [vmem:[%s194 + $0x22b0] sm:$0xff] %v2700
        %3981 = vst [vmem:[%s194 + $0x22b8] sm:$0xff] %v2701
        %3982 = vst [vmem:[%s194 + $0x22c0] sm:$0xff] %v2702
        %3983 = vst [vmem:[%s194 + $0x22c8] sm:$0xff] %v2703
        %3984 = vst [vmem:[%s194 + $0x22d0] sm:$0xff] %v2704
        %3985 = vst [vmem:[%s194 + $0x22d8] sm:$0xff] %v2705
        %3986 = vst [vmem:[%s194 + $0x22e0] sm:$0xff] %v2706
        %3987 = vst [vmem:[%s194 + $0x22e8] sm:$0xff] %v2707
        %3988 = vst [vmem:[%s194 + $0x22f0] sm:$0xff] %v2708
        %3989 = vst [vmem:[%s194 + $0x22f8] sm:$0xff] %v2709
        %3990 = vst [vmem:[%s194 + $0x2300] sm:$0xff] %v2710
        %3991 = vst [vmem:[%s194 + $0x2308] sm:$0xff] %v2711
        %3992 = vst [vmem:[%s194 + $0x2310] sm:$0xff] %v2712
        %3993 = vst [vmem:[%s194 + $0x2318] sm:$0xff] %v2713
        %3994 = vst [vmem:[%s194 + $0x2320] sm:$0xff] %v2714
        %3995 = vst [vmem:[%s194 + $0x2328] sm:$0xff] %v2715
        %3996 = vst [vmem:[%s194 + $0x2330] sm:$0xff] %v2716
        %3997 = vst [vmem:[%s194 + $0x2338] sm:$0xff] %v2717
        %3998 = vst [vmem:[%s194 + $0x2340] sm:$0xff] %v2718
        %3999 = vst [vmem:[%s194 + $0x2348] sm:$0xff] %v2719
        %4000 = vst [vmem:[%s194 + $0x2350] sm:$0xff] %v2720
        %4001 = vst [vmem:[%s194 + $0x2358] sm:$0xff] %v2721
        %4002 = vst [vmem:[%s194 + $0x2360] sm:$0xff] %v2722
        %4003 = vst [vmem:[%s194 + $0x2368] sm:$0xff] %v2723
        %4004 = vst [vmem:[%s194 + $0x2370] sm:$0xff] %v2724
        %4005 = vst [vmem:[%s194 + $0x2378] sm:$0xff] %v2725
        %4006 = vst [vmem:[%s194 + $0x2380] sm:$0xff] %v2726
        %4007 = vst [vmem:[%s194 + $0x2388] sm:$0xff] %v2727
        %4008 = vst [vmem:[%s194 + $0x2390] sm:$0xff] %v2728
        %4009 = vst [vmem:[%s194 + $0x2398] sm:$0xff] %v2729
        %4010 = vst [vmem:[%s194 + $0x23a0] sm:$0xff] %v2730
        %4011 = vst [vmem:[%s194 + $0x23a8] sm:$0xff] %v2731
        %4012 = vst [vmem:[%s194 + $0x23b0] sm:$0xff] %v2732
        %4013 = vst [vmem:[%s194 + $0x23b8] sm:$0xff] %v2733
        %4014 = vst [vmem:[%s194 + $0x23c0] sm:$0xff] %v2734
        %4015 = vst [vmem:[%s194 + $0x23c8] sm:$0xff] %v2735
        %4016 = vst [vmem:[%s194 + $0x23d0] sm:$0xff] %v2736
        %4017 = vst [vmem:[%s194 + $0x23d8] sm:$0xff] %v2737
        %4018 = vst [vmem:[%s194 + $0x23e0] sm:$0xff] %v2738
        %4019 = vst [vmem:[%s194 + $0x23e8] sm:$0xff] %v2739
        %4020 = vst [vmem:[%s194 + $0x23f0] sm:$0xff] %v2740
        %4021 = vst [vmem:[%s194 + $0x23f8] sm:$0xff] %v2741
        %4022 = vst [vmem:[%s194 + $0x2400] sm:$0xff] %v2742
        %4023 = vst [vmem:[%s194 + $0x2408] sm:$0xff] %v2743
        %4024 = vst [vmem:[%s194 + $0x2410] sm:$0xff] %v2744
        %4025 = vst [vmem:[%s194 + $0x2418] sm:$0xff] %v2745
        %4026 = vst [vmem:[%s194 + $0x2420] sm:$0xff] %v2746
        %4027 = vst [vmem:[%s194 + $0x2428] sm:$0xff] %v2747
        %4028 = vst [vmem:[%s194 + $0x2430] sm:$0xff] %v2748
        %4029 = vst [vmem:[%s194 + $0x2438] sm:$0xff] %v2749
        %4030 = vst [vmem:[%s194 + $0x2440] sm:$0xff] %v2750
        %4031 = vst [vmem:[%s194 + $0x2448] sm:$0xff] %v2751
        %4032 = vst [vmem:[%s194 + $0x2450] sm:$0xff] %v2752
        %4033 = vst [vmem:[%s194 + $0x2458] sm:$0xff] %v2753
        %4034 = vst [vmem:[%s194 + $0x2460] sm:$0xff] %v2754
        %4035 = vst [vmem:[%s194 + $0x2468] sm:$0xff] %v2755
        %4036 = vst [vmem:[%s194 + $0x2470] sm:$0xff] %v2756
        %4037 = vst [vmem:[%s194 + $0x2478] sm:$0xff] %v2757
        %4038 = vst [vmem:[%s194 + $0x2480] sm:$0xff] %v2758
        %4039 = vst [vmem:[%s194 + $0x2488] sm:$0xff] %v2759
        %4040 = vst [vmem:[%s194 + $0x2490] sm:$0xff] %v2760
        %4041 = vst [vmem:[%s194 + $0x2498] sm:$0xff] %v2761
        %4042 = vst [vmem:[%s194 + $0x24a0] sm:$0xff] %v2762
        %4043 = vst [vmem:[%s194 + $0x24a8] sm:$0xff] %v2763
        %4044 = vst [vmem:[%s194 + $0x24b0] sm:$0xff] %v2764
        %4045 = vst [vmem:[%s194 + $0x24b8] sm:$0xff] %v2765
        %4046 = vst [vmem:[%s194 + $0x24c0] sm:$0xff] %v2766
        %4047 = vst [vmem:[%s194 + $0x24c8] sm:$0xff] %v2767
        %4048 = vst [vmem:[%s194 + $0x24d0] sm:$0xff] %v2768
        %4049 = vst [vmem:[%s194 + $0x24d8] sm:$0xff] %v2769
        %4050 = vst [vmem:[%s194 + $0x24e0] sm:$0xff] %v2770
        %4051 = vst [vmem:[%s194 + $0x24e8] sm:$0xff] %v2771
        %4052 = vst [vmem:[%s194 + $0x24f0] sm:$0xff] %v2772
        %4053 = vst [vmem:[%s194 + $0x24f8] sm:$0xff] %v2773
        %4054 = vst [vmem:[%s194 + $0x2500] sm:$0xff] %v2774
        %4055 = vst [vmem:[%s194 + $0x2508] sm:$0xff] %v2775
        %4056 = vst [vmem:[%s194 + $0x2510] sm:$0xff] %v2776
        %4057 = vst [vmem:[%s194 + $0x2518] sm:$0xff] %v2777
        %4058 = vst [vmem:[%s194 + $0x2520] sm:$0xff] %v2778
        %4059 = vst [vmem:[%s194 + $0x2528] sm:$0xff] %v2779
        %4060 = vst [vmem:[%s194 + $0x2530] sm:$0xff] %v2780
        %4061 = vst [vmem:[%s194 + $0x2538] sm:$0xff] %v2781
        %4062 = vst [vmem:[%s194 + $0x2540] sm:$0xff] %v2782
        %4063 = vst [vmem:[%s194 + $0x2548] sm:$0xff] %v2783
        %4064 = vst [vmem:[%s194 + $0x2550] sm:$0xff] %v2784
        %4065 = vst [vmem:[%s194 + $0x2558] sm:$0xff] %v2785
        %4066 = vst [vmem:[%s194 + $0x2560] sm:$0xff] %v2786
        %4067 = vst [vmem:[%s194 + $0x2568] sm:$0xff] %v2787
        %4068 = vst [vmem:[%s194 + $0x2570] sm:$0xff] %v2788
        %4069 = vst [vmem:[%s194 + $0x2578] sm:$0xff] %v2789
        %4070 = vst [vmem:[%s194 + $0x2580] sm:$0xff] %v2790
        %4071 = vst [vmem:[%s194 + $0x2588] sm:$0xff] %v2791
        %4072 = vst [vmem:[%s194 + $0x2590] sm:$0xff] %v2792
        %4073 = vst [vmem:[%s194 + $0x2598] sm:$0xff] %v2793
        %4074 = vst [vmem:[%s194 + $0x25a0] sm:$0xff] %v2794
        %4075 = vst [vmem:[%s194 + $0x25a8] sm:$0xff] %v2795
        %4076 = vst [vmem:[%s194 + $0x25b0] sm:$0xff] %v2796
        %4077 = vst [vmem:[%s194 + $0x25b8] sm:$0xff] %v2797
        %4078 = vst [vmem:[%s194 + $0x25c0] sm:$0xff] %v2798
        %4079 = vst [vmem:[%s194 + $0x25c8] sm:$0xff] %v2799
        %4080 = vst [vmem:[%s194 + $0x25d0] sm:$0xff] %v2800
        %4081 = vst [vmem:[%s194 + $0x25d8] sm:$0xff] %v2801
        %4082 = vst [vmem:[%s194 + $0x25e0] sm:$0xff] %v2802
        %4083 = vst [vmem:[%s194 + $0x25e8] sm:$0xff] %v2803
        %4084 = vst [vmem:[%s194 + $0x25f0] sm:$0xff] %v2804
        %4085 = vst [vmem:[%s194 + $0x25f8] sm:$0xff] %v2805
        %4086 = vst [vmem:[%s194 + $0x2600] sm:$0xff] %v2806
        %4087 = vst [vmem:[%s194 + $0x2608] sm:$0xff] %v2807
        %4088 = vst [vmem:[%s194 + $0x2610] sm:$0xff] %v2808
        %4089 = vst [vmem:[%s194 + $0x2618] sm:$0xff] %v2809
        %4090 = vst [vmem:[%s194 + $0x2620] sm:$0xff] %v2810
        %4091 = vst [vmem:[%s194 + $0x2628] sm:$0xff] %v2811
        %4092 = vst [vmem:[%s194 + $0x2630] sm:$0xff] %v2812
        %4093 = vst [vmem:[%s194 + $0x2638] sm:$0xff] %v2813
        %4094 = vst [vmem:[%s194 + $0x2640] sm:$0xff] %v2814
        %4095 = vst [vmem:[%s194 + $0x2648] sm:$0xff] %v2815
        %4096 = vst [vmem:[%s194 + $0x2650] sm:$0xff] %v2816
        %4097 = vst [vmem:[%s194 + $0x2658] sm:$0xff] %v2817
        %4098 = vst [vmem:[%s194 + $0x2660] sm:$0xff] %v2818
        %4099 = vst [vmem:[%s194 + $0x2668] sm:$0xff] %v2819
        %4100 = vst [vmem:[%s194 + $0x2670] sm:$0xff] %v2820
        %4101 = vst [vmem:[%s194 + $0x2678] sm:$0xff] %v2821
        %4102 = vst [vmem:[%s194 + $0x2680] sm:$0xff] %v2822
        %4103 = vst [vmem:[%s194 + $0x2688] sm:$0xff] %v2823
        %4104 = vst [vmem:[%s194 + $0x2690] sm:$0xff] %v2824
        %4105 = vst [vmem:[%s194 + $0x2698] sm:$0xff] %v2825
        %4106 = vst [vmem:[%s194 + $0x26a0] sm:$0xff] %v2826
        %4107 = vst [vmem:[%s194 + $0x26a8] sm:$0xff] %v2827
        %4108 = vst [vmem:[%s194 + $0x26b0] sm:$0xff] %v2828
        %4109 = vst [vmem:[%s194 + $0x26b8] sm:$0xff] %v2829
        %4110 = vst [vmem:[%s194 + $0x26c0] sm:$0xff] %v2830
        %4111 = vst [vmem:[%s194 + $0x26c8] sm:$0xff] %v2831
        %4112 = vst [vmem:[%s194 + $0x26d0] sm:$0xff] %v2832
        %4113 = vst [vmem:[%s194 + $0x26d8] sm:$0xff] %v2833
        %4114 = vst [vmem:[%s194 + $0x26e0] sm:$0xff] %v2834
        %4115 = vst [vmem:[%s194 + $0x26e8] sm:$0xff] %v2835
        %4116 = vst [vmem:[%s194 + $0x26f0] sm:$0xff] %v2836
        %4117 = vst [vmem:[%s194 + $0x26f8] sm:$0xff] %v2837
        %4118 = vst [vmem:[%s194 + $0x2700] sm:$0xff] %v2838
        %4119 = vst [vmem:[%s194 + $0x2708] sm:$0xff] %v2839
        %4120 = vst [vmem:[%s194 + $0x2710] sm:$0xff] %v2840
        %4121 = vst [vmem:[%s194 + $0x2718] sm:$0xff] %v2841
        %4122 = vst [vmem:[%s194 + $0x2720] sm:$0xff] %v2842
        %4123 = vst [vmem:[%s194 + $0x2728] sm:$0xff] %v2843
        %4124 = vst [vmem:[%s194 + $0x2730] sm:$0xff] %v2844
        %4125 = vst [vmem:[%s194 + $0x2738] sm:$0xff] %v2845
        %4126 = vst [vmem:[%s194 + $0x2740] sm:$0xff] %v2846
        %4127 = vst [vmem:[%s194 + $0x2748] sm:$0xff] %v2847
        %4128 = vst [vmem:[%s194 + $0x2750] sm:$0xff] %v2848
        %4129 = vst [vmem:[%s194 + $0x2758] sm:$0xff] %v2849
        %4130 = vst [vmem:[%s194 + $0x2760] sm:$0xff] %v2850
        %4131 = vst [vmem:[%s194 + $0x2768] sm:$0xff] %v2851
        %4132 = vst [vmem:[%s194 + $0x2770] sm:$0xff] %v2852
        %4133 = vst [vmem:[%s194 + $0x2778] sm:$0xff] %v2853
        %4134 = vst [vmem:[%s194 + $0x2780] sm:$0xff] %v2854
        %4135 = vst [vmem:[%s194 + $0x2788] sm:$0xff] %v2855
        %4136 = vst [vmem:[%s194 + $0x2790] sm:$0xff] %v2856
        %4137 = vst [vmem:[%s194 + $0x2798] sm:$0xff] %v2857
        %4138 = vst [vmem:[%s194 + $0x27a0] sm:$0xff] %v2858
        %4139 = vst [vmem:[%s194 + $0x27a8] sm:$0xff] %v2859
        %4140 = vst [vmem:[%s194 + $0x27b0] sm:$0xff] %v2860
        %4141 = vst [vmem:[%s194 + $0x27b8] sm:$0xff] %v2861
        %4142 = vst [vmem:[%s194 + $0x27c0] sm:$0xff] %v2862
        %4143 = vst [vmem:[%s194 + $0x27c8] sm:$0xff] %v2863
        %4144 = vst [vmem:[%s194 + $0x27d0] sm:$0xff] %v2864
        %4145 = vst [vmem:[%s194 + $0x27d8] sm:$0xff] %v2865
        %4146 = vst [vmem:[%s194 + $0x27e0] sm:$0xff] %v2866
        %4147 = vst [vmem:[%s194 + $0x27e8] sm:$0xff] %v2867
        %4148 = vst [vmem:[%s194 + $0x27f0] sm:$0xff] %v2868
        %4149 = vst [vmem:[%s194 + $0x27f8] sm:$0xff] %v2869
        %s4150 = sand.u32 %s95, 1
        %s4151 = scalar_lea.sflag [#allocation4], %s4150
        %s4152 = sand.u32 %s95, 1
        %s4153 = smul.addr %s4152, 10240
        %s4154 = scalar_lea.vmem [#allocation5], %s4153
        // Predicated region
        $region33: #{tpu_custom_call.1} parent=27 // pred_check
          %p4155 = pneg %p105
        $region34: #{tpu_custom_call.1} parent=27 // pred_check_branch
          %4157 = sbr.rel (%p4155) target = $region36
        $region35: #{tpu_custom_call.1} parent=27 // pred_region
          %s4158 = smul.u32 64, %s24
          %s4159 = smul.u32 20, %s23
          %s4161 = ssub.s32 163840, 163840
          %4162 = vsyncadd %s4151, %s4161
          %s4163 = smul.addr %s4158, 20
          %s4164 = sadd.s32 %s4159, %s4163
          %s4165 = smul.addr %s4164, 128
          %s4166 = scalar_lea.hbm %s2, %s4165
          %s4167 = sshll.u32 %s4154, 4
          %s4168 = int_to_ptr.vmem [resolvable:$true] %s4167
          %4173 = dma.vmem_to_hbm [thread:$0]  %s4168, 163840, %s4166, %s4151, 2560, 2560, 160
        $region36: #{tpu_custom_call.1} parent=27 // pred_fallthru
          _
      $region28: #{tpu_custom_call.1} parent=5 // pred_fallthru
        _
      %p4174 = scmp.le.s32.totalorder 2, %s14
      // Predicated region
      $region37: #{tpu_custom_call.1} parent=5 // pred_check
        %p4175 = pneg %p4174
      $region38: #{tpu_custom_call.1} parent=5 // pred_check_branch
        %4177 = sbr.rel (%p4175) target = $region40
      $region39: #{tpu_custom_call.1} parent=5 // pred_region
        %s4178 = ssub.s32 %s14, 2
        // Predicated region
        $region41: #{tpu_custom_call.1} parent=39 // pred_check
          %p4179 = pneg %p111
        $region42: #{tpu_custom_call.1} parent=39 // pred_check_branch
          %4181 = sbr.rel (%p4179) target = $region44
        $region43: #{tpu_custom_call.1} parent=39 // pred_region
          %s4182 = sand.u32 %s96, 1
          %s4183 = scalar_lea.sflag [#allocation4], %s4182
          %s4184 = sand.u32 %s96, 1
          %s4185 = smul.addr %s4184, 10240
          %s4186 = scalar_lea.vmem [#allocation5], %s4185
          %4187 = dma.done %s4183, 163840
        $region44: #{tpu_custom_call.1} parent=39 // pred_fallthru
          _
      $region40: #{tpu_custom_call.1} parent=5 // pred_fallthru
        _
    $region6: #{tpu_custom_call.1} parent=1 // loop_footer
      %s18 = sadd.s32 1, %s14
    $region7: #{tpu_custom_call.1} parent=1 // loop_footer_branch
      %13 = sbr.rel target = $region3
    $region8: #{tpu_custom_call.1} parent=1 // loop_exit
      _
    %4188 = vsyncpa [#allocation3], 1
    %s4189 = scalar_lea.sflag [#allocation3], 1
    %4190 = vsyncpa %s4189, 1
    %4191 = vsyncpa [#allocation4], 1
    %s4192 = scalar_lea.sflag [#allocation4], 1
    %4193 = vsyncpa %s4192, 1

</llo_original>
